<compile_context>
chip_gen: v7x
topology: tpu7x:2x2x1
jax: 0.10.0
libtpu: 0.0.40
codegen_flags: <defaults>
</compile_context>

<pallas_src>
import math
from functools import partial

import jax
import jax.numpy as jnp
from jax import lax
from jax.experimental import pallas as pl
from jax.experimental.pallas import tpu as pltpu

LN_EPS = 1e-5
NEG_INF = -1e9
_QKT = (((1,), (1,)), ((), ()))   # contract last dims of both operands: A @ B^T


# ----------------------------- kernel helpers -----------------------------

def _dot(a, b, cd, dims=None):
    """MXU matmul: operands cast to the compute dtype, f32 accumulation."""
    a = a.astype(cd)
    b = b.astype(cd)
    if dims is None:
        return jnp.dot(a, b, preferred_element_type=jnp.float32)
    return lax.dot_general(a, b, dims, preferred_element_type=jnp.float32)


def _add_layernorm(resid, y, gamma, beta, eps):
    """LayerNorm(resid + y) over the last axis (biased variance, f32 stats)."""
    z = resid + y
    mu = jnp.mean(z, axis=-1, keepdims=True)
    zc = z - mu
    var = jnp.mean(zc * zc, axis=-1, keepdims=True)
    return zc * lax.rsqrt(var + eps) * gamma + beta


def _mha_core(q, kv, mask_bias, wo, bo, *, cd, num_heads):
    """Multi-head attention + output projection for one batch element.

    q:  (Sq, D)  f32 queries; 1/sqrt(dk) already folded into Wq.
    kv: (Sk, 2D) f32; lanes [0, D) = K projection, lanes [D, 2D) = V.
    mask_bias: (Sq, Sk) f32 additive bias (0 visible, -1e9 masked) or None.
    Head outputs are lane-concatenated into a (Sq, D) buffer so W_o is one
    full-depth (K = D) MXU matmul instead of num_heads partial ones.
    """
    Sq, D = q.shape
    dk = D // num_heads
    heads = []
    for h in range(num_heads):                   # static unroll; heads on lanes
        lo = h * dk
        q_h = q[:, lo:lo + dk]
        k_h = kv[:, lo:lo + dk]
        v_h = kv[:, D + lo:D + lo + dk]
        s = _dot(q_h, k_h, cd, dims=_QKT)                          # (Sq, Sk) f32
        if mask_bias is not None:
            s = s + mask_bias
        m = jnp.max(s, axis=-1, keepdims=True)
        p = jnp.exp(s - m)                                          # f32 stats
        denom = jnp.sum(p, axis=-1, keepdims=True)
        inv = pl.reciprocal(jnp.maximum(denom, 1e-30), approx=True)  # EUP slot
        heads.append(_dot(p, v_h, cd) * inv)                        # (Sq, dk)
    o = jnp.concatenate(heads, axis=-1)                             # (Sq, D)
    return _dot(o, wo, cd) + bo


def _causal_bias(S):
    row = lax.broadcasted_iota(jnp.int32, (S, S), 0)
    col = lax.broadcasted_iota(jnp.int32, (S, S), 1)
    return jnp.where(col <= row, 0.0, NEG_INF).astype(jnp.float32)


# ----------------------------- Pallas kernels -----------------------------

def _self_attn_block_kernel(*refs, causal, num_heads, eps):
    # Fused self-attention block for one batch element:
    #   qkv = x @ Wqkv + b   (single fused projection; q pre-scaled in Wq)
    #   y   = combine_heads(MHA(q, k, v, mask)) @ Wo + bo
    #   out = LayerNorm(x + y)
    if causal:
        (x_ref, wqkv_ref, bqkv_ref, wo_ref, bo_ref, g_ref, beta_ref, o_ref) = refs
    else:
        (x_ref, mask_ref, wqkv_ref, bqkv_ref, wo_ref, bo_ref,
         g_ref, beta_ref, o_ref) = refs
    cd = wqkv_ref.dtype                              # compute (MXU input) dtype
    x = x_ref[0]                                     # (S, D) f32
    S, D = x.shape
    qkv = _dot(x, wqkv_ref[...], cd) + bqkv_ref[...]  # (S, 3D) f32
    mask_bias = _causal_bias(S) if causal else mask_ref[0]
    y = _mha_core(qkv[:, :D], qkv[:, D:], mask_bias, wo_ref[...], bo_ref[...],
                  cd=cd, num_heads=num_heads)
    o_ref[0] = _add_layernorm(x, y, g_ref[...], beta_ref[...], eps)


def _cross_attn_block_kernel(*refs, use_mask, num_heads, eps):
    # Fused cross-attention block: q from decoder stream, fused K/V from encoder.
    if use_mask:
        (xq_ref, xkv_ref, mask_ref, wq_ref, bq_ref, wkv_ref, bkv_ref,
         wo_ref, bo_ref, g_ref, beta_ref, o_ref) = refs
        mask_bias = mask_ref[0]
    else:
        (xq_ref, xkv_ref, wq_ref, bq_ref, wkv_ref, bkv_ref,
         wo_ref, bo_ref, g_ref, beta_ref, o_ref) = refs
        mask_bias = None
    cd = wq_ref.dtype
    xq = xq_ref[0]                                     # (Sq, D) f32
    xkv = xkv_ref[0]                                   # (Sk, D) f32
    q = _dot(xq, wq_ref[...], cd) + bq_ref[...]        # (Sq, D)
    kv = _dot(xkv, wkv_ref[...], cd) + bkv_ref[...]    # (Sk, 2D)
    y = _mha_core(q, kv, mask_bias, wo_ref[...], bo_ref[...],
                  cd=cd, num_heads=num_heads)
    o_ref[0] = _add_layernorm(xq, y, g_ref[...], beta_ref[...], eps)


def _ffn_ln_block_kernel(x_ref, w1_ref, b1_ref, w2_ref, b2_ref,
                         g_ref, beta_ref, o_ref, *, eps):
    # LayerNorm(x + fc2(relu(fc1(x)))) for one row tile.
    cd = w1_ref.dtype
    x = x_ref[...]
    h = jnp.maximum(_dot(x, w1_ref[...], cd) + b1_ref[...], 0.0)
    y = _dot(h, w2_ref[...], cd) + b2_ref[...]
    o_ref[...] = _add_layernorm(x, y, g_ref[...], beta_ref[...], eps)


# ----------------------------- wrappers -----------------------------

def _nbytes(a):
    return int(a.size) * int(a.dtype.itemsize)


def _vmem_limit(step_bytes):
    # double buffering + intermediate headroom, clamped to [32 MiB, 64 MiB]
    # (64 MiB = v7x physical VMEM; 32 MiB = default scoped limit on v6e/v7x).
    return int(min(max(3 * step_bytes + (8 << 20), 32 << 20), 64 << 20))


def self_attn_block(x, mask_bias, p, gamma, beta, *, num_heads, eps=LN_EPS):
    B, S, D = x.shape
    causal = mask_bias is None        # fast path: generate causal bias in-kernel
    in_specs = [pl.BlockSpec((1, S, D), lambda b: (b, 0, 0))]
    operands = [x]
    if not causal:
        in_specs.append(pl.BlockSpec((1, S, S), lambda b: (b, 0, 0)))
        operands.append(mask_bias)
    weights = [p["wqkv"], p["bqkv"], p["wo"], p["bo"], gamma, beta]
    in_specs += [
        pl.BlockSpec((D, 3 * D), lambda b: (0, 0)),    # Wqkv (q pre-scaled), bf16
        pl.BlockSpec((1, 3 * D), lambda b: (0, 0)),    # bqkv, lane-major f32
        pl.BlockSpec((D, D), lambda b: (0, 0)),        # Wo, bf16
        pl.BlockSpec((1, D), lambda b: (0, 0)),        # bo
        pl.BlockSpec((1, D), lambda b: (0, 0)),        # gamma
        pl.BlockSpec((1, D), lambda b: (0, 0)),        # beta
    ]
    operands += weights
    weight_bytes = sum(_nbytes(w) for w in weights)
    step_bytes = (2 * 4 * S * D + (0 if causal else 4 * S * S)
                  + weight_bytes + 4 * S * 3 * D)
    cost = pl.CostEstimate(
        flops=int(B * (8 * S * D * D + 4 * S * S * D)),
        transcendentals=int(B * num_heads * S * S),
        bytes_accessed=int(sum(_nbytes(a) for a in operands) + 4 * B * S * D))
    return pl.pallas_call(
        partial(_self_attn_block_kernel, causal=causal, num_heads=num_heads, eps=eps),
        out_shape=jax.ShapeDtypeStruct((B, S, D), jnp.float32),
        grid=(B,),
        in_specs=in_specs,
        out_specs=pl.BlockSpec((1, S, D), lambda b: (b, 0, 0)),
        compiler_params=pltpu.CompilerParams(
            dimension_semantics=("parallel",),
            vmem_limit_bytes=_vmem_limit(step_bytes)),
        cost_estimate=cost,
    )(*operands)


def cross_attn_block(xq, xkv, mask_bias, p, gamma, beta, *, num_heads, eps=LN_EPS):
    B, Sq, D = xq.shape
    Sk = xkv.shape[1]
    use_mask = mask_bias is not None
    in_specs = [pl.BlockSpec((1, Sq, D), lambda b: (b, 0, 0)),
                pl.BlockSpec((1, Sk, D), lambda b: (b, 0, 0))]
    operands = [xq, xkv]
    if use_mask:
        in_specs.append(pl.BlockSpec((1, Sq, Sk), lambda b: (b, 0, 0)))
        operands.append(mask_bias)
    weights = [p["wq"], p["bq"], p["wkv"], p["bkv"], p["wo"], p["bo"], gamma, beta]
    in_specs += [
        pl.BlockSpec((D, D), lambda b: (0, 0)),        # Wq (pre-scaled), bf16
        pl.BlockSpec((1, D), lambda b: (0, 0)),        # bq
        pl.BlockSpec((D, 2 * D), lambda b: (0, 0)),    # Wkv (fused), bf16
        pl.BlockSpec((1, 2 * D), lambda b: (0, 0)),    # bkv
        pl.BlockSpec((D, D), lambda b: (0, 0)),        # Wo, bf16
        pl.BlockSpec((1, D), lambda b: (0, 0)),        # bo
        pl.BlockSpec((1, D), lambda b: (0, 0)),        # gamma
        pl.BlockSpec((1, D), lambda b: (0, 0)),        # beta
    ]
    operands += weights
    weight_bytes = sum(_nbytes(w) for w in weights)
    step_bytes = (4 * (2 * Sq * D + Sk * D) + (4 * Sq * Sk if use_mask else 0)
                  + weight_bytes + 4 * Sk * 2 * D)
    cost = pl.CostEstimate(
        flops=int(B * (4 * Sq * D * D + 4 * Sk * D * D + 4 * Sq * Sk * D)),
        transcendentals=int(B * num_heads * Sq * Sk),
        bytes_accessed=int(sum(_nbytes(a) for a in operands) + 4 * B * Sq * D))
    return pl.pallas_call(
        partial(_cross_attn_block_kernel, use_mask=use_mask,
                num_heads=num_heads, eps=eps),
        out_shape=jax.ShapeDtypeStruct((B, Sq, D), jnp.float32),
        grid=(B,),
        in_specs=in_specs,
        out_specs=pl.BlockSpec((1, Sq, D), lambda b: (b, 0, 0)),
        compiler_params=pltpu.CompilerParams(
            dimension_semantics=("parallel",),
            vmem_limit_bytes=_vmem_limit(step_bytes)),
        cost_estimate=cost,
    )(*operands)


def ffn_ln_block(x, w1, b1, w2, b2, gamma, beta, *, eps=LN_EPS, block_m=512):
    B, S, D = x.shape
    Dff = w1.shape[1]
    M = B * S
    bm = M if M <= block_m else block_m       # row tile (multiple of 8 or full M)
    weights = [w1, b1, w2, b2, gamma, beta]
    weight_bytes = sum(_nbytes(w) for w in weights)
    step_bytes = 2 * 4 * bm * D + 4 * bm * Dff + weight_bytes
    cost = pl.CostEstimate(
        flops=int(4 * M * D * Dff),
        transcendentals=0,
        bytes_accessed=int(2 * 4 * M * D + weight_bytes))
    out = pl.pallas_call(
        partial(_ffn_ln_block_kernel, eps=eps),
        out_shape=jax.ShapeDtypeStruct((M, D), jnp.float32),
        grid=(pl.cdiv(M, bm),),
        in_specs=[
            pl.BlockSpec((bm, D), lambda i: (i, 0)),
            pl.BlockSpec((D, Dff), lambda i: (0, 0)),   # W1, bf16
            pl.BlockSpec((1, Dff), lambda i: (0, 0)),   # b1, f32
            pl.BlockSpec((Dff, D), lambda i: (0, 0)),   # W2, bf16
            pl.BlockSpec((1, D), lambda i: (0, 0)),     # b2
            pl.BlockSpec((1, D), lambda i: (0, 0)),     # gamma
            pl.BlockSpec((1, D), lambda i: (0, 0)),     # beta
        ],
        out_specs=pl.BlockSpec((bm, D), lambda i: (i, 0)),
        compiler_params=pltpu.CompilerParams(
            dimension_semantics=("parallel",),
            vmem_limit_bytes=_vmem_limit(step_bytes)),
        cost_estimate=cost,
    )(x.reshape(M, D), w1, b1, w2, b2, gamma, beta)
    return out.reshape(B, S, D)


def mask_to_bias(mask):
    # mask: (B, 1, Sq, Sk) int (0 = masked) -> additive f32 bias (B, Sq, Sk)
    m = mask.reshape(mask.shape[0], mask.shape[2], mask.shape[3])
    return jnp.where(m == 0, NEG_INF, 0.0).astype(jnp.float32)


def decoder_layer(x, enc_output, src_mask, tgt_mask, params, *, num_heads,
                  tgt_is_causal=False, src_mask_is_full=False):
    """DecoderLayer.forward.  Dropout is identity (eval mode).

    tgt_is_causal=True: skip the tgt_mask DMA and generate the standard causal
    bias in-kernel (identical semantics to a lower-triangular tgt_mask).
    src_mask_is_full=True: skip the src_mask entirely (all positions visible).
    With both False the original arbitrary-mask semantics are used.
    """
    # TODO(synk): train-mode dropout (PRNG masks) not implemented; eval only.
    tgt_bias = None if tgt_is_causal else mask_to_bias(tgt_mask)
    src_bias = None if src_mask_is_full else mask_to_bias(src_mask)
    x = self_attn_block(x, tgt_bias, params["self_attn"],
                        params["norm1_g"], params["norm1_b"], num_heads=num_heads)
    x = cross_attn_block(x, enc_output, src_bias, params["cross_attn"],
                         params["norm2_g"], params["norm2_b"], num_heads=num_heads)
    x = ffn_ln_block(x, params["ff_w1"], params["ff_b1"],
                     params["ff_w2"], params["ff_b2"],
                     params["norm3_g"], params["norm3_b"])
    return x


def prepare_params(params, *, num_heads, compute_dtype=jnp.bfloat16):
    """One-time weight prep: fuse QKV / KV, fold 1/sqrt(dk) into Wq/bq (in f32,
    before the cast), store weights in the MXU compute dtype, keep biases and
    LayerNorm parameters lane-major in f32."""
    D = params["self_attn"]["wq"].shape[0]
    scale = 1.0 / math.sqrt(D // num_heads)

    def fuse(p):
        wq = p["wq"] * scale
        bq = p["bq"] * scale
        return dict(
            wqkv=jnp.concatenate([wq, p["wk"], p["wv"]], axis=1).astype(compute_dtype),
            bqkv=jnp.concatenate([bq, p["bk"], p["bv"]])[None, :].astype(jnp.float32),
            wq=wq.astype(compute_dtype),
            bq=bq[None, :].astype(jnp.float32),
            wkv=jnp.concatenate([p["wk"], p["wv"]], axis=1).astype(compute_dtype),
            bkv=jnp.concatenate([p["bk"], p["bv"]])[None, :].astype(jnp.float32),
            wo=p["wo"].astype(compute_dtype),
            bo=p["bo"][None, :].astype(jnp.float32),
        )

    out = {
        "self_attn": fuse(params["self_attn"]),
        "cross_attn": fuse(params["cross_attn"]),
        "ff_w1": params["ff_w1"].astype(compute_dtype),
        "ff_b1": params["ff_b1"][None, :].astype(jnp.float32),
        "ff_w2": params["ff_w2"].astype(compute_dtype),
        "ff_b2": params["ff_b2"][None, :].astype(jnp.float32),
    }
    for k in ("norm1", "norm2", "norm3"):
        out[k + "_g"] = params[k + "_g"][None, :].astype(jnp.float32)
        out[k + "_b"] = params[k + "_b"][None, :].astype(jnp.float32)
    return out


# ----------------------------- pure-JAX reference -----------------------------

def _ref_mha(xq, xkv, mask, p, num_heads):
    B, Sq, D = xq.shape
    Sk = xkv.shape[1]
    dk = D // num_heads
    q = (xq @ p["wq"] + p["bq"]).reshape(B, Sq, num_heads, dk).transpose(0, 2, 1, 3)
    k = (xkv @ p["wk"] + p["bk"]).reshape(B, Sk, num_heads, dk).transpose(0, 2, 1, 3)
    v = (xkv @ p["wv"] + p["bv"]).reshape(B, Sk, num_heads, dk).transpose(0, 2, 1, 3)
    s = jnp.einsum("bhqd,bhkd->bhqk", q, k) / math.sqrt(dk)
    s = jnp.where(mask == 0, NEG_INF, s)
    a = jax.nn.softmax(s, axis=-1)
    o = jnp.einsum("bhqk,bhkd->bhqd", a, v).transpose(0, 2, 1, 3).reshape(B, Sq, D)
    return o @ p["wo"] + p["bo"]


def _ref_ln(z, g, b, eps=LN_EPS):
    mu = jnp.mean(z, axis=-1, keepdims=True)
    var = jnp.mean((z - mu) ** 2, axis=-1, keepdims=True)
    return (z - mu) / jnp.sqrt(var + eps) * g + b


def ref_decoder_layer(x, enc, src_mask, tgt_mask, params, num_heads):
    a = _ref_mha(x, x, tgt_mask, params["self_attn"], num_heads)
    x = _ref_ln(x + a, params["norm1_g"], params["norm1_b"])
    a = _ref_mha(x, enc, src_mask, params["cross_attn"], num_heads)
    x = _ref_ln(x + a, params["norm2_g"], params["norm2_b"])
    h = jnp.maximum(x @ params["ff_w1"] + params["ff_b1"], 0.0)
    f = h @ params["ff_w2"] + params["ff_b2"]
    x = _ref_ln(x + f, params["norm3_g"], params["norm3_b"])
    return x


# ----------------------------- init & main -----------------------------

def _init_linear(key, din, dout):
    k1, k2 = jax.random.split(key)
    bound = 1.0 / math.sqrt(din)
    w = jax.random.uniform(k1, (din, dout), jnp.float32, -bound, bound)
    b = jax.random.uniform(k2, (dout,), jnp.float32, -bound, bound)
    return w, b


def init_params(key, d_model, d_ff):
    keys = jax.random.split(key, 10)

    def attn_params(ks):
        wq, bq = _init_linear(ks[0], d_model, d_model)
        wk, bk = _init_linear(ks[1], d_model, d_model)
        wv, bv = _init_linear(ks[2], d_model, d_model)
        wo, bo = _init_linear(ks[3], d_model, d_model)
        return dict(wq=wq, bq=bq, wk=wk, bk=bk, wv=wv, bv=bv, wo=wo, bo=bo)

    ff_w1, ff_b1 = _init_linear(keys[8], d_model, d_ff)
    ff_w2, ff_b2 = _init_linear(keys[9], d_ff, d_model)
    return dict(
        self_attn=attn_params(jax.random.split(keys[0], 4)),
        cross_attn=attn_params(jax.random.split(keys[1], 4)),
        ff_w1=ff_w1, ff_b1=ff_b1, ff_w2=ff_w2, ff_b2=ff_b2,
        norm1_g=jnp.ones((d_model,), jnp.float32),
        norm1_b=jnp.zeros((d_model,), jnp.float32),
        norm2_g=jnp.ones((d_model,), jnp.float32),
        norm2_b=jnp.zeros((d_model,), jnp.float32),
        norm3_g=jnp.ones((d_model,), jnp.float32),
        norm3_b=jnp.zeros((d_model,), jnp.float32),
    )


if __name__ == "__main__":
    B, S_tgt, S_src = 2, 8, 8
    d_model, num_heads, d_ff = 32, 4, 64

    root = jax.random.PRNGKey(0)
    k_x, k_enc, k_p = jax.random.split(root, 3)

    x = jax.random.normal(k_x, (B, S_tgt, d_model), jnp.float32)
    enc_output = jax.random.normal(k_enc, (B, S_src, d_model), jnp.float32)
    params = init_params(k_p, d_model, d_ff)

    # causal mask for self-attention, all-ones mask for cross-attention
    tgt_mask = jnp.broadcast_to(
        jnp.tril(jnp.ones((S_tgt, S_tgt), jnp.int32))[None, None],
        (B, 1, S_tgt, S_tgt)).astype(jnp.int32)
    src_mask = jnp.ones((B, 1, S_tgt, S_src), jnp.int32)

    ref = ref_decoder_layer(x, enc_output, src_mask, tgt_mask, params, num_heads)

    # Fast / deployment path: bf16 MXU inputs, in-kernel causal bias, no
    # cross-attention mask DMA.  Checked against the f32 reference with a
    # tolerance appropriate for bf16 matmul inputs.
    p_bf16 = prepare_params(params, num_heads=num_heads, compute_dtype=jnp.bfloat16)
    fwd_fast = jax.jit(partial(decoder_layer, num_heads=num_heads,
                               tgt_is_causal=True, src_mask_is_full=True))
    out_fast = jax.block_until_ready(fwd_fast(x, enc_output, src_mask, tgt_mask, p_bf16))

    # General path (arbitrary masks, f32 matmuls): tight numeric check that the
    # kernel math matches the PyTorch-equivalent reference.
    p_f32 = prepare_params(params, num_heads=num_heads, compute_dtype=jnp.float32)
    fwd_gen = jax.jit(partial(decoder_layer, num_heads=num_heads))
    out_gen = jax.block_until_ready(fwd_gen(x, enc_output, src_mask, tgt_mask, p_f32))

    assert out_fast.shape == (B, S_tgt, d_model)
    assert out_gen.shape == (B, S_tgt, d_model)
    # f32 path: tolerance only loosened by pl.reciprocal(approx=True)
    assert jnp.allclose(out_gen, ref, atol=5e-3, rtol=5e-3), "f32 path mismatch"
    # bf16 path: bf16 MXU inputs with f32 accumulation / stats
    assert jnp.allclose(out_fast, ref, atol=1e-1, rtol=1e-1), "bf16 path mismatch"

    print("KERNEL_OK")
</pallas_src>

<mosaic_0001>
module attributes {stable_mosaic.version = 11 : i64} {
  func.func @_ffn_ln_block_kernel(%arg0: i32, %arg1: memref<16x32xf32, #tpu.memory_space<vmem>>, %arg2: memref<32x64xbf16, #tpu.memory_space<vmem>>, %arg3: memref<1x64xf32, #tpu.memory_space<vmem>>, %arg4: memref<64x32xbf16, #tpu.memory_space<vmem>>, %arg5: memref<1x32xf32, #tpu.memory_space<vmem>>, %arg6: memref<1x32xf32, #tpu.memory_space<vmem>>, %arg7: memref<1x32xf32, #tpu.memory_space<vmem>>, %arg8: memref<16x32xf32, #tpu.memory_space<vmem>>) attributes {dimension_semantics = [#tpu.dimension_semantics<parallel>], iteration_bounds = array<i64: 1>, scalar_prefetch = 0 : i64, scratch_operands = 0 : i64, tpu.core_type = #tpu.core_type<tc>, window_params = [{transform_indices = @transform_0, window_bounds = array<i64: 16, 32>}, {pipeline_mode = #tpu.pipeline_mode<synchronous>, transform_indices = @transform_1, window_bounds = array<i64: 32, 64>}, {pipeline_mode = #tpu.pipeline_mode<synchronous>, transform_indices = @transform_2, window_bounds = array<i64: 1, 64>}, {pipeline_mode = #tpu.pipeline_mode<synchronous>, transform_indices = @transform_3, window_bounds = array<i64: 64, 32>}, {pipeline_mode = #tpu.pipeline_mode<synchronous>, transform_indices = @transform_4, window_bounds = array<i64: 1, 32>}, {pipeline_mode = #tpu.pipeline_mode<synchronous>, transform_indices = @transform_5, window_bounds = array<i64: 1, 32>}, {pipeline_mode = #tpu.pipeline_mode<synchronous>, transform_indices = @transform_6, window_bounds = array<i64: 1, 32>}, {transform_indices = @transform_7, window_bounds = array<i64: 16, 32>}]} {
    %c0 = arith.constant 0 : index
    %c0_0 = arith.constant 0 : index
    %0 = vector.load %arg1[%c0, %c0_0] : memref<16x32xf32, #tpu.memory_space<vmem>>, vector<16x32xf32>
    %c0_1 = arith.constant 0 : index
    %c0_2 = arith.constant 0 : index
    %1 = vector.load %arg2[%c0_1, %c0_2] : memref<32x64xbf16, #tpu.memory_space<vmem>>, vector<32x64xbf16>
    %2 = arith.truncf %0 : vector<16x32xf32> to vector<16x32xbf16>
    %cst = arith.constant dense<0.000000e+00> : vector<16x64xf32>
    %3 = tpu.matmul %2, %1, %cst {dimension_numbers = #tpu.dot_dimension_numbers<[1], [0], [0], [1], [0, 0, 1, 1], [], []>} : vector<16x32xbf16>, vector<32x64xbf16>, vector<16x64xf32> -> vector<16x64xf32>
    %c0_3 = arith.constant 0 : index
    %c0_4 = arith.constant 0 : index
    %4 = vector.load %arg3[%c0_3, %c0_4] : memref<1x64xf32, #tpu.memory_space<vmem>>, vector<1x64xf32>
    %5 = vector.broadcast %4 : vector<1x64xf32> to vector<16x64xf32>
    %6 = arith.addf %3, %5 : vector<16x64xf32>
    %cst_5 = arith.constant 0.000000e+00 : f32
    %7 = vector.broadcast %cst_5 : f32 to vector<16x64xf32>
    %8 = arith.maximumf %6, %7 : vector<16x64xf32>
    %c0_6 = arith.constant 0 : index
    %c0_7 = arith.constant 0 : index
    %9 = vector.load %arg4[%c0_6, %c0_7] : memref<64x32xbf16, #tpu.memory_space<vmem>>, vector<64x32xbf16>
    %10 = arith.truncf %8 : vector<16x64xf32> to vector<16x64xbf16>
    %cst_8 = arith.constant dense<0.000000e+00> : vector<16x32xf32>
    %11 = tpu.matmul %10, %9, %cst_8 {dimension_numbers = #tpu.dot_dimension_numbers<[1], [0], [0], [1], [0, 0, 1, 1], [], []>} : vector<16x64xbf16>, vector<64x32xbf16>, vector<16x32xf32> -> vector<16x32xf32>
    %c0_9 = arith.constant 0 : index
    %c0_10 = arith.constant 0 : index
    %12 = vector.load %arg5[%c0_9, %c0_10] : memref<1x32xf32, #tpu.memory_space<vmem>>, vector<1x32xf32>
    %13 = vector.broadcast %12 : vector<1x32xf32> to vector<16x32xf32>
    %14 = arith.addf %11, %13 : vector<16x32xf32>
    %c0_11 = arith.constant 0 : index
    %c0_12 = arith.constant 0 : index
    %15 = vector.load %arg6[%c0_11, %c0_12] : memref<1x32xf32, #tpu.memory_space<vmem>>, vector<1x32xf32>
    %c0_13 = arith.constant 0 : index
    %c0_14 = arith.constant 0 : index
    %16 = vector.load %arg7[%c0_13, %c0_14] : memref<1x32xf32, #tpu.memory_space<vmem>>, vector<1x32xf32>
    %17 = arith.addf %0, %14 : vector<16x32xf32>
    %cst_15 = arith.constant dense<0.000000e+00> : vector<16xf32>
    %18 = vector.multi_reduction <add>, %17, %cst_15 [1] : vector<16x32xf32> to vector<16xf32>
    %19 = vector.shape_cast %18 : vector<16xf32> to vector<16x1xf32>
    %cst_16 = arith.constant 3.200000e+01 : f32
    %20 = vector.broadcast %cst_16 : f32 to vector<16x1xf32>
    %21 = arith.divf %19, %20 : vector<16x1xf32>
    %22 = vector.broadcast %21 : vector<16x1xf32> to vector<16x32xf32>
    %23 = arith.subf %17, %22 : vector<16x32xf32>
    %24 = arith.mulf %23, %23 : vector<16x32xf32>
    %cst_17 = arith.constant dense<0.000000e+00> : vector<16xf32>
    %25 = vector.multi_reduction <add>, %24, %cst_17 [1] : vector<16x32xf32> to vector<16xf32>
    %26 = vector.shape_cast %25 : vector<16xf32> to vector<16x1xf32>
    %cst_18 = arith.constant 3.200000e+01 : f32
    %27 = vector.broadcast %cst_18 : f32 to vector<16x1xf32>
    %28 = arith.divf %26, %27 : vector<16x1xf32>
    %cst_19 = arith.constant 9.99999974E-6 : f32
    %29 = vector.broadcast %cst_19 : f32 to vector<16x1xf32>
    %30 = arith.addf %28, %29 : vector<16x1xf32>
    %31 = math.rsqrt %30 : vector<16x1xf32>
    %32 = vector.broadcast %31 : vector<16x1xf32> to vector<16x32xf32>
    %33 = arith.mulf %23, %32 : vector<16x32xf32>
    %34 = vector.broadcast %15 : vector<1x32xf32> to vector<16x32xf32>
    %35 = arith.mulf %33, %34 : vector<16x32xf32>
    %36 = vector.broadcast %16 : vector<1x32xf32> to vector<16x32xf32>
    %37 = arith.addf %35, %36 : vector<16x32xf32>
    %c0_20 = arith.constant 0 : index
    %c0_21 = arith.constant 0 : index
    %38 = vector.load %arg8[%c0_20, %c0_21] : memref<16x32xf32, #tpu.memory_space<vmem>>, vector<16x32xf32>
    tpu.vector_store %arg8[%c0_20, %c0_21], %37 {strides = array<i32>} : memref<16x32xf32, #tpu.memory_space<vmem>>, vector<16x32xf32>,
    return
  }
  func.func @transform_0(%arg0: i32) -> (i32, i32) {
    %c0_i32 = arith.constant 0 : i32
    %c0_i32_0 = arith.constant 0 : i32
    return %arg0, %c0_i32 : i32, i32
  }
  func.func @transform_1(%arg0: i32) -> (i32, i32) {
    %c0_i32 = arith.constant 0 : i32
    %c0_i32_0 = arith.constant 0 : i32
    %c0_i32_1 = arith.constant 0 : i32
    return %c0_i32, %c0_i32_0 : i32, i32
  }
  func.func @transform_2(%arg0: i32) -> (i32, i32) {
    %c0_i32 = arith.constant 0 : i32
    %c0_i32_0 = arith.constant 0 : i32
    %c0_i32_1 = arith.constant 0 : i32
    return %c0_i32, %c0_i32_0 : i32, i32
  }
  func.func @transform_3(%arg0: i32) -> (i32, i32) {
    %c0_i32 = arith.constant 0 : i32
    %c0_i32_0 = arith.constant 0 : i32
    %c0_i32_1 = arith.constant 0 : i32
    return %c0_i32, %c0_i32_0 : i32, i32
  }
  func.func @transform_4(%arg0: i32) -> (i32, i32) {
    %c0_i32 = arith.constant 0 : i32
    %c0_i32_0 = arith.constant 0 : i32
    %c0_i32_1 = arith.constant 0 : i32
    return %c0_i32, %c0_i32_0 : i32, i32
  }
  func.func @transform_5(%arg0: i32) -> (i32, i32) {
    %c0_i32 = arith.constant 0 : i32
    %c0_i32_0 = arith.constant 0 : i32
    %c0_i32_1 = arith.constant 0 : i32
    return %c0_i32, %c0_i32_0 : i32, i32
  }
  func.func @transform_6(%arg0: i32) -> (i32, i32) {
    %c0_i32 = arith.constant 0 : i32
    %c0_i32_0 = arith.constant 0 : i32
    %c0_i32_1 = arith.constant 0 : i32
    return %c0_i32, %c0_i32_0 : i32, i32
  }
  func.func @transform_7(%arg0: i32) -> (i32, i32) {
    %c0_i32 = arith.constant 0 : i32
    %c0_i32_0 = arith.constant 0 : i32
    return %arg0, %c0_i32 : i32, i32
  }
}

module attributes {stable_mosaic.version = 11 : i64} {
  func.func @_cross_attn_block_kernel(%arg0: i32, %arg1: memref<1x8x32xf32, #tpu.memory_space<vmem>>, %arg2: memref<1x8x32xf32, #tpu.memory_space<vmem>>, %arg3: memref<32x32xbf16, #tpu.memory_space<vmem>>, %arg4: memref<1x32xf32, #tpu.memory_space<vmem>>, %arg5: memref<32x64xbf16, #tpu.memory_space<vmem>>, %arg6: memref<1x64xf32, #tpu.memory_space<vmem>>, %arg7: memref<32x32xbf16, #tpu.memory_space<vmem>>, %arg8: memref<1x32xf32, #tpu.memory_space<vmem>>, %arg9: memref<1x32xf32, #tpu.memory_space<vmem>>, %arg10: memref<1x32xf32, #tpu.memory_space<vmem>>, %arg11: memref<1x8x32xf32, #tpu.memory_space<vmem>>) attributes {dimension_semantics = [#tpu.dimension_semantics<parallel>], iteration_bounds = array<i64: 2>, scalar_prefetch = 0 : i64, scratch_operands = 0 : i64, tpu.core_type = #tpu.core_type<tc>, window_params = [{transform_indices = @transform_0, window_bounds = array<i64: 1, 8, 32>}, {transform_indices = @transform_1, window_bounds = array<i64: 1, 8, 32>}, {pipeline_mode = #tpu.pipeline_mode<synchronous>, transform_indices = @transform_2, window_bounds = array<i64: 32, 32>}, {pipeline_mode = #tpu.pipeline_mode<synchronous>, transform_indices = @transform_3, window_bounds = array<i64: 1, 32>}, {pipeline_mode = #tpu.pipeline_mode<synchronous>, transform_indices = @transform_4, window_bounds = array<i64: 32, 64>}, {pipeline_mode = #tpu.pipeline_mode<synchronous>, transform_indices = @transform_5, window_bounds = array<i64: 1, 64>}, {pipeline_mode = #tpu.pipeline_mode<synchronous>, transform_indices = @transform_6, window_bounds = array<i64: 32, 32>}, {pipeline_mode = #tpu.pipeline_mode<synchronous>, transform_indices = @transform_7, window_bounds = array<i64: 1, 32>}, {pipeline_mode = #tpu.pipeline_mode<synchronous>, transform_indices = @transform_8, window_bounds = array<i64: 1, 32>}, {pipeline_mode = #tpu.pipeline_mode<synchronous>, transform_indices = @transform_9, window_bounds = array<i64: 1, 32>}, {transform_indices = @transform_10, window_bounds = array<i64: 1, 8, 32>}]} {
    %c0 = arith.constant 0 : index
    %c0_0 = arith.constant 0 : index
    %c0_1 = arith.constant 0 : index
    %0 = vector.load %arg1[%c0, %c0_0, %c0_1] : memref<1x8x32xf32, #tpu.memory_space<vmem>>, vector<1x8x32xf32>
    %1 = vector.shape_cast %0 : vector<1x8x32xf32> to vector<8x32xf32>
    %c0_2 = arith.constant 0 : index
    %c0_3 = arith.constant 0 : index
    %c0_4 = arith.constant 0 : index
    %2 = vector.load %arg2[%c0_2, %c0_3, %c0_4] : memref<1x8x32xf32, #tpu.memory_space<vmem>>, vector<1x8x32xf32>
    %3 = vector.shape_cast %2 : vector<1x8x32xf32> to vector<8x32xf32>
    %c0_5 = arith.constant 0 : index
    %c0_6 = arith.constant 0 : index
    %4 = vector.load %arg3[%c0_5, %c0_6] : memref<32x32xbf16, #tpu.memory_space<vmem>>, vector<32x32xbf16>
    %5 = arith.truncf %1 : vector<8x32xf32> to vector<8x32xbf16>
    %cst = arith.constant dense<0.000000e+00> : vector<8x32xf32>
    %6 = tpu.matmul %5, %4, %cst {dimension_numbers = #tpu.dot_dimension_numbers<[1], [0], [0], [1], [0, 0, 1, 1], [], []>} : vector<8x32xbf16>, vector<32x32xbf16>, vector<8x32xf32> -> vector<8x32xf32>
    %c0_7 = arith.constant 0 : index
    %c0_8 = arith.constant 0 : index
    %7 = vector.load %arg4[%c0_7, %c0_8] : memref<1x32xf32, #tpu.memory_space<vmem>>, vector<1x32xf32>
    %8 = vector.broadcast %7 : vector<1x32xf32> to vector<8x32xf32>
    %9 = arith.addf %6, %8 : vector<8x32xf32>
    %c0_9 = arith.constant 0 : index
    %c0_10 = arith.constant 0 : index
    %10 = vector.load %arg5[%c0_9, %c0_10] : memref<32x64xbf16, #tpu.memory_space<vmem>>, vector<32x64xbf16>
    %11 = arith.truncf %3 : vector<8x32xf32> to vector<8x32xbf16>
    %cst_11 = arith.constant dense<0.000000e+00> : vector<8x64xf32>
    %12 = tpu.matmul %11, %10, %cst_11 {dimension_numbers = #tpu.dot_dimension_numbers<[1], [0], [0], [1], [0, 0, 1, 1], [], []>} : vector<8x32xbf16>, vector<32x64xbf16>, vector<8x64xf32> -> vector<8x64xf32>
    %c0_12 = arith.constant 0 : index
    %c0_13 = arith.constant 0 : index
    %13 = vector.load %arg6[%c0_12, %c0_13] : memref<1x64xf32, #tpu.memory_space<vmem>>, vector<1x64xf32>
    %14 = vector.broadcast %13 : vector<1x64xf32> to vector<8x64xf32>
    %15 = arith.addf %12, %14 : vector<8x64xf32>
    %c0_14 = arith.constant 0 : index
    %c0_15 = arith.constant 0 : index
    %16 = vector.load %arg7[%c0_14, %c0_15] : memref<32x32xbf16, #tpu.memory_space<vmem>>, vector<32x32xbf16>
    %c0_16 = arith.constant 0 : index
    %c0_17 = arith.constant 0 : index
    %17 = vector.load %arg8[%c0_16, %c0_17] : memref<1x32xf32, #tpu.memory_space<vmem>>, vector<1x32xf32>
    %18 = vector.extract_strided_slice %9 {offsets = [0, 0], sizes = [8, 8], strides = [1, 1]} : vector<8x32xf32> to vector<8x8xf32>
    %19 = vector.extract_strided_slice %15 {offsets = [0, 0], sizes = [8, 8], strides = [1, 1]} : vector<8x64xf32> to vector<8x8xf32>
    %20 = vector.extract_strided_slice %15 {offsets = [0, 32], sizes = [8, 8], strides = [1, 1]} : vector<8x64xf32> to vector<8x8xf32>
    %21 = arith.truncf %18 : vector<8x8xf32> to vector<8x8xbf16>
    %22 = arith.truncf %19 : vector<8x8xf32> to vector<8x8xbf16>
    %cst_18 = arith.constant dense<0.000000e+00> : vector<8x8xf32>
    %23 = tpu.matmul %21, %22, %cst_18 {dimension_numbers = #tpu.dot_dimension_numbers<[1], [1], [0], [0], [0, 0, 1, 0], [], []>} : vector<8x8xbf16>, vector<8x8xbf16>, vector<8x8xf32> -> vector<8x8xf32>
    %cst_19 = arith.constant dense<0xFF800000> : vector<8xf32>
    %24 = vector.multi_reduction <maximumf>, %23, %cst_19 [1] : vector<8x8xf32> to vector<8xf32>
    %25 = vector.shape_cast %24 : vector<8xf32> to vector<8x1xf32>
    %26 = vector.broadcast %25 : vector<8x1xf32> to vector<8x8xf32>
    %27 = arith.subf %23, %26 : vector<8x8xf32>
    %28 = math.exp %27 : vector<8x8xf32>
    %cst_20 = arith.constant dense<0.000000e+00> : vector<8xf32>
    %29 = vector.multi_reduction <add>, %28, %cst_20 [1] : vector<8x8xf32> to vector<8xf32>
    %30 = vector.shape_cast %29 : vector<8xf32> to vector<8x1xf32>
    %cst_21 = arith.constant 1.000000e-30 : f32
    %31 = vector.broadcast %cst_21 : f32 to vector<8x1xf32>
    %32 = arith.maximumf %30, %31 : vector<8x1xf32>
    %33 = tpu.reciprocal %32 {approx = true} : vector<8x1xf32> -> vector<8x1xf32>
    %34 = arith.truncf %28 : vector<8x8xf32> to vector<8x8xbf16>
    %35 = arith.truncf %20 : vector<8x8xf32> to vector<8x8xbf16>
    %cst_22 = arith.constant dense<0.000000e+00> : vector<8x8xf32>
    %36 = tpu.matmul %34, %35, %cst_22 {dimension_numbers = #tpu.dot_dimension_numbers<[1], [0], [0], [1], [0, 0, 1, 1], [], []>} : vector<8x8xbf16>, vector<8x8xbf16>, vector<8x8xf32> -> vector<8x8xf32>
    %37 = vector.broadcast %33 : vector<8x1xf32> to vector<8x8xf32>
    %38 = arith.mulf %36, %37 : vector<8x8xf32>
    %39 = vector.extract_strided_slice %9 {offsets = [0, 8], sizes = [8, 8], strides = [1, 1]} : vector<8x32xf32> to vector<8x8xf32>
    %40 = vector.extract_strided_slice %15 {offsets = [0, 8], sizes = [8, 8], strides = [1, 1]} : vector<8x64xf32> to vector<8x8xf32>
    %41 = vector.extract_strided_slice %15 {offsets = [0, 40], sizes = [8, 8], strides = [1, 1]} : vector<8x64xf32> to vector<8x8xf32>
    %42 = arith.truncf %39 : vector<8x8xf32> to vector<8x8xbf16>
    %43 = arith.truncf %40 : vector<8x8xf32> to vector<8x8xbf16>
    %cst_23 = arith.constant dense<0.000000e+00> : vector<8x8xf32>
    %44 = tpu.matmul %42, %43, %cst_23 {dimension_numbers = #tpu.dot_dimension_numbers<[1], [1], [0], [0], [0, 0, 1, 0], [], []>} : vector<8x8xbf16>, vector<8x8xbf16>, vector<8x8xf32> -> vector<8x8xf32>
    %cst_24 = arith.constant dense<0xFF800000> : vector<8xf32>
    %45 = vector.multi_reduction <maximumf>, %44, %cst_24 [1] : vector<8x8xf32> to vector<8xf32>
    %46 = vector.shape_cast %45 : vector<8xf32> to vector<8x1xf32>
    %47 = vector.broadcast %46 : vector<8x1xf32> to vector<8x8xf32>
    %48 = arith.subf %44, %47 : vector<8x8xf32>
    %49 = math.exp %48 : vector<8x8xf32>
    %cst_25 = arith.constant dense<0.000000e+00> : vector<8xf32>
    %50 = vector.multi_reduction <add>, %49, %cst_25 [1] : vector<8x8xf32> to vector<8xf32>
    %51 = vector.shape_cast %50 : vector<8xf32> to vector<8x1xf32>
    %cst_26 = arith.constant 1.000000e-30 : f32
    %52 = vector.broadcast %cst_26 : f32 to vector<8x1xf32>
    %53 = arith.maximumf %51, %52 : vector<8x1xf32>
    %54 = tpu.reciprocal %53 {approx = true} : vector<8x1xf32> -> vector<8x1xf32>
    %55 = arith.truncf %49 : vector<8x8xf32> to vector<8x8xbf16>
    %56 = arith.truncf %41 : vector<8x8xf32> to vector<8x8xbf16>
    %cst_27 = arith.constant dense<0.000000e+00> : vector<8x8xf32>
    %57 = tpu.matmul %55, %56, %cst_27 {dimension_numbers = #tpu.dot_dimension_numbers<[1], [0], [0], [1], [0, 0, 1, 1], [], []>} : vector<8x8xbf16>, vector<8x8xbf16>, vector<8x8xf32> -> vector<8x8xf32>
    %58 = vector.broadcast %54 : vector<8x1xf32> to vector<8x8xf32>
    %59 = arith.mulf %57, %58 : vector<8x8xf32>
    %60 = vector.extract_strided_slice %9 {offsets = [0, 16], sizes = [8, 8], strides = [1, 1]} : vector<8x32xf32> to vector<8x8xf32>
    %61 = vector.extract_strided_slice %15 {offsets = [0, 16], sizes = [8, 8], strides = [1, 1]} : vector<8x64xf32> to vector<8x8xf32>
    %62 = vector.extract_strided_slice %15 {offsets = [0, 48], sizes = [8, 8], strides = [1, 1]} : vector<8x64xf32> to vector<8x8xf32>
    %63 = arith.truncf %60 : vector<8x8xf32> to vector<8x8xbf16>
    %64 = arith.truncf %61 : vector<8x8xf32> to vector<8x8xbf16>
    %cst_28 = arith.constant dense<0.000000e+00> : vector<8x8xf32>
    %65 = tpu.matmul %63, %64, %cst_28 {dimension_numbers = #tpu.dot_dimension_numbers<[1], [1], [0], [0], [0, 0, 1, 0], [], []>} : vector<8x8xbf16>, vector<8x8xbf16>, vector<8x8xf32> -> vector<8x8xf32>
    %cst_29 = arith.constant dense<0xFF800000> : vector<8xf32>
    %66 = vector.multi_reduction <maximumf>, %65, %cst_29 [1] : vector<8x8xf32> to vector<8xf32>
    %67 = vector.shape_cast %66 : vector<8xf32> to vector<8x1xf32>
    %68 = vector.broadcast %67 : vector<8x1xf32> to vector<8x8xf32>
    %69 = arith.subf %65, %68 : vector<8x8xf32>
    %70 = math.exp %69 : vector<8x8xf32>
    %cst_30 = arith.constant dense<0.000000e+00> : vector<8xf32>
    %71 = vector.multi_reduction <add>, %70, %cst_30 [1] : vector<8x8xf32> to vector<8xf32>
    %72 = vector.shape_cast %71 : vector<8xf32> to vector<8x1xf32>
    %cst_31 = arith.constant 1.000000e-30 : f32
    %73 = vector.broadcast %cst_31 : f32 to vector<8x1xf32>
    %74 = arith.maximumf %72, %73 : vector<8x1xf32>
    %75 = tpu.reciprocal %74 {approx = true} : vector<8x1xf32> -> vector<8x1xf32>
    %76 = arith.truncf %70 : vector<8x8xf32> to vector<8x8xbf16>
    %77 = arith.truncf %62 : vector<8x8xf32> to vector<8x8xbf16>
    %cst_32 = arith.constant dense<0.000000e+00> : vector<8x8xf32>
    %78 = tpu.matmul %76, %77, %cst_32 {dimension_numbers = #tpu.dot_dimension_numbers<[1], [0], [0], [1], [0, 0, 1, 1], [], []>} : vector<8x8xbf16>, vector<8x8xbf16>, vector<8x8xf32> -> vector<8x8xf32>
    %79 = vector.broadcast %75 : vector<8x1xf32> to vector<8x8xf32>
    %80 = arith.mulf %78, %79 : vector<8x8xf32>
    %81 = vector.extract_strided_slice %9 {offsets = [0, 24], sizes = [8, 8], strides = [1, 1]} : vector<8x32xf32> to vector<8x8xf32>
    %82 = vector.extract_strided_slice %15 {offsets = [0, 24], sizes = [8, 8], strides = [1, 1]} : vector<8x64xf32> to vector<8x8xf32>
    %83 = vector.extract_strided_slice %15 {offsets = [0, 56], sizes = [8, 8], strides = [1, 1]} : vector<8x64xf32> to vector<8x8xf32>
    %84 = arith.truncf %81 : vector<8x8xf32> to vector<8x8xbf16>
    %85 = arith.truncf %82 : vector<8x8xf32> to vector<8x8xbf16>
    %cst_33 = arith.constant dense<0.000000e+00> : vector<8x8xf32>
    %86 = tpu.matmul %84, %85, %cst_33 {dimension_numbers = #tpu.dot_dimension_numbers<[1], [1], [0], [0], [0, 0, 1, 0], [], []>} : vector<8x8xbf16>, vector<8x8xbf16>, vector<8x8xf32> -> vector<8x8xf32>
    %cst_34 = arith.constant dense<0xFF800000> : vector<8xf32>
    %87 = vector.multi_reduction <maximumf>, %86, %cst_34 [1] : vector<8x8xf32> to vector<8xf32>
    %88 = vector.shape_cast %87 : vector<8xf32> to vector<8x1xf32>
    %89 = vector.broadcast %88 : vector<8x1xf32> to vector<8x8xf32>
    %90 = arith.subf %86, %89 : vector<8x8xf32>
    %91 = math.exp %90 : vector<8x8xf32>
    %cst_35 = arith.constant dense<0.000000e+00> : vector<8xf32>
    %92 = vector.multi_reduction <add>, %91, %cst_35 [1] : vector<8x8xf32> to vector<8xf32>
    %93 = vector.shape_cast %92 : vector<8xf32> to vector<8x1xf32>
    %cst_36 = arith.constant 1.000000e-30 : f32
    %94 = vector.broadcast %cst_36 : f32 to vector<8x1xf32>
    %95 = arith.maximumf %93, %94 : vector<8x1xf32>
    %96 = tpu.reciprocal %95 {approx = true} : vector<8x1xf32> -> vector<8x1xf32>
    %97 = arith.truncf %91 : vector<8x8xf32> to vector<8x8xbf16>
    %98 = arith.truncf %83 : vector<8x8xf32> to vector<8x8xbf16>
    %cst_37 = arith.constant dense<0.000000e+00> : vector<8x8xf32>
    %99 = tpu.matmul %97, %98, %cst_37 {dimension_numbers = #tpu.dot_dimension_numbers<[1], [0], [0], [1], [0, 0, 1, 1], [], []>} : vector<8x8xbf16>, vector<8x8xbf16>, vector<8x8xf32> -> vector<8x8xf32>
    %100 = vector.broadcast %96 : vector<8x1xf32> to vector<8x8xf32>
    %101 = arith.mulf %99, %100 : vector<8x8xf32>
    %102 = tpu.concatenate %38, %59, %80, %101 in 1 : vector<8x8xf32>, vector<8x8xf32>, vector<8x8xf32>, vector<8x8xf32> -> vector<8x32xf32>
    %103 = arith.truncf %102 : vector<8x32xf32> to vector<8x32xbf16>
    %cst_38 = arith.constant dense<0.000000e+00> : vector<8x32xf32>
    %104 = tpu.matmul %103, %16, %cst_38 {dimension_numbers = #tpu.dot_dimension_numbers<[1], [0], [0], [1], [0, 0, 1, 1], [], []>} : vector<8x32xbf16>, vector<32x32xbf16>, vector<8x32xf32> -> vector<8x32xf32>
    %105 = vector.broadcast %17 : vector<1x32xf32> to vector<8x32xf32>
    %106 = arith.addf %104, %105 : vector<8x32xf32>
    %c0_39 = arith.constant 0 : index
    %c0_40 = arith.constant 0 : index
    %107 = vector.load %arg9[%c0_39, %c0_40] : memref<1x32xf32, #tpu.memory_space<vmem>>, vector<1x32xf32>
    %c0_41 = arith.constant 0 : index
    %c0_42 = arith.constant 0 : index
    %108 = vector.load %arg10[%c0_41, %c0_42] : memref<1x32xf32, #tpu.memory_space<vmem>>, vector<1x32xf32>
    %109 = arith.addf %1, %106 : vector<8x32xf32>
    %cst_43 = arith.constant dense<0.000000e+00> : vector<8xf32>
    %110 = vector.multi_reduction <add>, %109, %cst_43 [1] : vector<8x32xf32> to vector<8xf32>
    %111 = vector.shape_cast %110 : vector<8xf32> to vector<8x1xf32>
    %cst_44 = arith.constant 3.200000e+01 : f32
    %112 = vector.broadcast %cst_44 : f32 to vector<8x1xf32>
    %113 = arith.divf %111, %112 : vector<8x1xf32>
    %114 = vector.broadcast %113 : vector<8x1xf32> to vector<8x32xf32>
    %115 = arith.subf %109, %114 : vector<8x32xf32>
    %116 = arith.mulf %115, %115 : vector<8x32xf32>
    %cst_45 = arith.constant dense<0.000000e+00> : vector<8xf32>
    %117 = vector.multi_reduction <add>, %116, %cst_45 [1] : vector<8x32xf32> to vector<8xf32>
    %118 = vector.shape_cast %117 : vector<8xf32> to vector<8x1xf32>
    %cst_46 = arith.constant 3.200000e+01 : f32
    %119 = vector.broadcast %cst_46 : f32 to vector<8x1xf32>
    %120 = arith.divf %118, %119 : vector<8x1xf32>
    %cst_47 = arith.constant 9.99999974E-6 : f32
    %121 = vector.broadcast %cst_47 : f32 to vector<8x1xf32>
    %122 = arith.addf %120, %121 : vector<8x1xf32>
    %123 = math.rsqrt %122 : vector<8x1xf32>
    %124 = vector.broadcast %123 : vector<8x1xf32> to vector<8x32xf32>
    %125 = arith.mulf %115, %124 : vector<8x32xf32>
    %126 = vector.broadcast %107 : vector<1x32xf32> to vector<8x32xf32>
    %127 = arith.mulf %125, %126 : vector<8x32xf32>
    %128 = vector.broadcast %108 : vector<1x32xf32> to vector<8x32xf32>
    %129 = arith.addf %127, %128 : vector<8x32xf32>
    %c0_48 = arith.constant 0 : index
    %c0_49 = arith.constant 0 : index
    %c0_50 = arith.constant 0 : index
    %130 = vector.load %arg11[%c0_48, %c0_49, %c0_50] : memref<1x8x32xf32, #tpu.memory_space<vmem>>, vector<1x8x32xf32>
    %131 = vector.shape_cast %130 : vector<1x8x32xf32> to vector<8x32xf32>
    %132 = vector.shape_cast %129 : vector<8x32xf32> to vector<1x8x32xf32>
    tpu.vector_store %arg11[%c0_48, %c0_49, %c0_50], %132 {strides = array<i32>} : memref<1x8x32xf32, #tpu.memory_space<vmem>>, vector<1x8x32xf32>,
    return
  }
  func.func @transform_0(%arg0: i32) -> (i32, i32, i32) {
    %c0_i32 = arith.constant 0 : i32
    %c0_i32_0 = arith.constant 0 : i32
    %c0_i32_1 = arith.constant 0 : i32
    return %arg0, %c0_i32, %c0_i32_0 : i32, i32, i32
  }
  func.func @transform_1(%arg0: i32) -> (i32, i32, i32) {
    %c0_i32 = arith.constant 0 : i32
    %c0_i32_0 = arith.constant 0 : i32
    %c0_i32_1 = arith.constant 0 : i32
    return %arg0, %c0_i32, %c0_i32_0 : i32, i32, i32
  }
  func.func @transform_2(%arg0: i32) -> (i32, i32) {
    %c0_i32 = arith.constant 0 : i32
    %c0_i32_0 = arith.constant 0 : i32
    %c0_i32_1 = arith.constant 0 : i32
    return %c0_i32, %c0_i32_0 : i32, i32
  }
  func.func @transform_3(%arg0: i32) -> (i32, i32) {
    %c0_i32 = arith.constant 0 : i32
    %c0_i32_0 = arith.constant 0 : i32
    %c0_i32_1 = arith.constant 0 : i32
    return %c0_i32, %c0_i32_0 : i32, i32
  }
  func.func @transform_4(%arg0: i32) -> (i32, i32) {
    %c0_i32 = arith.constant 0 : i32
    %c0_i32_0 = arith.constant 0 : i32
    %c0_i32_1 = arith.constant 0 : i32
    return %c0_i32, %c0_i32_0 : i32, i32
  }
  func.func @transform_5(%arg0: i32) -> (i32, i32) {
    %c0_i32 = arith.constant 0 : i32
    %c0_i32_0 = arith.constant 0 : i32
    %c0_i32_1 = arith.constant 0 : i32
    return %c0_i32, %c0_i32_0 : i32, i32
  }
  func.func @transform_6(%arg0: i32) -> (i32, i32) {
    %c0_i32 = arith.constant 0 : i32
    %c0_i32_0 = arith.constant 0 : i32
    %c0_i32_1 = arith.constant 0 : i32
    return %c0_i32, %c0_i32_0 : i32, i32
  }
  func.func @transform_7(%arg0: i32) -> (i32, i32) {
    %c0_i32 = arith.constant 0 : i32
    %c0_i32_0 = arith.constant 0 : i32
    %c0_i32_1 = arith.constant 0 : i32
    return %c0_i32, %c0_i32_0 : i32, i32
  }
  func.func @transform_8(%arg0: i32) -> (i32, i32) {
    %c0_i32 = arith.constant 0 : i32
    %c0_i32_0 = arith.constant 0 : i32
    %c0_i32_1 = arith.constant 0 : i32
    return %c0_i32, %c0_i32_0 : i32, i32
  }
  func.func @transform_9(%arg0: i32) -> (i32, i32) {
    %c0_i32 = arith.constant 0 : i32
    %c0_i32_0 = arith.constant 0 : i32
    %c0_i32_1 = arith.constant 0 : i32
    return %c0_i32, %c0_i32_0 : i32, i32
  }
  func.func @transform_10(%arg0: i32) -> (i32, i32, i32) {
    %c0_i32 = arith.constant 0 : i32
    %c0_i32_0 = arith.constant 0 : i32
    %c0_i32_1 = arith.constant 0 : i32
    return %arg0, %c0_i32, %c0_i32_0 : i32, i32, i32
  }
}

module attributes {stable_mosaic.version = 11 : i64} {
  func.func @_self_attn_block_kernel(%arg0: i32, %arg1: memref<1x8x32xf32, #tpu.memory_space<vmem>>, %arg2: memref<32x96xbf16, #tpu.memory_space<vmem>>, %arg3: memref<1x96xf32, #tpu.memory_space<vmem>>, %arg4: memref<32x32xbf16, #tpu.memory_space<vmem>>, %arg5: memref<1x32xf32, #tpu.memory_space<vmem>>, %arg6: memref<1x32xf32, #tpu.memory_space<vmem>>, %arg7: memref<1x32xf32, #tpu.memory_space<vmem>>, %arg8: memref<1x8x32xf32, #tpu.memory_space<vmem>>) attributes {dimension_semantics = [#tpu.dimension_semantics<parallel>], iteration_bounds = array<i64: 2>, scalar_prefetch = 0 : i64, scratch_operands = 0 : i64, tpu.core_type = #tpu.core_type<tc>, window_params = [{transform_indices = @transform_0, window_bounds = array<i64: 1, 8, 32>}, {pipeline_mode = #tpu.pipeline_mode<synchronous>, transform_indices = @transform_1, window_bounds = array<i64: 32, 96>}, {pipeline_mode = #tpu.pipeline_mode<synchronous>, transform_indices = @transform_2, window_bounds = array<i64: 1, 96>}, {pipeline_mode = #tpu.pipeline_mode<synchronous>, transform_indices = @transform_3, window_bounds = array<i64: 32, 32>}, {pipeline_mode = #tpu.pipeline_mode<synchronous>, transform_indices = @transform_4, window_bounds = array<i64: 1, 32>}, {pipeline_mode = #tpu.pipeline_mode<synchronous>, transform_indices = @transform_5, window_bounds = array<i64: 1, 32>}, {pipeline_mode = #tpu.pipeline_mode<synchronous>, transform_indices = @transform_6, window_bounds = array<i64: 1, 32>}, {transform_indices = @transform_7, window_bounds = array<i64: 1, 8, 32>}]} {
    %c0 = arith.constant 0 : index
    %c0_0 = arith.constant 0 : index
    %c0_1 = arith.constant 0 : index
    %0 = vector.load %arg1[%c0, %c0_0, %c0_1] : memref<1x8x32xf32, #tpu.memory_space<vmem>>, vector<1x8x32xf32>
    %1 = vector.shape_cast %0 : vector<1x8x32xf32> to vector<8x32xf32>
    %c0_2 = arith.constant 0 : index
    %c0_3 = arith.constant 0 : index
    %2 = vector.load %arg2[%c0_2, %c0_3] : memref<32x96xbf16, #tpu.memory_space<vmem>>, vector<32x96xbf16>
    %3 = arith.truncf %1 : vector<8x32xf32> to vector<8x32xbf16>
    %cst = arith.constant dense<0.000000e+00> : vector<8x96xf32>
    %4 = tpu.matmul %3, %2, %cst {dimension_numbers = #tpu.dot_dimension_numbers<[1], [0], [0], [1], [0, 0, 1, 1], [], []>} : vector<8x32xbf16>, vector<32x96xbf16>, vector<8x96xf32> -> vector<8x96xf32>
    %c0_4 = arith.constant 0 : index
    %c0_5 = arith.constant 0 : index
    %5 = vector.load %arg3[%c0_4, %c0_5] : memref<1x96xf32, #tpu.memory_space<vmem>>, vector<1x96xf32>
    %6 = vector.broadcast %5 : vector<1x96xf32> to vector<8x96xf32>
    %7 = arith.addf %4, %6 : vector<8x96xf32>
    %8 = tpu.iota {dimensions = array<i32: 0>} : vector<8x8xi32>
    %9 = tpu.iota {dimensions = array<i32: 1>} : vector<8x8xi32>
    %10 = arith.cmpi sle, %9, %8 : vector<8x8xi32>
    %cst_6 = arith.constant 0.000000e+00 : f32
    %cst_7 = arith.constant -1.000000e+09 : f32
    %11 = vector.broadcast %cst_6 : f32 to vector<8x8xf32>
    %12 = vector.broadcast %cst_7 : f32 to vector<8x8xf32>
    %13 = arith.select %10, %11, %12 : vector<8x8xi1>, vector<8x8xf32>
    %14 = vector.extract_strided_slice %7 {offsets = [0, 0], sizes = [8, 32], strides = [1, 1]} : vector<8x96xf32> to vector<8x32xf32>
    %15 = vector.extract_strided_slice %7 {offsets = [0, 32], sizes = [8, 64], strides = [1, 1]} : vector<8x96xf32> to vector<8x64xf32>
    %c0_8 = arith.constant 0 : index
    %c0_9 = arith.constant 0 : index
    %16 = vector.load %arg4[%c0_8, %c0_9] : memref<32x32xbf16, #tpu.memory_space<vmem>>, vector<32x32xbf16>
    %c0_10 = arith.constant 0 : index
    %c0_11 = arith.constant 0 : index
    %17 = vector.load %arg5[%c0_10, %c0_11] : memref<1x32xf32, #tpu.memory_space<vmem>>, vector<1x32xf32>
    %18 = vector.extract_strided_slice %14 {offsets = [0, 0], sizes = [8, 8], strides = [1, 1]} : vector<8x32xf32> to vector<8x8xf32>
    %19 = vector.extract_strided_slice %15 {offsets = [0, 0], sizes = [8, 8], strides = [1, 1]} : vector<8x64xf32> to vector<8x8xf32>
    %20 = vector.extract_strided_slice %15 {offsets = [0, 32], sizes = [8, 8], strides = [1, 1]} : vector<8x64xf32> to vector<8x8xf32>
    %21 = arith.truncf %18 : vector<8x8xf32> to vector<8x8xbf16>
    %22 = arith.truncf %19 : vector<8x8xf32> to vector<8x8xbf16>
    %cst_12 = arith.constant dense<0.000000e+00> : vector<8x8xf32>
    %23 = tpu.matmul %21, %22, %cst_12 {dimension_numbers = #tpu.dot_dimension_numbers<[1], [1], [0], [0], [0, 0, 1, 0], [], []>} : vector<8x8xbf16>, vector<8x8xbf16>, vector<8x8xf32> -> vector<8x8xf32>
    %24 = arith.addf %23, %13 : vector<8x8xf32>
    %cst_13 = arith.constant dense<0xFF800000> : vector<8xf32>
    %25 = vector.multi_reduction <maximumf>, %24, %cst_13 [1] : vector<8x8xf32> to vector<8xf32>
    %26 = vector.shape_cast %25 : vector<8xf32> to vector<8x1xf32>
    %27 = vector.broadcast %26 : vector<8x1xf32> to vector<8x8xf32>
    %28 = arith.subf %24, %27 : vector<8x8xf32>
    %29 = math.exp %28 : vector<8x8xf32>
    %cst_14 = arith.constant dense<0.000000e+00> : vector<8xf32>
    %30 = vector.multi_reduction <add>, %29, %cst_14 [1] : vector<8x8xf32> to vector<8xf32>
    %31 = vector.shape_cast %30 : vector<8xf32> to vector<8x1xf32>
    %cst_15 = arith.constant 1.000000e-30 : f32
    %32 = vector.broadcast %cst_15 : f32 to vector<8x1xf32>
    %33 = arith.maximumf %31, %32 : vector<8x1xf32>
    %34 = tpu.reciprocal %33 {approx = true} : vector<8x1xf32> -> vector<8x1xf32>
    %35 = arith.truncf %29 : vector<8x8xf32> to vector<8x8xbf16>
    %36 = arith.truncf %20 : vector<8x8xf32> to vector<8x8xbf16>
    %cst_16 = arith.constant dense<0.000000e+00> : vector<8x8xf32>
    %37 = tpu.matmul %35, %36, %cst_16 {dimension_numbers = #tpu.dot_dimension_numbers<[1], [0], [0], [1], [0, 0, 1, 1], [], []>} : vector<8x8xbf16>, vector<8x8xbf16>, vector<8x8xf32> -> vector<8x8xf32>
    %38 = vector.broadcast %34 : vector<8x1xf32> to vector<8x8xf32>
    %39 = arith.mulf %37, %38 : vector<8x8xf32>
    %40 = vector.extract_strided_slice %14 {offsets = [0, 8], sizes = [8, 8], strides = [1, 1]} : vector<8x32xf32> to vector<8x8xf32>
    %41 = vector.extract_strided_slice %15 {offsets = [0, 8], sizes = [8, 8], strides = [1, 1]} : vector<8x64xf32> to vector<8x8xf32>
    %42 = vector.extract_strided_slice %15 {offsets = [0, 40], sizes = [8, 8], strides = [1, 1]} : vector<8x64xf32> to vector<8x8xf32>
    %43 = arith.truncf %40 : vector<8x8xf32> to vector<8x8xbf16>
    %44 = arith.truncf %41 : vector<8x8xf32> to vector<8x8xbf16>
    %cst_17 = arith.constant dense<0.000000e+00> : vector<8x8xf32>
    %45 = tpu.matmul %43, %44, %cst_17 {dimension_numbers = #tpu.dot_dimension_numbers<[1], [1], [0], [0], [0, 0, 1, 0], [], []>} : vector<8x8xbf16>, vector<8x8xbf16>, vector<8x8xf32> -> vector<8x8xf32>
    %46 = arith.addf %45, %13 : vector<8x8xf32>
    %cst_18 = arith.constant dense<0xFF800000> : vector<8xf32>
    %47 = vector.multi_reduction <maximumf>, %46, %cst_18 [1] : vector<8x8xf32> to vector<8xf32>
    %48 = vector.shape_cast %47 : vector<8xf32> to vector<8x1xf32>
    %49 = vector.broadcast %48 : vector<8x1xf32> to vector<8x8xf32>
    %50 = arith.subf %46, %49 : vector<8x8xf32>
    %51 = math.exp %50 : vector<8x8xf32>
    %cst_19 = arith.constant dense<0.000000e+00> : vector<8xf32>
    %52 = vector.multi_reduction <add>, %51, %cst_19 [1] : vector<8x8xf32> to vector<8xf32>
    %53 = vector.shape_cast %52 : vector<8xf32> to vector<8x1xf32>
    %cst_20 = arith.constant 1.000000e-30 : f32
    %54 = vector.broadcast %cst_20 : f32 to vector<8x1xf32>
    %55 = arith.maximumf %53, %54 : vector<8x1xf32>
    %56 = tpu.reciprocal %55 {approx = true} : vector<8x1xf32> -> vector<8x1xf32>
    %57 = arith.truncf %51 : vector<8x8xf32> to vector<8x8xbf16>
    %58 = arith.truncf %42 : vector<8x8xf32> to vector<8x8xbf16>
    %cst_21 = arith.constant dense<0.000000e+00> : vector<8x8xf32>
    %59 = tpu.matmul %57, %58, %cst_21 {dimension_numbers = #tpu.dot_dimension_numbers<[1], [0], [0], [1], [0, 0, 1, 1], [], []>} : vector<8x8xbf16>, vector<8x8xbf16>, vector<8x8xf32> -> vector<8x8xf32>
    %60 = vector.broadcast %56 : vector<8x1xf32> to vector<8x8xf32>
    %61 = arith.mulf %59, %60 : vector<8x8xf32>
    %62 = vector.extract_strided_slice %14 {offsets = [0, 16], sizes = [8, 8], strides = [1, 1]} : vector<8x32xf32> to vector<8x8xf32>
    %63 = vector.extract_strided_slice %15 {offsets = [0, 16], sizes = [8, 8], strides = [1, 1]} : vector<8x64xf32> to vector<8x8xf32>
    %64 = vector.extract_strided_slice %15 {offsets = [0, 48], sizes = [8, 8], strides = [1, 1]} : vector<8x64xf32> to vector<8x8xf32>
    %65 = arith.truncf %62 : vector<8x8xf32> to vector<8x8xbf16>
    %66 = arith.truncf %63 : vector<8x8xf32> to vector<8x8xbf16>
    %cst_22 = arith.constant dense<0.000000e+00> : vector<8x8xf32>
    %67 = tpu.matmul %65, %66, %cst_22 {dimension_numbers = #tpu.dot_dimension_numbers<[1], [1], [0], [0], [0, 0, 1, 0], [], []>} : vector<8x8xbf16>, vector<8x8xbf16>, vector<8x8xf32> -> vector<8x8xf32>
    %68 = arith.addf %67, %13 : vector<8x8xf32>
    %cst_23 = arith.constant dense<0xFF800000> : vector<8xf32>
    %69 = vector.multi_reduction <maximumf>, %68, %cst_23 [1] : vector<8x8xf32> to vector<8xf32>
    %70 = vector.shape_cast %69 : vector<8xf32> to vector<8x1xf32>
    %71 = vector.broadcast %70 : vector<8x1xf32> to vector<8x8xf32>
    %72 = arith.subf %68, %71 : vector<8x8xf32>
    %73 = math.exp %72 : vector<8x8xf32>
    %cst_24 = arith.constant dense<0.000000e+00> : vector<8xf32>
    %74 = vector.multi_reduction <add>, %73, %cst_24 [1] : vector<8x8xf32> to vector<8xf32>
    %75 = vector.shape_cast %74 : vector<8xf32> to vector<8x1xf32>
    %cst_25 = arith.constant 1.000000e-30 : f32
    %76 = vector.broadcast %cst_25 : f32 to vector<8x1xf32>
    %77 = arith.maximumf %75, %76 : vector<8x1xf32>
    %78 = tpu.reciprocal %77 {approx = true} : vector<8x1xf32> -> vector<8x1xf32>
    %79 = arith.truncf %73 : vector<8x8xf32> to vector<8x8xbf16>
    %80 = arith.truncf %64 : vector<8x8xf32> to vector<8x8xbf16>
    %cst_26 = arith.constant dense<0.000000e+00> : vector<8x8xf32>
    %81 = tpu.matmul %79, %80, %cst_26 {dimension_numbers = #tpu.dot_dimension_numbers<[1], [0], [0], [1], [0, 0, 1, 1], [], []>} : vector<8x8xbf16>, vector<8x8xbf16>, vector<8x8xf32> -> vector<8x8xf32>
    %82 = vector.broadcast %78 : vector<8x1xf32> to vector<8x8xf32>
    %83 = arith.mulf %81, %82 : vector<8x8xf32>
    %84 = vector.extract_strided_slice %14 {offsets = [0, 24], sizes = [8, 8], strides = [1, 1]} : vector<8x32xf32> to vector<8x8xf32>
    %85 = vector.extract_strided_slice %15 {offsets = [0, 24], sizes = [8, 8], strides = [1, 1]} : vector<8x64xf32> to vector<8x8xf32>
    %86 = vector.extract_strided_slice %15 {offsets = [0, 56], sizes = [8, 8], strides = [1, 1]} : vector<8x64xf32> to vector<8x8xf32>
    %87 = arith.truncf %84 : vector<8x8xf32> to vector<8x8xbf16>
    %88 = arith.truncf %85 : vector<8x8xf32> to vector<8x8xbf16>
    %cst_27 = arith.constant dense<0.000000e+00> : vector<8x8xf32>
    %89 = tpu.matmul %87, %88, %cst_27 {dimension_numbers = #tpu.dot_dimension_numbers<[1], [1], [0], [0], [0, 0, 1, 0], [], []>} : vector<8x8xbf16>, vector<8x8xbf16>, vector<8x8xf32> -> vector<8x8xf32>
    %90 = arith.addf %89, %13 : vector<8x8xf32>
    %cst_28 = arith.constant dense<0xFF800000> : vector<8xf32>
    %91 = vector.multi_reduction <maximumf>, %90, %cst_28 [1] : vector<8x8xf32> to vector<8xf32>
    %92 = vector.shape_cast %91 : vector<8xf32> to vector<8x1xf32>
    %93 = vector.broadcast %92 : vector<8x1xf32> to vector<8x8xf32>
    %94 = arith.subf %90, %93 : vector<8x8xf32>
    %95 = math.exp %94 : vector<8x8xf32>
    %cst_29 = arith.constant dense<0.000000e+00> : vector<8xf32>
    %96 = vector.multi_reduction <add>, %95, %cst_29 [1] : vector<8x8xf32> to vector<8xf32>
    %97 = vector.shape_cast %96 : vector<8xf32> to vector<8x1xf32>
    %cst_30 = arith.constant 1.000000e-30 : f32
    %98 = vector.broadcast %cst_30 : f32 to vector<8x1xf32>
    %99 = arith.maximumf %97, %98 : vector<8x1xf32>
    %100 = tpu.reciprocal %99 {approx = true} : vector<8x1xf32> -> vector<8x1xf32>
    %101 = arith.truncf %95 : vector<8x8xf32> to vector<8x8xbf16>
    %102 = arith.truncf %86 : vector<8x8xf32> to vector<8x8xbf16>
    %cst_31 = arith.constant dense<0.000000e+00> : vector<8x8xf32>
    %103 = tpu.matmul %101, %102, %cst_31 {dimension_numbers = #tpu.dot_dimension_numbers<[1], [0], [0], [1], [0, 0, 1, 1], [], []>} : vector<8x8xbf16>, vector<8x8xbf16>, vector<8x8xf32> -> vector<8x8xf32>
    %104 = vector.broadcast %100 : vector<8x1xf32> to vector<8x8xf32>
    %105 = arith.mulf %103, %104 : vector<8x8xf32>
    %106 = tpu.concatenate %39, %61, %83, %105 in 1 : vector<8x8xf32>, vector<8x8xf32>, vector<8x8xf32>, vector<8x8xf32> -> vector<8x32xf32>
    %107 = arith.truncf %106 : vector<8x32xf32> to vector<8x32xbf16>
    %cst_32 = arith.constant dense<0.000000e+00> : vector<8x32xf32>
    %108 = tpu.matmul %107, %16, %cst_32 {dimension_numbers = #tpu.dot_dimension_numbers<[1], [0], [0], [1], [0, 0, 1, 1], [], []>} : vector<8x32xbf16>, vector<32x32xbf16>, vector<8x32xf32> -> vector<8x32xf32>
    %109 = vector.broadcast %17 : vector<1x32xf32> to vector<8x32xf32>
    %110 = arith.addf %108, %109 : vector<8x32xf32>
    %c0_33 = arith.constant 0 : index
    %c0_34 = arith.constant 0 : index
    %111 = vector.load %arg6[%c0_33, %c0_34] : memref<1x32xf32, #tpu.memory_space<vmem>>, vector<1x32xf32>
    %c0_35 = arith.constant 0 : index
    %c0_36 = arith.constant 0 : index
    %112 = vector.load %arg7[%c0_35, %c0_36] : memref<1x32xf32, #tpu.memory_space<vmem>>, vector<1x32xf32>
    %113 = arith.addf %1, %110 : vector<8x32xf32>
    %cst_37 = arith.constant dense<0.000000e+00> : vector<8xf32>
    %114 = vector.multi_reduction <add>, %113, %cst_37 [1] : vector<8x32xf32> to vector<8xf32>
    %115 = vector.shape_cast %114 : vector<8xf32> to vector<8x1xf32>
    %cst_38 = arith.constant 3.200000e+01 : f32
    %116 = vector.broadcast %cst_38 : f32 to vector<8x1xf32>
    %117 = arith.divf %115, %116 : vector<8x1xf32>
    %118 = vector.broadcast %117 : vector<8x1xf32> to vector<8x32xf32>
    %119 = arith.subf %113, %118 : vector<8x32xf32>
    %120 = arith.mulf %119, %119 : vector<8x32xf32>
    %cst_39 = arith.constant dense<0.000000e+00> : vector<8xf32>
    %121 = vector.multi_reduction <add>, %120, %cst_39 [1] : vector<8x32xf32> to vector<8xf32>
    %122 = vector.shape_cast %121 : vector<8xf32> to vector<8x1xf32>
    %cst_40 = arith.constant 3.200000e+01 : f32
    %123 = vector.broadcast %cst_40 : f32 to vector<8x1xf32>
    %124 = arith.divf %122, %123 : vector<8x1xf32>
    %cst_41 = arith.constant 9.99999974E-6 : f32
    %125 = vector.broadcast %cst_41 : f32 to vector<8x1xf32>
    %126 = arith.addf %124, %125 : vector<8x1xf32>
    %127 = math.rsqrt %126 : vector<8x1xf32>
    %128 = vector.broadcast %127 : vector<8x1xf32> to vector<8x32xf32>
    %129 = arith.mulf %119, %128 : vector<8x32xf32>
    %130 = vector.broadcast %111 : vector<1x32xf32> to vector<8x32xf32>
    %131 = arith.mulf %129, %130 : vector<8x32xf32>
    %132 = vector.broadcast %112 : vector<1x32xf32> to vector<8x32xf32>
    %133 = arith.addf %131, %132 : vector<8x32xf32>
    %c0_42 = arith.constant 0 : index
    %c0_43 = arith.constant 0 : index
    %c0_44 = arith.constant 0 : index
    %134 = vector.load %arg8[%c0_42, %c0_43, %c0_44] : memref<1x8x32xf32, #tpu.memory_space<vmem>>, vector<1x8x32xf32>
    %135 = vector.shape_cast %134 : vector<1x8x32xf32> to vector<8x32xf32>
    %136 = vector.shape_cast %133 : vector<8x32xf32> to vector<1x8x32xf32>
    tpu.vector_store %arg8[%c0_42, %c0_43, %c0_44], %136 {strides = array<i32>} : memref<1x8x32xf32, #tpu.memory_space<vmem>>, vector<1x8x32xf32>,
    return
  }
  func.func @transform_0(%arg0: i32) -> (i32, i32, i32) {
    %c0_i32 = arith.constant 0 : i32
    %c0_i32_0 = arith.constant 0 : i32
    %c0_i32_1 = arith.constant 0 : i32
    return %arg0, %c0_i32, %c0_i32_0 : i32, i32, i32
  }
  func.func @transform_1(%arg0: i32) -> (i32, i32) {
    %c0_i32 = arith.constant 0 : i32
    %c0_i32_0 = arith.constant 0 : i32
    %c0_i32_1 = arith.constant 0 : i32
    return %c0_i32, %c0_i32_0 : i32, i32
  }
  func.func @transform_2(%arg0: i32) -> (i32, i32) {
    %c0_i32 = arith.constant 0 : i32
    %c0_i32_0 = arith.constant 0 : i32
    %c0_i32_1 = arith.constant 0 : i32
    return %c0_i32, %c0_i32_0 : i32, i32
  }
  func.func @transform_3(%arg0: i32) -> (i32, i32) {
    %c0_i32 = arith.constant 0 : i32
    %c0_i32_0 = arith.constant 0 : i32
    %c0_i32_1 = arith.constant 0 : i32
    return %c0_i32, %c0_i32_0 : i32, i32
  }
  func.func @transform_4(%arg0: i32) -> (i32, i32) {
    %c0_i32 = arith.constant 0 : i32
    %c0_i32_0 = arith.constant 0 : i32
    %c0_i32_1 = arith.constant 0 : i32
    return %c0_i32, %c0_i32_0 : i32, i32
  }
  func.func @transform_5(%arg0: i32) -> (i32, i32) {
    %c0_i32 = arith.constant 0 : i32
    %c0_i32_0 = arith.constant 0 : i32
    %c0_i32_1 = arith.constant 0 : i32
    return %c0_i32, %c0_i32_0 : i32, i32
  }
  func.func @transform_6(%arg0: i32) -> (i32, i32) {
    %c0_i32 = arith.constant 0 : i32
    %c0_i32_0 = arith.constant 0 : i32
    %c0_i32_1 = arith.constant 0 : i32
    return %c0_i32, %c0_i32_0 : i32, i32
  }
  func.func @transform_7(%arg0: i32) -> (i32, i32, i32) {
    %c0_i32 = arith.constant 0 : i32
    %c0_i32_0 = arith.constant 0 : i32
    %c0_i32_1 = arith.constant 0 : i32
    return %arg0, %c0_i32, %c0_i32_0 : i32, i32, i32
  }
}

</mosaic_0001>

<llo_original>
// kernel: decoder_layer.5
$region0: #{decoder_layer.5}
  #allocation0 [shape = 'u32[]', space=smem, size = 0x4, offset = 0x4, fixed_abs, tag = 'smem constant byte address 0x4 - core index']
  #allocation1 [shape = 'u32[144,128]{1,0:T(1,128)}', space=vmem, size = 0x12000, scoped, tag = 'internal scratch']
  %s0 = inlined_call_operand.vmem [shape: f32[16,32], index: 0, kind: input, shape index: {}]
  %s1 = inlined_call_operand.vmem [shape: bf16[32,64], index: 1, kind: input, shape index: {}]
  %s2 = inlined_call_operand.vmem [shape: f32[1,64], index: 2, kind: input, shape index: {}]
  %s3 = inlined_call_operand.vmem [shape: bf16[64,32], index: 3, kind: input, shape index: {}]
  %s4 = inlined_call_operand.vmem [shape: f32[1,32], index: 4, kind: input, shape index: {}]
  %s5 = inlined_call_operand.vmem [shape: f32[1,32], index: 5, kind: input, shape index: {}]
  %s6 = inlined_call_operand.vmem [shape: f32[1,32], index: 6, kind: input, shape index: {}]
  %s7 = inlined_call_operand.hbm [shape: f32[16,32], index: 7, kind: output, shape index: {}]
  %s8 = sld [smem:[#allocation0]]
  $region38: #{decoder_layer.5} parent=0
    _
  %s10 = ssub.s32 1, %s8
  %s11 = scalar_select 0, %s10, %s8
  $region1: #{decoder_layer.5} parent=0
    #allocation2 [shape = 'u8[8192]{0}', space=vmem, size = 0x2000, scoped, tag = 'output window, operand 0, single buffered']
    #allocation3 [shape = 's32[1]{0}', space=sflag, size = 0x4, scoped, tag = 'scoped memory for decoder_layer.5']
    %12 = vsyncpa [#allocation3], 0
    // Predicated region
    $region2: #{decoder_layer.5} parent=1 // pred_check
      _
    $region3: #{decoder_layer.5} parent=1 // pred_check_branch
      %14 = sbr.rel (0) target = $region5
    $region4: #{decoder_layer.5} parent=1 // pred_region
      _
    $region5: #{decoder_layer.5} parent=1 // pred_fallthru
      _
    // Predicated region
    $region6: #{decoder_layer.5} parent=1 // pred_check
      _
    $region7: #{decoder_layer.5} parent=1 // pred_check_branch
      %16 = sbr.rel (0) target = $region9
    $region8: #{decoder_layer.5} parent=1 // pred_region
      _
    $region9: #{decoder_layer.5} parent=1 // pred_fallthru
      _
    // Predicated region
    $region10: #{decoder_layer.5} parent=1 // pred_check
      _
    $region11: #{decoder_layer.5} parent=1 // pred_check_branch
      %18 = sbr.rel (0) target = $region13
    $region12: #{decoder_layer.5} parent=1 // pred_region
      _
    $region13: #{decoder_layer.5} parent=1 // pred_fallthru
      _
    // Predicated region
    $region14: #{decoder_layer.5} parent=1 // pred_check
      _
    $region15: #{decoder_layer.5} parent=1 // pred_check_branch
      %20 = sbr.rel (0) target = $region17
    $region16: #{decoder_layer.5} parent=1 // pred_region
      _
    $region17: #{decoder_layer.5} parent=1 // pred_fallthru
      _
    // Predicated region
    $region18: #{decoder_layer.5} parent=1 // pred_check
      _
    $region19: #{decoder_layer.5} parent=1 // pred_check_branch
      %22 = sbr.rel (0) target = $region21
    $region20: #{decoder_layer.5} parent=1 // pred_region
      _
    $region21: #{decoder_layer.5} parent=1 // pred_fallthru
      _
    // Predicated region
    $region22: #{decoder_layer.5} parent=1 // pred_check
      _
    $region23: #{decoder_layer.5} parent=1 // pred_check_branch
      %24 = sbr.rel (0) target = $region25
    $region24: #{decoder_layer.5} parent=1 // pred_region
      _
    $region25: #{decoder_layer.5} parent=1 // pred_fallthru
      _
    // Predicated region
    $region26: #{decoder_layer.5} parent=1 // pred_check
      _
    $region27: #{decoder_layer.5} parent=1 // pred_check_branch
      %26 = sbr.rel (0) target = $region29
    $region28: #{decoder_layer.5} parent=1 // pred_region
      _
    $region29: #{decoder_layer.5} parent=1 // pred_fallthru
      _
    %v28 = vld [vmem:[%s0] sm:$0xff]
    %v29 = vld [vmem:[%s0 + $0x8] sm:$0xff]
    %v30 = vld [vmem:[%s1] sm:$0xf]
    %v31 = vld [vmem:[%s1 + $0x4] sm:$0xf]
    %v32 = vld [vmem:[%s1 + $0x8] sm:$0xf]
    %v33 = vld [vmem:[%s1 + $0xc] sm:$0xf]
    %v34 = vpack.c.bf16 %v29, %v28
    %v35 = vld [vmem:[%s2] sm:$0x1]
    %v37 = vlaneseq
    %v38 = vshrl.u32 %v37, 7
    %v39 = vsub.s32 0, %v38
    %v40 = vrot.slane %v35, %v39
    %v46 = vunpack.c.l.b16 %v30
    %v47 = vunpack.c.l.b16 %v31
    %v48 = vunpack.c.l.b16 %v32
    %v49 = vunpack.c.l.b16 %v33
    %v50 = vpack.c.b16 %v47, %v46
    %v51 = vpack.c.b16 %v49, %v48
    %vm54 = vcmask 261120
    %v56 = vsel %vm54, %v34, 0
    %58 = vmatprep.subr.bf16.mxu0 0
    %59 = vmatpush1.bf16.msra.mxu0 %v50
    %60 = vmatprep.subr.bf16.mxu0 0
    %61 = vmatpush1.bf16.msra.mxu0 %v51
    %62 = vmatprep.subr.bf16.mxu0 0
    %63 = vmatpush1.bf16.msra.mxu0 0
    %64 = vmatprep.subr.bf16.mxu0 0
    %65 = vmatpush1.bf16.msra.mxu0 0
    %66 = vmatprep.subr.bf16.mxu0 0
    %67 = vmatpush1.bf16.msra.mxu0 0
    %68 = vmatprep.subr.bf16.mxu0 0
    %69 = vmatpush1.bf16.msra.mxu0 0
    %70 = vmatprep.subr.bf16.mxu0 0
    %71 = vmatpush1.bf16.msra.mxu0 0
    %72 = vmatprep.subr.bf16.mxu0 0
    %73 = vmatpush1.bf16.msra.mxu0 0
    %74 = vmatprep.subr.bf16.mxu0 0
    %75 = vmatpush1.bf16.msra.mxu0 0
    %76 = vmatprep.subr.bf16.mxu0 0
    %77 = vmatpush1.bf16.msra.mxu0 0
    %78 = vmatprep.subr.bf16.mxu0 0
    %79 = vmatpush1.bf16.msra.mxu0 0
    %80 = vmatprep.subr.bf16.mxu0 0
    %81 = vmatpush1.bf16.msra.mxu0 0
    %82 = vmatprep.subr.bf16.mxu0 0
    %83 = vmatpush1.bf16.msra.mxu0 0
    %84 = vmatprep.subr.bf16.mxu0 0
    %85 = vmatpush1.bf16.msra.mxu0 0
    %86 = vmatprep.subr.bf16.mxu0 0
    %87 = vmatpush1.bf16.msra.mxu0 0
    %88 = vmatprep.subr.bf16.mxu0 0
    %89 = vmatpush1.bf16.msra.mxu0 0
    %90 = vmatprep.mubr.bf16.mxu0 0
    %91 = vmatmul.mubr.bf16.gmra.mrb[0].mxu0 %v56
    %v92 = vpop.f32.mrb[0].mxu0
    %v93 = vadd.f32 %v40, %v92
    %v94 = vpop.f32.mrb[0].mxu0
    %v95 = vpop.f32.mrb[0].mxu0
    %v96 = vadd.f32 %v40, %v95
    %v97 = vpop.f32.mrb[0].mxu0
    %98 = vdwg.mxu0
    %v99 = vmax.f32 %v93, 0.0
    %v100 = vmax.f32 %v96, 0.0
    %v101 = vld [vmem:[%s3] sm:$0xf]
    %v102 = vld [vmem:[%s3 + $0x4] sm:$0xf]
    %v103 = vld [vmem:[%s3 + $0x8] sm:$0xf]
    %v104 = vld [vmem:[%s3 + $0xc] sm:$0xf]
    %v105 = vld [vmem:[%s3 + $0x10] sm:$0xf]
    %v106 = vld [vmem:[%s3 + $0x14] sm:$0xf]
    %v107 = vld [vmem:[%s3 + $0x18] sm:$0xf]
    %v108 = vld [vmem:[%s3 + $0x1c] sm:$0xf]
    %v109 = vpack.c.bf16 %v100, %v99
    %v110 = vld [vmem:[%s4] sm:$0x1]
    %v112 = vlaneseq
    %v113 = vshrl.u32 %v112, 7
    %v114 = vsub.s32 0, %v113
    %v115 = vrot.slane %v110, %v114
    %v125 = vunpack.c.l.b16 %v101
    %v126 = vunpack.c.l.b16 %v102
    %v127 = vunpack.c.l.b16 %v103
    %v128 = vunpack.c.l.b16 %v104
    %v129 = vunpack.c.l.b16 %v105
    %v130 = vunpack.c.l.b16 %v106
    %v131 = vunpack.c.l.b16 %v107
    %v132 = vunpack.c.l.b16 %v108
    %v133 = vpack.c.b16 %v126, %v125
    %v134 = vpack.c.b16 %v128, %v127
    %v135 = vpack.c.b16 %v130, %v129
    %v136 = vpack.c.b16 %v132, %v131
    %vm141 = vcmask 523264
    %v143 = vsel %vm141, %v109, 0
    %145 = vmatprep.subr.bf16.mxu0 0
    %146 = vmatpush1.bf16.msra.mxu0 %v133
    %147 = vmatprep.subr.bf16.mxu0 0
    %148 = vmatpush1.bf16.msra.mxu0 %v134
    %149 = vmatprep.subr.bf16.mxu0 0
    %150 = vmatpush1.bf16.msra.mxu0 %v135
    %151 = vmatprep.subr.bf16.mxu0 0
    %152 = vmatpush1.bf16.msra.mxu0 %v136
    %153 = vmatprep.subr.bf16.mxu0 0
    %154 = vmatpush1.bf16.msra.mxu0 0
    %155 = vmatprep.subr.bf16.mxu0 0
    %156 = vmatpush1.bf16.msra.mxu0 0
    %157 = vmatprep.subr.bf16.mxu0 0
    %158 = vmatpush1.bf16.msra.mxu0 0
    %159 = vmatprep.subr.bf16.mxu0 0
    %160 = vmatpush1.bf16.msra.mxu0 0
    %161 = vmatprep.subr.bf16.mxu0 0
    %162 = vmatpush1.bf16.msra.mxu0 0
    %163 = vmatprep.subr.bf16.mxu0 0
    %164 = vmatpush1.bf16.msra.mxu0 0
    %165 = vmatprep.subr.bf16.mxu0 0
    %166 = vmatpush1.bf16.msra.mxu0 0
    %167 = vmatprep.subr.bf16.mxu0 0
    %168 = vmatpush1.bf16.msra.mxu0 0
    %169 = vmatprep.subr.bf16.mxu0 0
    %170 = vmatpush1.bf16.msra.mxu0 0
    %171 = vmatprep.subr.bf16.mxu0 0
    %172 = vmatpush1.bf16.msra.mxu0 0
    %173 = vmatprep.subr.bf16.mxu0 0
    %174 = vmatpush1.bf16.msra.mxu0 0
    %175 = vmatprep.subr.bf16.mxu0 0
    %176 = vmatpush1.bf16.msra.mxu0 0
    %177 = vmatprep.mubr.bf16.mxu0 0
    %178 = vmatmul.mubr.bf16.gmra.mrb[0].mxu0 %v143
    %v179 = vpop.f32.mrb[0].mxu0
    %v180 = vadd.f32 %v115, %v179
    %v181 = vpop.f32.mrb[0].mxu0
    %v182 = vpop.f32.mrb[0].mxu0
    %v183 = vadd.f32 %v115, %v182
    %v184 = vpop.f32.mrb[0].mxu0
    %185 = vdwg.mxu0
    %v186 = vld [vmem:[%s5] sm:$0x1]
    %v187 = vld [vmem:[%s6] sm:$0x1]
    %v188 = vadd.f32 %v28, %v180
    %v189 = vadd.f32 %v29, %v183
    %v190 = vsel %vm54, %v188, 0.0
    %191 = vadd.xlane.f32.xlu0 %v190
    %v192 = vpop.xlane.xlu0 %191
    %v193 = vsel %vm54, %v189, 0.0
    %194 = vadd.xlane.f32.xlu0 %v193
    %v195 = vpop.xlane.xlu0 %194
    %v196 = vrcp.pop 32.0
    %v197 = vmul.f32 %v192, %v196
    %v198 = vmul.f32 %v195, %v196
    %v199 = vsub.f32 %v188, %v197
    %v200 = vsub.f32 %v189, %v198
    %v201 = vmul.f32 %v199, %v199
    %v202 = vmul.f32 %v200, %v200
    %v203 = vsel %vm54, %v201, 0.0
    %204 = vadd.xlane.f32.xlu0 %v203
    %v205 = vpop.xlane.xlu0 %204
    %v206 = vsel %vm54, %v202, 0.0
    %207 = vadd.xlane.f32.xlu0 %v206
    %v208 = vpop.xlane.xlu0 %207
    %v209 = vmul.f32 %v205, %v196
    %v210 = vmul.f32 %v208, %v196
    %v211 = vadd.f32 %v209, 1e-05
    %v212 = vadd.f32 %v210, 1e-05
    %v213 = vrsqrt.pop %v211
    %v214 = vrsqrt.pop %v212
    %v215 = vmul.f32 %v199, %v213
    %v216 = vmul.f32 %v200, %v214
    %v218 = vlaneseq
    %v219 = vshrl.u32 %v218, 7
    %v220 = vsub.s32 0, %v219
    %v221 = vrot.slane %v186, %v220
    %v223 = vmul.f32 %v215, %v221
    %v224 = vmul.f32 %v216, %v221
    %v226 = vlaneseq
    %v227 = vshrl.u32 %v226, 7
    %v228 = vsub.s32 0, %v227
    %v229 = vrot.slane %v187, %v228
    %v231 = vadd.f32 %v223, %v229
    %v232 = vadd.f32 %v224, %v229
    %233 = vst.msk [vmem:[#allocation2] sm:$0xff] %vm54, %v231
    %234 = vst.msk [vmem:[#allocation2 + $0x8] sm:$0xff] %vm54, %v232
    // Predicated region
    $region30: #{decoder_layer.5} parent=1 // pred_check
      _
    $region31: #{decoder_layer.5} parent=1 // pred_check_branch
      %236 = sbr.rel (0) target = $region33
    $region32: #{decoder_layer.5} parent=1 // pred_region
      %s238 = ssub.s32 256, 256
      %239 = vsyncadd [#allocation3], %s238
      %s240 = sshll.u32 [#allocation2], 4
      %s241 = int_to_ptr.vmem [resolvable:$true] %s240
      %246 = dma.vmem_to_hbm [thread:$0]  %s241, 256, %s7, [#allocation3], 128, 128, 8
    $region33: #{decoder_layer.5} parent=1 // pred_fallthru
      _
    // Predicated region
    $region34: #{decoder_layer.5} parent=1 // pred_check
      _
    $region35: #{decoder_layer.5} parent=1 // pred_check_branch
      %248 = sbr.rel (0) target = $region37
    $region36: #{decoder_layer.5} parent=1 // pred_region
      %249 = dma.done [#allocation3], 256
    $region37: #{decoder_layer.5} parent=1 // pred_fallthru
      _
    %250 = vsyncpa [#allocation3], 1

// kernel: decoder_layer.3
$region0: #{decoder_layer.3}
  #allocation0 [shape = 'u32[]', space=smem, size = 0x4, offset = 0x4, fixed_abs, tag = 'smem constant byte address 0x4 - core index']
  #allocation1 [shape = 'u32[144,128]{1,0:T(1,128)}', space=vmem, size = 0x12000, scoped, tag = 'internal scratch']
  %s0 = inlined_call_operand.hbm [shape: f32[2,8,32], index: 0, kind: input, shape index: {}]
  %s1 = inlined_call_operand.vmem [shape: bf16[32,96], index: 1, kind: input, shape index: {}]
  %s2 = inlined_call_operand.vmem [shape: f32[1,96], index: 2, kind: input, shape index: {}]
  %s3 = inlined_call_operand.vmem [shape: bf16[32,32], index: 3, kind: input, shape index: {}]
  %s4 = inlined_call_operand.vmem [shape: f32[1,32], index: 4, kind: input, shape index: {}]
  %s5 = inlined_call_operand.vmem [shape: f32[1,32], index: 5, kind: input, shape index: {}]
  %s6 = inlined_call_operand.vmem [shape: f32[1,32], index: 6, kind: input, shape index: {}]
  %s7 = inlined_call_operand.vmem [shape: f32[2,8,32], index: 7, kind: output, shape index: {}]
  %s8 = sld [smem:[#allocation0]]
  $region65: #{decoder_layer.3} parent=0
    _
  %s10 = ssub.s32 1, %s8
  %s11 = scalar_select 0, %s10, %s8
  $region1: #{decoder_layer.3} parent=0
    #allocation2 [shape = 'u8[8192]{0}', space=vmem, size = 0x2000, scoped, tag = 'input window, operand 0']
    #allocation3 [shape = 's32[2]{0}', space=sflag, size = 0x8, scoped, tag = 'scoped memory for decoder_layer.3']
    %12 = vsyncpa [#allocation3], 0
    %s13 = scalar_lea.sflag [#allocation3], 1
    %14 = vsyncpa %s13, 0
    loop: start=0, step=1, limit=4
    $region2: #{decoder_layer.3} parent=1 // loop_pre_header
      _
    $region3: #{decoder_layer.3} parent=1 // loop_header
      %s16 = sphi 0, %s20
      %p17 = scmp.ge.s32.totalorder %s16, 4
      %s26 = sphi 0, %s28
      %s29 = sphi 0, %s26
      %s30 = sphi 0, %s29
      %s46 = sphi 0, %s30
      %s50 = sphi 0, %s50
      %s52 = sphi 0, %s50
      %s53 = sphi 0, %s52
      %s67 = sphi 0, %s53
      %s71 = sphi 0, %s71
      %s73 = sphi 0, %s71
      %s74 = sphi 0, %s73
      %s88 = sphi 0, %s74
      %s92 = sphi 0, %s92
      %s94 = sphi 0, %s92
      %s95 = sphi 0, %s94
      %s109 = sphi 0, %s95
      %s113 = sphi 0, %s113
      %s115 = sphi 0, %s113
      %s116 = sphi 0, %s115
      %s130 = sphi 0, %s116
      %s134 = sphi 0, %s134
      %s136 = sphi 0, %s134
      %s137 = sphi 0, %s136
      %s151 = sphi 0, %s137
      %s155 = sphi 0, %s155
      %s157 = sphi 0, %s155
      %s158 = sphi 0, %s157
      %s172 = sphi 0, %s158
      %s178 = sphi 0, %s180
      %s181 = sphi 0, %s178
      %s182 = sphi 0, %s181
      %s198 = sphi 0, %s182
    $region4: #{decoder_layer.3} parent=1 // loop_header_branch
      %19 = sbr.rel (%p17) target = $region8
    $region5: #{decoder_layer.3} parent=1 // loop_body
      %s21 = ssub.s32 %s16, 1
      %s22 = ssub.s32 %s16, 2
      %s23 = sadd.s32 %s16, 1
      %s24 = ssub.s32 %s16, %s23
      %p25 = scmp.eq.s32.totalorder %s24, 0
      %s27 = sadd.s32 %s26, 1
      %s28 = scalar_select %p25, %s26, %s27
      %p31 = pneg %p25
      %p32 = scmp.eq.s32.totalorder %s16, 1
      %p33 = por %p31, %p32
      %p34 = scmp.ne.s32.totalorder %s26, %s29
      %p35 = scmp.eq.s32.totalorder %s16, 0
      %p36 = por %p34, %p35
      %p37 = scmp.ne.s32.totalorder %s26, %s29
      %p38 = scmp.eq.s32.totalorder %s21, 1
      %p39 = por %p37, %p38
      %p40 = scmp.ne.s32.totalorder %s29, %s30
      %p41 = scmp.eq.s32.totalorder %s21, 0
      %p42 = por %p40, %p41
      %p43 = scmp.ne.s32.totalorder %s29, %s30
      %p44 = scmp.eq.s32.totalorder %s22, 1
      %p45 = por %p43, %p44
      %p47 = scmp.ne.s32.totalorder %s30, %s46
      %p48 = scmp.eq.s32.totalorder %s22, 0
      %p49 = por %p47, %p48
      %s51 = sadd.s32 %s50, 1
      %p54 = scmp.eq.s32.totalorder %s16, 1
      %p55 = scmp.ne.s32.totalorder %s50, %s52
      %p56 = scmp.eq.s32.totalorder %s16, 0
      %p57 = por %p55, %p56
      %p58 = scmp.ne.s32.totalorder %s50, %s52
      %p59 = scmp.eq.s32.totalorder %s21, 1
      %p60 = por %p58, %p59
      %p61 = scmp.ne.s32.totalorder %s52, %s53
      %p62 = scmp.eq.s32.totalorder %s21, 0
      %p63 = por %p61, %p62
      %p64 = scmp.ne.s32.totalorder %s52, %s53
      %p65 = scmp.eq.s32.totalorder %s22, 1
      %p66 = por %p64, %p65
      %p68 = scmp.ne.s32.totalorder %s53, %s67
      %p69 = scmp.eq.s32.totalorder %s22, 0
      %p70 = por %p68, %p69
      %s72 = sadd.s32 %s71, 1
      %p75 = scmp.eq.s32.totalorder %s16, 1
      %p76 = scmp.ne.s32.totalorder %s71, %s73
      %p77 = scmp.eq.s32.totalorder %s16, 0
      %p78 = por %p76, %p77
      %p79 = scmp.ne.s32.totalorder %s71, %s73
      %p80 = scmp.eq.s32.totalorder %s21, 1
      %p81 = por %p79, %p80
      %p82 = scmp.ne.s32.totalorder %s73, %s74
      %p83 = scmp.eq.s32.totalorder %s21, 0
      %p84 = por %p82, %p83
      %p85 = scmp.ne.s32.totalorder %s73, %s74
      %p86 = scmp.eq.s32.totalorder %s22, 1
      %p87 = por %p85, %p86
      %p89 = scmp.ne.s32.totalorder %s74, %s88
      %p90 = scmp.eq.s32.totalorder %s22, 0
      %p91 = por %p89, %p90
      %s93 = sadd.s32 %s92, 1
      %p96 = scmp.eq.s32.totalorder %s16, 1
      %p97 = scmp.ne.s32.totalorder %s92, %s94
      %p98 = scmp.eq.s32.totalorder %s16, 0
      %p99 = por %p97, %p98
      %p100 = scmp.ne.s32.totalorder %s92, %s94
      %p101 = scmp.eq.s32.totalorder %s21, 1
      %p102 = por %p100, %p101
      %p103 = scmp.ne.s32.totalorder %s94, %s95
      %p104 = scmp.eq.s32.totalorder %s21, 0
      %p105 = por %p103, %p104
      %p106 = scmp.ne.s32.totalorder %s94, %s95
      %p107 = scmp.eq.s32.totalorder %s22, 1
      %p108 = por %p106, %p107
      %p110 = scmp.ne.s32.totalorder %s95, %s109
      %p111 = scmp.eq.s32.totalorder %s22, 0
      %p112 = por %p110, %p111
      %s114 = sadd.s32 %s113, 1
      %p117 = scmp.eq.s32.totalorder %s16, 1
      %p118 = scmp.ne.s32.totalorder %s113, %s115
      %p119 = scmp.eq.s32.totalorder %s16, 0
      %p120 = por %p118, %p119
      %p121 = scmp.ne.s32.totalorder %s113, %s115
      %p122 = scmp.eq.s32.totalorder %s21, 1
      %p123 = por %p121, %p122
      %p124 = scmp.ne.s32.totalorder %s115, %s116
      %p125 = scmp.eq.s32.totalorder %s21, 0
      %p126 = por %p124, %p125
      %p127 = scmp.ne.s32.totalorder %s115, %s116
      %p128 = scmp.eq.s32.totalorder %s22, 1
      %p129 = por %p127, %p128
      %p131 = scmp.ne.s32.totalorder %s116, %s130
      %p132 = scmp.eq.s32.totalorder %s22, 0
      %p133 = por %p131, %p132
      %s135 = sadd.s32 %s134, 1
      %p138 = scmp.eq.s32.totalorder %s16, 1
      %p139 = scmp.ne.s32.totalorder %s134, %s136
      %p140 = scmp.eq.s32.totalorder %s16, 0
      %p141 = por %p139, %p140
      %p142 = scmp.ne.s32.totalorder %s134, %s136
      %p143 = scmp.eq.s32.totalorder %s21, 1
      %p144 = por %p142, %p143
      %p145 = scmp.ne.s32.totalorder %s136, %s137
      %p146 = scmp.eq.s32.totalorder %s21, 0
      %p147 = por %p145, %p146
      %p148 = scmp.ne.s32.totalorder %s136, %s137
      %p149 = scmp.eq.s32.totalorder %s22, 1
      %p150 = por %p148, %p149
      %p152 = scmp.ne.s32.totalorder %s137, %s151
      %p153 = scmp.eq.s32.totalorder %s22, 0
      %p154 = por %p152, %p153
      %s156 = sadd.s32 %s155, 1
      %p159 = scmp.eq.s32.totalorder %s16, 1
      %p160 = scmp.ne.s32.totalorder %s155, %s157
      %p161 = scmp.eq.s32.totalorder %s16, 0
      %p162 = por %p160, %p161
      %p163 = scmp.ne.s32.totalorder %s155, %s157
      %p164 = scmp.eq.s32.totalorder %s21, 1
      %p165 = por %p163, %p164
      %p166 = scmp.ne.s32.totalorder %s157, %s158
      %p167 = scmp.eq.s32.totalorder %s21, 0
      %p168 = por %p166, %p167
      %p169 = scmp.ne.s32.totalorder %s157, %s158
      %p170 = scmp.eq.s32.totalorder %s22, 1
      %p171 = por %p169, %p170
      %p173 = scmp.ne.s32.totalorder %s158, %s172
      %p174 = scmp.eq.s32.totalorder %s22, 0
      %p175 = por %p173, %p174
      %s176 = ssub.s32 %s16, %s23
      %p177 = scmp.eq.s32.totalorder %s176, 0
      %s179 = sadd.s32 %s178, 1
      %s180 = scalar_select %p177, %s178, %s179
      %p183 = pneg %p177
      %p184 = scmp.eq.s32.totalorder %s16, 1
      %p185 = por %p183, %p184
      %p186 = scmp.ne.s32.totalorder %s178, %s181
      %p187 = scmp.eq.s32.totalorder %s16, 0
      %p188 = por %p186, %p187
      %p189 = scmp.ne.s32.totalorder %s178, %s181
      %p190 = scmp.eq.s32.totalorder %s21, 1
      %p191 = por %p189, %p190
      %p192 = scmp.ne.s32.totalorder %s181, %s182
      %p193 = scmp.eq.s32.totalorder %s21, 0
      %p194 = por %p192, %p193
      %p195 = scmp.ne.s32.totalorder %s181, %s182
      %p196 = scmp.eq.s32.totalorder %s22, 1
      %p197 = por %p195, %p196
      %p199 = scmp.ne.s32.totalorder %s182, %s198
      %p200 = scmp.eq.s32.totalorder %s22, 0
      %p201 = por %p199, %p200
      %p202 = scmp.le.s32.totalorder 1, %s16
      %p203 = scmp.lt.s32.totalorder %s16, 3
      %p204 = pnand %p202, %p203
      %p205 = pneg %p204
      // Predicated region
      $region9: #{decoder_layer.3} parent=5 // pred_check
        _
      $region10: #{decoder_layer.3} parent=5 // pred_check_branch
        %207 = sbr.rel (%p204) target = $region12
      $region11: #{decoder_layer.3} parent=5 // pred_region
        %s208 = ssub.s32 %s16, 1
        // Predicated region
        $region13: #{decoder_layer.3} parent=11 // pred_check
          %p209 = pneg %p63
        $region14: #{decoder_layer.3} parent=11 // pred_check_branch
          %211 = sbr.rel (%p209) target = $region16
        $region15: #{decoder_layer.3} parent=11 // pred_region
          _
        $region16: #{decoder_layer.3} parent=11 // pred_fallthru
          _
        // Predicated region
        $region17: #{decoder_layer.3} parent=11 // pred_check
          %p212 = pneg %p84
        $region18: #{decoder_layer.3} parent=11 // pred_check_branch
          %214 = sbr.rel (%p212) target = $region20
        $region19: #{decoder_layer.3} parent=11 // pred_region
          _
        $region20: #{decoder_layer.3} parent=11 // pred_fallthru
          _
        // Predicated region
        $region21: #{decoder_layer.3} parent=11 // pred_check
          %p215 = pneg %p105
        $region22: #{decoder_layer.3} parent=11 // pred_check_branch
          %217 = sbr.rel (%p215) target = $region24
        $region23: #{decoder_layer.3} parent=11 // pred_region
          _
        $region24: #{decoder_layer.3} parent=11 // pred_fallthru
          _
        // Predicated region
        $region25: #{decoder_layer.3} parent=11 // pred_check
          %p218 = pneg %p126
        $region26: #{decoder_layer.3} parent=11 // pred_check_branch
          %220 = sbr.rel (%p218) target = $region28
        $region27: #{decoder_layer.3} parent=11 // pred_region
          _
        $region28: #{decoder_layer.3} parent=11 // pred_fallthru
          _
        // Predicated region
        $region29: #{decoder_layer.3} parent=11 // pred_check
          %p221 = pneg %p147
        $region30: #{decoder_layer.3} parent=11 // pred_check_branch
          %223 = sbr.rel (%p221) target = $region32
        $region31: #{decoder_layer.3} parent=11 // pred_region
          _
        $region32: #{decoder_layer.3} parent=11 // pred_fallthru
          _
        // Predicated region
        $region33: #{decoder_layer.3} parent=11 // pred_check
          %p224 = pneg %p168
        $region34: #{decoder_layer.3} parent=11 // pred_check_branch
          %226 = sbr.rel (%p224) target = $region36
        $region35: #{decoder_layer.3} parent=11 // pred_region
          _
        $region36: #{decoder_layer.3} parent=11 // pred_fallthru
          _
      $region12: #{decoder_layer.3} parent=5 // pred_fallthru
        _
      %p227 = scmp.lt.s32.totalorder %s16, 2
      // Predicated region
      $region37: #{decoder_layer.3} parent=5 // pred_check
        %p228 = pneg %p227
      $region38: #{decoder_layer.3} parent=5 // pred_check_branch
        %230 = sbr.rel (%p228) target = $region40
      $region39: #{decoder_layer.3} parent=5 // pred_region
        // Predicated region
        $region41: #{decoder_layer.3} parent=39 // pred_check
          %p231 = pneg %p36
        $region42: #{decoder_layer.3} parent=39 // pred_check_branch
          %233 = sbr.rel (%p231) target = $region44
        $region43: #{decoder_layer.3} parent=39 // pred_region
          %s234 = sand.u32 %s26, 1
          %s235 = scalar_lea.sflag [#allocation3], %s234
          %s236 = sand.u32 %s26, 1
          %s237 = smul.addr %s236, 8
          %s238 = scalar_lea.vmem [#allocation2], %s237
          %s240 = ssub.s32 128, 128
          %241 = vsyncadd %s235, %s240
          %s242 = smul.addr %s16, 128
          %s243 = scalar_lea.hbm %s0, %s242
          %s245 = sshll.u32 %s238, 4
          %s246 = int_to_ptr.vmem [resolvable:$true] %s245
          %248 = dma.hbm_to_vmem [thread:$0]  %s243, 128, %s246, %s235
        $region44: #{decoder_layer.3} parent=39 // pred_fallthru
          _
      $region40: #{decoder_layer.3} parent=5 // pred_fallthru
        _
      %p249 = scmp.le.s32.totalorder 1, %s16
      %p250 = scmp.lt.s32.totalorder %s16, 3
      %p251 = pnand %p249, %p250
      %p252 = pneg %p251
      // Predicated region
      $region45: #{decoder_layer.3} parent=5 // pred_check
        _
      $region46: #{decoder_layer.3} parent=5 // pred_check_branch
        %254 = sbr.rel (%p251) target = $region48
      $region47: #{decoder_layer.3} parent=5 // pred_region
        %s255 = ssub.s32 %s16, 1
        %s256 = sand.u32 %s29, 1
        %s257 = scalar_lea.sflag [#allocation3], %s256
        %s258 = sand.u32 %s29, 1
        %s259 = smul.addr %s258, 8
        %s260 = scalar_lea.vmem [#allocation2], %s259
        // Predicated region
        $region49: #{decoder_layer.3} parent=47 // pred_check
          %p261 = pneg %p42
        $region50: #{decoder_layer.3} parent=47 // pred_check_branch
          %263 = sbr.rel (%p261) target = $region52
        $region51: #{decoder_layer.3} parent=47 // pred_region
          %264 = dma.done %s257, 128
        $region52: #{decoder_layer.3} parent=47 // pred_fallthru
          _
        %s265 = sand.u32 %s29, 1
        %s266 = scalar_lea.sflag [#allocation3], %s265
        %s267 = sand.u32 %s29, 1
        %s268 = smul.addr %s267, 8
        %s269 = scalar_lea.vmem [#allocation2], %s268
        %p270 = pneg %p42
        %p271 = pneg %p39
        %p272 = pneg %p63
        %p273 = pneg %p60
        %p274 = pneg %p84
        %p275 = pneg %p81
        %p276 = pneg %p105
        %p277 = pneg %p102
        %p278 = pneg %p126
        %p279 = pneg %p123
        %p280 = pneg %p147
        %p281 = pneg %p144
        %p282 = pneg %p168
        %p283 = pneg %p165
        %p284 = pneg %p194
        %p285 = pneg %p191
        %p286 = scmp.lt.s32.totalorder %s21, 1
        %s287 = scalar_select %p286, %s21, 1
        %s288 = smul.addr %s287, 8
        %s289 = scalar_lea.vmem %s7, %s288
        %p290 = scmp.lt.s32.totalorder %s21, 1
        %s291 = scalar_select %p290, %s21, 1
        %s292 = smul.addr %s291, 8
        %s293 = scalar_lea.vmem %s7, %s292
        %v295 = vld [vmem:[%s260] sm:$0xff]
        %v296 = vld [vmem:[%s1] sm:$0xf]
        %v297 = vld [vmem:[%s1 + $0x4] sm:$0xf]
        %v298 = vld [vmem:[%s1 + $0x8] sm:$0xf]
        %v299 = vld [vmem:[%s1 + $0xc] sm:$0xf]
        %v300 = vpack.c.bf16 %v295, %v295
        %v301 = vld [vmem:[%s2] sm:$0x1]
        %v303 = vlaneseq
        %v304 = vshrl.u32 %v303, 7
        %v305 = vsub.s32 0, %v304
        %v306 = vrot.slane %v301, %v305
        %v312 = vunpack.c.l.b16 %v296
        %v313 = vunpack.c.l.b16 %v297
        %v314 = vunpack.c.l.b16 %v298
        %v315 = vunpack.c.l.b16 %v299
        %v316 = vpack.c.b16 %v313, %v312
        %v317 = vpack.c.b16 %v315, %v314
        %vm320 = vcmask 261120
        %v322 = vsel %vm320, %v300, 0
        %324 = vmatprep.subr.bf16.mxu0 0
        %325 = vmatpush1.bf16.msra.mxu0 %v316
        %326 = vmatprep.subr.bf16.mxu0 0
        %327 = vmatpush1.bf16.msra.mxu0 %v317
        %328 = vmatprep.subr.bf16.mxu0 0
        %329 = vmatpush1.bf16.msra.mxu0 0
        %330 = vmatprep.subr.bf16.mxu0 0
        %331 = vmatpush1.bf16.msra.mxu0 0
        %332 = vmatprep.subr.bf16.mxu0 0
        %333 = vmatpush1.bf16.msra.mxu0 0
        %334 = vmatprep.subr.bf16.mxu0 0
        %335 = vmatpush1.bf16.msra.mxu0 0
        %336 = vmatprep.subr.bf16.mxu0 0
        %337 = vmatpush1.bf16.msra.mxu0 0
        %338 = vmatprep.subr.bf16.mxu0 0
        %339 = vmatpush1.bf16.msra.mxu0 0
        %340 = vmatprep.subr.bf16.mxu0 0
        %341 = vmatpush1.bf16.msra.mxu0 0
        %342 = vmatprep.subr.bf16.mxu0 0
        %343 = vmatpush1.bf16.msra.mxu0 0
        %344 = vmatprep.subr.bf16.mxu0 0
        %345 = vmatpush1.bf16.msra.mxu0 0
        %346 = vmatprep.subr.bf16.mxu0 0
        %347 = vmatpush1.bf16.msra.mxu0 0
        %348 = vmatprep.subr.bf16.mxu0 0
        %349 = vmatpush1.bf16.msra.mxu0 0
        %350 = vmatprep.subr.bf16.mxu0 0
        %351 = vmatpush1.bf16.msra.mxu0 0
        %352 = vmatprep.subr.bf16.mxu0 0
        %353 = vmatpush1.bf16.msra.mxu0 0
        %354 = vmatprep.subr.bf16.mxu0 0
        %355 = vmatpush1.bf16.msra.mxu0 0
        %356 = vmatprep.mubr.bf16.mxu0 0
        %357 = vmatmul.mubr.bf16.gmra.mrb[0].mxu0 %v322
        %v358 = vpop.f32.mrb[0].mxu0
        %v359 = vadd.f32 %v306, %v358
        %v360 = vpop.f32.mrb[0].mxu0
        %v361 = vpop.f32.mrb[0].mxu0
        %v362 = vpop.f32.mrb[0].mxu0
        %363 = vdwg.mxu0
        %v364 = vlaneseq
        %v365 = vshrl.u32 %v364, 7
        %v366 = vlaneseq
        %v367 = vand.u32 %v366, 127
        %vm368 = vcmp.le.s32.totalorder %v367, %v365
        %v369 = vsel %vm368, 0.0, -1e+09
        %v370 = vld [vmem:[%s3] sm:$0xf]
        %v371 = vld [vmem:[%s3 + $0x4] sm:$0xf]
        %v372 = vld [vmem:[%s3 + $0x8] sm:$0xf]
        %v373 = vld [vmem:[%s3 + $0xc] sm:$0xf]
        %v374 = vld [vmem:[%s4] sm:$0x1]
        %v375 = vpack.c.bf16 %v359, %v359
        %377 = vrot.lane.b32.xlu0 %v375, 96
        %v378 = vpop.permute.xlu0 %377
        %vm379 = vcmask 64512
        %v381 = vsel %vm379, %v375, 0
        %v384 = vsel %vm379, %v378, 0
        %386 = vmatprep.subr.bf16.mxu0 0
        %387 = vmatpush1.bf16.xpose.msra.mxu0 %v384
        %388 = vmatprep.subr.bf16.mxu0 0
        %389 = vmatpush1.bf16.xpose.msra.mxu0 0
        %390 = vmatprep.subr.bf16.mxu0 0
        %391 = vmatpush1.bf16.xpose.msra.mxu0 0
        %392 = vmatprep.subr.bf16.mxu0 0
        %393 = vmatpush1.bf16.xpose.msra.mxu0 0
        %394 = vmatprep.subr.bf16.mxu0 0
        %395 = vmatpush1.bf16.xpose.msra.mxu0 0
        %396 = vmatprep.subr.bf16.mxu0 0
        %397 = vmatpush1.bf16.xpose.msra.mxu0 0
        %398 = vmatprep.subr.bf16.mxu0 0
        %399 = vmatpush1.bf16.xpose.msra.mxu0 0
        %400 = vmatprep.subr.bf16.mxu0 0
        %401 = vmatpush1.bf16.xpose.msra.mxu0 0
        %402 = vmatprep.subr.bf16.mxu0 0
        %403 = vmatpush1.bf16.xpose.msra.mxu0 0
        %404 = vmatprep.subr.bf16.mxu0 0
        %405 = vmatpush1.bf16.xpose.msra.mxu0 0
        %406 = vmatprep.subr.bf16.mxu0 0
        %407 = vmatpush1.bf16.xpose.msra.mxu0 0
        %408 = vmatprep.subr.bf16.mxu0 0
        %409 = vmatpush1.bf16.xpose.msra.mxu0 0
        %410 = vmatprep.subr.bf16.mxu0 0
        %411 = vmatpush1.bf16.xpose.msra.mxu0 0
        %412 = vmatprep.subr.bf16.mxu0 0
        %413 = vmatpush1.bf16.xpose.msra.mxu0 0
        %414 = vmatprep.subr.bf16.mxu0 0
        %415 = vmatpush1.bf16.xpose.msra.mxu0 0
        %416 = vmatprep.subr.bf16.mxu0 0
        %417 = vmatpush1.bf16.xpose.msra.mxu0 0
        %418 = vmatprep.mubr.bf16.mxu0 0
        %419 = vmatmul.mubr.bf16.gmra.mrb[0].mxu0 %v381
        %v420 = vpop.f32.mrb[0].mxu0
        %v421 = vadd.f32 %v369, %v420
        %v422 = vpop.f32.mrb[0].mxu0
        %v423 = vpop.f32.mrb[0].mxu0
        %v424 = vpop.f32.mrb[0].mxu0
        %425 = vdwg.mxu0
        %v426 = vsel %vm379, %v421, -inf
        %427 = vmax.xlane.f32.xlu0 %v426
        %v428 = vpop.xlane.xlu0 %427
        %v429 = vsub.f32 %v421, %v428
        %v430 = vmul.f32 %v429, 1.442695
        %v431 = vpow.pop %v430
        %v432 = vsel %vm379, %v431, 0.0
        %433 = vadd.xlane.f32.xlu0 %v432
        %v434 = vpop.xlane.xlu0 %433
        %v435 = vmax.f32 %v434, 1e-30
        %v436 = vrcp.pop %v435
        %v437 = vpack.c.bf16 %v431, %v431
        %438 = vrot.lane.b32.xlu0 %v375, 64
        %v439 = vpop.permute.xlu0 %438
        %v441 = vsel %vm379, %v437, 0
        %vm443 = vcmask 1043456
        %v445 = vsel %vm443, %v439, 0
        %447 = vmatprep.subr.bf16.mxu0 0
        %448 = vmatpush1.bf16.msra.mxu0 %v445
        %449 = vmatprep.subr.bf16.mxu0 0
        %450 = vmatpush1.bf16.msra.mxu0 0
        %451 = vmatprep.subr.bf16.mxu0 0
        %452 = vmatpush1.bf16.msra.mxu0 0
        %453 = vmatprep.subr.bf16.mxu0 0
        %454 = vmatpush1.bf16.msra.mxu0 0
        %455 = vmatprep.subr.bf16.mxu0 0
        %456 = vmatpush1.bf16.msra.mxu0 0
        %457 = vmatprep.subr.bf16.mxu0 0
        %458 = vmatpush1.bf16.msra.mxu0 0
        %459 = vmatprep.subr.bf16.mxu0 0
        %460 = vmatpush1.bf16.msra.mxu0 0
        %461 = vmatprep.subr.bf16.mxu0 0
        %462 = vmatpush1.bf16.msra.mxu0 0
        %463 = vmatprep.subr.bf16.mxu0 0
        %464 = vmatpush1.bf16.msra.mxu0 0
        %465 = vmatprep.subr.bf16.mxu0 0
        %466 = vmatpush1.bf16.msra.mxu0 0
        %467 = vmatprep.subr.bf16.mxu0 0
        %468 = vmatpush1.bf16.msra.mxu0 0
        %469 = vmatprep.subr.bf16.mxu0 0
        %470 = vmatpush1.bf16.msra.mxu0 0
        %471 = vmatprep.subr.bf16.mxu0 0
        %472 = vmatpush1.bf16.msra.mxu0 0
        %473 = vmatprep.subr.bf16.mxu0 0
        %474 = vmatpush1.bf16.msra.mxu0 0
        %475 = vmatprep.subr.bf16.mxu0 0
        %476 = vmatpush1.bf16.msra.mxu0 0
        %477 = vmatprep.subr.bf16.mxu0 0
        %478 = vmatpush1.bf16.msra.mxu0 0
        %479 = vmatprep.mubr.bf16.mxu0 0
        %480 = vmatmul.mubr.bf16.gmra.mrb[0].mxu0 %v441
        %v481 = vpop.f32.mrb[0].mxu0
        %v482 = vadd.f32 0.0, %v481
        %v483 = vpop.f32.mrb[0].mxu0
        %v484 = vpop.f32.mrb[0].mxu0
        %v485 = vpop.f32.mrb[0].mxu0
        %486 = vdwg.mxu0
        %v487 = vmul.f32 %v482, %v436
        %488 = vrot.lane.b32.xlu0 %v375, 120
        %v489 = vpop.permute.xlu0 %488
        %490 = vrot.lane.b32.xlu0 %v375, 88
        %v491 = vpop.permute.xlu0 %490
        %v493 = vsel %vm379, %v489, 0
        %v496 = vsel %vm379, %v491, 0
        %498 = vmatprep.subr.bf16.mxu0 0
        %499 = vmatpush1.bf16.xpose.msra.mxu0 %v496
        %500 = vmatprep.subr.bf16.mxu0 0
        %501 = vmatpush1.bf16.xpose.msra.mxu0 0
        %502 = vmatprep.subr.bf16.mxu0 0
        %503 = vmatpush1.bf16.xpose.msra.mxu0 0
        %504 = vmatprep.subr.bf16.mxu0 0
        %505 = vmatpush1.bf16.xpose.msra.mxu0 0
        %506 = vmatprep.subr.bf16.mxu0 0
        %507 = vmatpush1.bf16.xpose.msra.mxu0 0
        %508 = vmatprep.subr.bf16.mxu0 0
        %509 = vmatpush1.bf16.xpose.msra.mxu0 0
        %510 = vmatprep.subr.bf16.mxu0 0
        %511 = vmatpush1.bf16.xpose.msra.mxu0 0
        %512 = vmatprep.subr.bf16.mxu0 0
        %513 = vmatpush1.bf16.xpose.msra.mxu0 0
        %514 = vmatprep.subr.bf16.mxu0 0
        %515 = vmatpush1.bf16.xpose.msra.mxu0 0
        %516 = vmatprep.subr.bf16.mxu0 0
        %517 = vmatpush1.bf16.xpose.msra.mxu0 0
        %518 = vmatprep.subr.bf16.mxu0 0
        %519 = vmatpush1.bf16.xpose.msra.mxu0 0
        %520 = vmatprep.subr.bf16.mxu0 0
        %521 = vmatpush1.bf16.xpose.msra.mxu0 0
        %522 = vmatprep.subr.bf16.mxu0 0
        %523 = vmatpush1.bf16.xpose.msra.mxu0 0
        %524 = vmatprep.subr.bf16.mxu0 0
        %525 = vmatpush1.bf16.xpose.msra.mxu0 0
        %526 = vmatprep.subr.bf16.mxu0 0
        %527 = vmatpush1.bf16.xpose.msra.mxu0 0
        %528 = vmatprep.subr.bf16.mxu0 0
        %529 = vmatpush1.bf16.xpose.msra.mxu0 0
        %530 = vmatprep.mubr.bf16.mxu0 0
        %531 = vmatmul.mubr.bf16.gmra.mrb[0].mxu0 %v493
        %v532 = vpop.f32.mrb[0].mxu0
        %v533 = vadd.f32 %v369, %v532
        %v534 = vpop.f32.mrb[0].mxu0
        %v535 = vpop.f32.mrb[0].mxu0
        %v536 = vpop.f32.mrb[0].mxu0
        %537 = vdwg.mxu0
        %v538 = vsel %vm379, %v533, -inf
        %539 = vmax.xlane.f32.xlu0 %v538
        %v540 = vpop.xlane.xlu0 %539
        %v541 = vsub.f32 %v533, %v540
        %v542 = vmul.f32 %v541, 1.442695
        %v543 = vpow.pop %v542
        %v544 = vsel %vm379, %v543, 0.0
        %545 = vadd.xlane.f32.xlu0 %v544
        %v546 = vpop.xlane.xlu0 %545
        %v547 = vmax.f32 %v546, 1e-30
        %v548 = vrcp.pop %v547
        %v549 = vpack.c.bf16 %v543, %v543
        %550 = vrot.lane.b32.xlu0 %v375, 56
        %v551 = vpop.permute.xlu0 %550
        %v553 = vsel %vm379, %v549, 0
        %v556 = vsel %vm443, %v551, 0
        %558 = vmatprep.subr.bf16.mxu0 0
        %559 = vmatpush1.bf16.msra.mxu0 %v556
        %560 = vmatprep.subr.bf16.mxu0 0
        %561 = vmatpush1.bf16.msra.mxu0 0
        %562 = vmatprep.subr.bf16.mxu0 0
        %563 = vmatpush1.bf16.msra.mxu0 0
        %564 = vmatprep.subr.bf16.mxu0 0
        %565 = vmatpush1.bf16.msra.mxu0 0
        %566 = vmatprep.subr.bf16.mxu0 0
        %567 = vmatpush1.bf16.msra.mxu0 0
        %568 = vmatprep.subr.bf16.mxu0 0
        %569 = vmatpush1.bf16.msra.mxu0 0
        %570 = vmatprep.subr.bf16.mxu0 0
        %571 = vmatpush1.bf16.msra.mxu0 0
        %572 = vmatprep.subr.bf16.mxu0 0
        %573 = vmatpush1.bf16.msra.mxu0 0
        %574 = vmatprep.subr.bf16.mxu0 0
        %575 = vmatpush1.bf16.msra.mxu0 0
        %576 = vmatprep.subr.bf16.mxu0 0
        %577 = vmatpush1.bf16.msra.mxu0 0
        %578 = vmatprep.subr.bf16.mxu0 0
        %579 = vmatpush1.bf16.msra.mxu0 0
        %580 = vmatprep.subr.bf16.mxu0 0
        %581 = vmatpush1.bf16.msra.mxu0 0
        %582 = vmatprep.subr.bf16.mxu0 0
        %583 = vmatpush1.bf16.msra.mxu0 0
        %584 = vmatprep.subr.bf16.mxu0 0
        %585 = vmatpush1.bf16.msra.mxu0 0
        %586 = vmatprep.subr.bf16.mxu0 0
        %587 = vmatpush1.bf16.msra.mxu0 0
        %588 = vmatprep.subr.bf16.mxu0 0
        %589 = vmatpush1.bf16.msra.mxu0 0
        %590 = vmatprep.mubr.bf16.mxu0 0
        %591 = vmatmul.mubr.bf16.gmra.mrb[0].mxu0 %v553
        %v592 = vpop.f32.mrb[0].mxu0
        %v593 = vadd.f32 0.0, %v592
        %v594 = vpop.f32.mrb[0].mxu0
        %v595 = vpop.f32.mrb[0].mxu0
        %v596 = vpop.f32.mrb[0].mxu0
        %597 = vdwg.mxu0
        %v598 = vmul.f32 %v593, %v548
        %599 = vrot.lane.b32.xlu0 %v375, 112
        %v600 = vpop.permute.xlu0 %599
        %601 = vrot.lane.b32.xlu0 %v375, 80
        %v602 = vpop.permute.xlu0 %601
        %v604 = vsel %vm379, %v600, 0
        %v607 = vsel %vm379, %v602, 0
        %609 = vmatprep.subr.bf16.mxu0 0
        %610 = vmatpush1.bf16.xpose.msra.mxu0 %v607
        %611 = vmatprep.subr.bf16.mxu0 0
        %612 = vmatpush1.bf16.xpose.msra.mxu0 0
        %613 = vmatprep.subr.bf16.mxu0 0
        %614 = vmatpush1.bf16.xpose.msra.mxu0 0
        %615 = vmatprep.subr.bf16.mxu0 0
        %616 = vmatpush1.bf16.xpose.msra.mxu0 0
        %617 = vmatprep.subr.bf16.mxu0 0
        %618 = vmatpush1.bf16.xpose.msra.mxu0 0
        %619 = vmatprep.subr.bf16.mxu0 0
        %620 = vmatpush1.bf16.xpose.msra.mxu0 0
        %621 = vmatprep.subr.bf16.mxu0 0
        %622 = vmatpush1.bf16.xpose.msra.mxu0 0
        %623 = vmatprep.subr.bf16.mxu0 0
        %624 = vmatpush1.bf16.xpose.msra.mxu0 0
        %625 = vmatprep.subr.bf16.mxu0 0
        %626 = vmatpush1.bf16.xpose.msra.mxu0 0
        %627 = vmatprep.subr.bf16.mxu0 0
        %628 = vmatpush1.bf16.xpose.msra.mxu0 0
        %629 = vmatprep.subr.bf16.mxu0 0
        %630 = vmatpush1.bf16.xpose.msra.mxu0 0
        %631 = vmatprep.subr.bf16.mxu0 0
        %632 = vmatpush1.bf16.xpose.msra.mxu0 0
        %633 = vmatprep.subr.bf16.mxu0 0
        %634 = vmatpush1.bf16.xpose.msra.mxu0 0
        %635 = vmatprep.subr.bf16.mxu0 0
        %636 = vmatpush1.bf16.xpose.msra.mxu0 0
        %637 = vmatprep.subr.bf16.mxu0 0
        %638 = vmatpush1.bf16.xpose.msra.mxu0 0
        %639 = vmatprep.subr.bf16.mxu0 0
        %640 = vmatpush1.bf16.xpose.msra.mxu0 0
        %641 = vmatprep.mubr.bf16.mxu0 0
        %642 = vmatmul.mubr.bf16.gmra.mrb[0].mxu0 %v604
        %v643 = vpop.f32.mrb[0].mxu0
        %v644 = vadd.f32 %v369, %v643
        %v645 = vpop.f32.mrb[0].mxu0
        %v646 = vpop.f32.mrb[0].mxu0
        %v647 = vpop.f32.mrb[0].mxu0
        %648 = vdwg.mxu0
        %v649 = vsel %vm379, %v644, -inf
        %650 = vmax.xlane.f32.xlu0 %v649
        %v651 = vpop.xlane.xlu0 %650
        %v652 = vsub.f32 %v644, %v651
        %v653 = vmul.f32 %v652, 1.442695
        %v654 = vpow.pop %v653
        %v655 = vsel %vm379, %v654, 0.0
        %656 = vadd.xlane.f32.xlu0 %v655
        %v657 = vpop.xlane.xlu0 %656
        %v658 = vmax.f32 %v657, 1e-30
        %v659 = vrcp.pop %v658
        %v660 = vpack.c.bf16 %v654, %v654
        %661 = vrot.lane.b32.xlu0 %v375, 48
        %v662 = vpop.permute.xlu0 %661
        %v664 = vsel %vm379, %v660, 0
        %v667 = vsel %vm443, %v662, 0
        %669 = vmatprep.subr.bf16.mxu0 0
        %670 = vmatpush1.bf16.msra.mxu0 %v667
        %671 = vmatprep.subr.bf16.mxu0 0
        %672 = vmatpush1.bf16.msra.mxu0 0
        %673 = vmatprep.subr.bf16.mxu0 0
        %674 = vmatpush1.bf16.msra.mxu0 0
        %675 = vmatprep.subr.bf16.mxu0 0
        %676 = vmatpush1.bf16.msra.mxu0 0
        %677 = vmatprep.subr.bf16.mxu0 0
        %678 = vmatpush1.bf16.msra.mxu0 0
        %679 = vmatprep.subr.bf16.mxu0 0
        %680 = vmatpush1.bf16.msra.mxu0 0
        %681 = vmatprep.subr.bf16.mxu0 0
        %682 = vmatpush1.bf16.msra.mxu0 0
        %683 = vmatprep.subr.bf16.mxu0 0
        %684 = vmatpush1.bf16.msra.mxu0 0
        %685 = vmatprep.subr.bf16.mxu0 0
        %686 = vmatpush1.bf16.msra.mxu0 0
        %687 = vmatprep.subr.bf16.mxu0 0
        %688 = vmatpush1.bf16.msra.mxu0 0
        %689 = vmatprep.subr.bf16.mxu0 0
        %690 = vmatpush1.bf16.msra.mxu0 0
        %691 = vmatprep.subr.bf16.mxu0 0
        %692 = vmatpush1.bf16.msra.mxu0 0
        %693 = vmatprep.subr.bf16.mxu0 0
        %694 = vmatpush1.bf16.msra.mxu0 0
        %695 = vmatprep.subr.bf16.mxu0 0
        %696 = vmatpush1.bf16.msra.mxu0 0
        %697 = vmatprep.subr.bf16.mxu0 0
        %698 = vmatpush1.bf16.msra.mxu0 0
        %699 = vmatprep.subr.bf16.mxu0 0
        %700 = vmatpush1.bf16.msra.mxu0 0
        %701 = vmatprep.mubr.bf16.mxu0 0
        %702 = vmatmul.mubr.bf16.gmra.mrb[0].mxu0 %v664
        %v703 = vpop.f32.mrb[0].mxu0
        %v704 = vadd.f32 0.0, %v703
        %v705 = vpop.f32.mrb[0].mxu0
        %v706 = vpop.f32.mrb[0].mxu0
        %v707 = vpop.f32.mrb[0].mxu0
        %708 = vdwg.mxu0
        %v709 = vmul.f32 %v704, %v659
        %710 = vrot.lane.b32.xlu0 %v375, 104
        %v711 = vpop.permute.xlu0 %710
        %712 = vrot.lane.b32.xlu0 %v375, 72
        %v713 = vpop.permute.xlu0 %712
        %v715 = vsel %vm379, %v711, 0
        %v718 = vsel %vm379, %v713, 0
        %720 = vmatprep.subr.bf16.mxu0 0
        %721 = vmatpush1.bf16.xpose.msra.mxu0 %v718
        %722 = vmatprep.subr.bf16.mxu0 0
        %723 = vmatpush1.bf16.xpose.msra.mxu0 0
        %724 = vmatprep.subr.bf16.mxu0 0
        %725 = vmatpush1.bf16.xpose.msra.mxu0 0
        %726 = vmatprep.subr.bf16.mxu0 0
        %727 = vmatpush1.bf16.xpose.msra.mxu0 0
        %728 = vmatprep.subr.bf16.mxu0 0
        %729 = vmatpush1.bf16.xpose.msra.mxu0 0
        %730 = vmatprep.subr.bf16.mxu0 0
        %731 = vmatpush1.bf16.xpose.msra.mxu0 0
        %732 = vmatprep.subr.bf16.mxu0 0
        %733 = vmatpush1.bf16.xpose.msra.mxu0 0
        %734 = vmatprep.subr.bf16.mxu0 0
        %735 = vmatpush1.bf16.xpose.msra.mxu0 0
        %736 = vmatprep.subr.bf16.mxu0 0
        %737 = vmatpush1.bf16.xpose.msra.mxu0 0
        %738 = vmatprep.subr.bf16.mxu0 0
        %739 = vmatpush1.bf16.xpose.msra.mxu0 0
        %740 = vmatprep.subr.bf16.mxu0 0
        %741 = vmatpush1.bf16.xpose.msra.mxu0 0
        %742 = vmatprep.subr.bf16.mxu0 0
        %743 = vmatpush1.bf16.xpose.msra.mxu0 0
        %744 = vmatprep.subr.bf16.mxu0 0
        %745 = vmatpush1.bf16.xpose.msra.mxu0 0
        %746 = vmatprep.subr.bf16.mxu0 0
        %747 = vmatpush1.bf16.xpose.msra.mxu0 0
        %748 = vmatprep.subr.bf16.mxu0 0
        %749 = vmatpush1.bf16.xpose.msra.mxu0 0
        %750 = vmatprep.subr.bf16.mxu0 0
        %751 = vmatpush1.bf16.xpose.msra.mxu0 0
        %752 = vmatprep.mubr.bf16.mxu0 0
        %753 = vmatmul.mubr.bf16.gmra.mrb[0].mxu0 %v715
        %v754 = vpop.f32.mrb[0].mxu0
        %v755 = vadd.f32 %v369, %v754
        %v756 = vpop.f32.mrb[0].mxu0
        %v757 = vpop.f32.mrb[0].mxu0
        %v758 = vpop.f32.mrb[0].mxu0
        %759 = vdwg.mxu0
        %v760 = vsel %vm379, %v755, -inf
        %761 = vmax.xlane.f32.xlu0 %v760
        %v762 = vpop.xlane.xlu0 %761
        %v763 = vsub.f32 %v755, %v762
        %v764 = vmul.f32 %v763, 1.442695
        %v765 = vpow.pop %v764
        %v766 = vsel %vm379, %v765, 0.0
        %767 = vadd.xlane.f32.xlu0 %v766
        %v768 = vpop.xlane.xlu0 %767
        %v769 = vmax.f32 %v768, 1e-30
        %v770 = vrcp.pop %v769
        %v771 = vpack.c.bf16 %v765, %v765
        %772 = vrot.lane.b32.xlu0 %v375, 40
        %v773 = vpop.permute.xlu0 %772
        %v775 = vsel %vm379, %v771, 0
        %v778 = vsel %vm443, %v773, 0
        %780 = vmatprep.subr.bf16.mxu0 0
        %781 = vmatpush1.bf16.msra.mxu0 %v778
        %782 = vmatprep.subr.bf16.mxu0 0
        %783 = vmatpush1.bf16.msra.mxu0 0
        %784 = vmatprep.subr.bf16.mxu0 0
        %785 = vmatpush1.bf16.msra.mxu0 0
        %786 = vmatprep.subr.bf16.mxu0 0
        %787 = vmatpush1.bf16.msra.mxu0 0
        %788 = vmatprep.subr.bf16.mxu0 0
        %789 = vmatpush1.bf16.msra.mxu0 0
        %790 = vmatprep.subr.bf16.mxu0 0
        %791 = vmatpush1.bf16.msra.mxu0 0
        %792 = vmatprep.subr.bf16.mxu0 0
        %793 = vmatpush1.bf16.msra.mxu0 0
        %794 = vmatprep.subr.bf16.mxu0 0
        %795 = vmatpush1.bf16.msra.mxu0 0
        %796 = vmatprep.subr.bf16.mxu0 0
        %797 = vmatpush1.bf16.msra.mxu0 0
        %798 = vmatprep.subr.bf16.mxu0 0
        %799 = vmatpush1.bf16.msra.mxu0 0
        %800 = vmatprep.subr.bf16.mxu0 0
        %801 = vmatpush1.bf16.msra.mxu0 0
        %802 = vmatprep.subr.bf16.mxu0 0
        %803 = vmatpush1.bf16.msra.mxu0 0
        %804 = vmatprep.subr.bf16.mxu0 0
        %805 = vmatpush1.bf16.msra.mxu0 0
        %806 = vmatprep.subr.bf16.mxu0 0
        %807 = vmatpush1.bf16.msra.mxu0 0
        %808 = vmatprep.subr.bf16.mxu0 0
        %809 = vmatpush1.bf16.msra.mxu0 0
        %810 = vmatprep.subr.bf16.mxu0 0
        %811 = vmatpush1.bf16.msra.mxu0 0
        %812 = vmatprep.mubr.bf16.mxu0 0
        %813 = vmatmul.mubr.bf16.gmra.mrb[0].mxu0 %v775
        %v814 = vpop.f32.mrb[0].mxu0
        %v815 = vadd.f32 0.0, %v814
        %v816 = vpop.f32.mrb[0].mxu0
        %v817 = vpop.f32.mrb[0].mxu0
        %v818 = vpop.f32.mrb[0].mxu0
        %819 = vdwg.mxu0
        %v820 = vmul.f32 %v815, %v770
        %822 = vrot.lane.b32.xlu0 %v598, 8
        %v823 = vpop.permute.xlu0 %822
        %826 = vrot.lane.b32.xlu0 %v709, 16
        %v827 = vpop.permute.xlu0 %826
        %830 = vrot.lane.b32.xlu0 %v820, 24
        %v831 = vpop.permute.xlu0 %830
        %v833 = vsel %vm379, %v487, %v823
        %vm834 = vcmask 130048
        %v835 = vsel %vm834, %v833, %v827
        %vm836 = vcmask 195584
        %v837 = vsel %vm836, %v835, %v831
        %v838 = vpack.c.bf16 %v837, %v837
        %v840 = vlaneseq
        %v841 = vshrl.u32 %v840, 7
        %v842 = vsub.s32 0, %v841
        %v843 = vrot.slane %v374, %v842
        %v849 = vunpack.c.l.b16 %v370
        %v850 = vunpack.c.l.b16 %v371
        %v851 = vunpack.c.l.b16 %v372
        %v852 = vunpack.c.l.b16 %v373
        %v853 = vpack.c.b16 %v850, %v849
        %v854 = vpack.c.b16 %v852, %v851
        %v858 = vsel %vm320, %v838, 0
        %860 = vmatprep.subr.bf16.mxu0 0
        %861 = vmatpush1.bf16.msra.mxu0 %v853
        %862 = vmatprep.subr.bf16.mxu0 0
        %863 = vmatpush1.bf16.msra.mxu0 %v854
        %864 = vmatprep.subr.bf16.mxu0 0
        %865 = vmatpush1.bf16.msra.mxu0 0
        %866 = vmatprep.subr.bf16.mxu0 0
        %867 = vmatpush1.bf16.msra.mxu0 0
        %868 = vmatprep.subr.bf16.mxu0 0
        %869 = vmatpush1.bf16.msra.mxu0 0
        %870 = vmatprep.subr.bf16.mxu0 0
        %871 = vmatpush1.bf16.msra.mxu0 0
        %872 = vmatprep.subr.bf16.mxu0 0
        %873 = vmatpush1.bf16.msra.mxu0 0
        %874 = vmatprep.subr.bf16.mxu0 0
        %875 = vmatpush1.bf16.msra.mxu0 0
        %876 = vmatprep.subr.bf16.mxu0 0
        %877 = vmatpush1.bf16.msra.mxu0 0
        %878 = vmatprep.subr.bf16.mxu0 0
        %879 = vmatpush1.bf16.msra.mxu0 0
        %880 = vmatprep.subr.bf16.mxu0 0
        %881 = vmatpush1.bf16.msra.mxu0 0
        %882 = vmatprep.subr.bf16.mxu0 0
        %883 = vmatpush1.bf16.msra.mxu0 0
        %884 = vmatprep.subr.bf16.mxu0 0
        %885 = vmatpush1.bf16.msra.mxu0 0
        %886 = vmatprep.subr.bf16.mxu0 0
        %887 = vmatpush1.bf16.msra.mxu0 0
        %888 = vmatprep.subr.bf16.mxu0 0
        %889 = vmatpush1.bf16.msra.mxu0 0
        %890 = vmatprep.subr.bf16.mxu0 0
        %891 = vmatpush1.bf16.msra.mxu0 0
        %892 = vmatprep.mubr.bf16.mxu0 0
        %893 = vmatmul.mubr.bf16.gmra.mrb[0].mxu0 %v858
        %v894 = vpop.f32.mrb[0].mxu0
        %v895 = vadd.f32 %v843, %v894
        %v896 = vpop.f32.mrb[0].mxu0
        %v897 = vpop.f32.mrb[0].mxu0
        %v898 = vpop.f32.mrb[0].mxu0
        %899 = vdwg.mxu0
        %v900 = vld [vmem:[%s5] sm:$0x1]
        %v901 = vld [vmem:[%s6] sm:$0x1]
        %v902 = vadd.f32 %v295, %v895
        %v903 = vsel %vm320, %v902, 0.0
        %904 = vadd.xlane.f32.xlu0 %v903
        %v905 = vpop.xlane.xlu0 %904
        %v906 = vrcp.pop 32.0
        %v907 = vmul.f32 %v905, %v906
        %v908 = vsub.f32 %v902, %v907
        %v909 = vmul.f32 %v908, %v908
        %v910 = vsel %vm320, %v909, 0.0
        %911 = vadd.xlane.f32.xlu0 %v910
        %v912 = vpop.xlane.xlu0 %911
        %v913 = vmul.f32 %v912, %v906
        %v914 = vadd.f32 %v913, 1e-05
        %v915 = vrsqrt.pop %v914
        %v916 = vmul.f32 %v908, %v915
        %v918 = vlaneseq
        %v919 = vshrl.u32 %v918, 7
        %v920 = vsub.s32 0, %v919
        %v921 = vrot.slane %v900, %v920
        %v923 = vmul.f32 %v916, %v921
        %v925 = vlaneseq
        %v926 = vshrl.u32 %v925, 7
        %v927 = vsub.s32 0, %v926
        %v928 = vrot.slane %v901, %v927
        %v930 = vadd.f32 %v923, %v928
        %931 = vst.msk [vmem:[%s293] sm:$0xff] %vm320, %v930
        %p932 = scmp.lt.s32.totalorder %s21, 1
        %s933 = scalar_select %p932, %s21, 1
        %s934 = smul.addr %s933, 8
        %s935 = scalar_lea.vmem %s7, %s934
        // Predicated region
        $region53: #{decoder_layer.3} parent=47 // pred_check
          %p936 = pneg %p191
        $region54: #{decoder_layer.3} parent=47 // pred_check_branch
          %938 = sbr.rel (%p936) target = $region56
        $region55: #{decoder_layer.3} parent=47 // pred_region
          _
        $region56: #{decoder_layer.3} parent=47 // pred_fallthru
          _
      $region48: #{decoder_layer.3} parent=5 // pred_fallthru
        _
      %p939 = scmp.le.s32.totalorder 2, %s16
      // Predicated region
      $region57: #{decoder_layer.3} parent=5 // pred_check
        %p940 = pneg %p939
      $region58: #{decoder_layer.3} parent=5 // pred_check_branch
        %942 = sbr.rel (%p940) target = $region60
      $region59: #{decoder_layer.3} parent=5 // pred_region
        %s943 = ssub.s32 %s16, 2
        // Predicated region
        $region61: #{decoder_layer.3} parent=59 // pred_check
          %p944 = pneg %p197
        $region62: #{decoder_layer.3} parent=59 // pred_check_branch
          %946 = sbr.rel (%p944) target = $region64
        $region63: #{decoder_layer.3} parent=59 // pred_region
          %p947 = scmp.lt.s32.totalorder %s22, 1
          %s948 = scalar_select %p947, %s22, 1
          %s949 = smul.addr %s948, 8
          %s950 = scalar_lea.vmem %s7, %s949
        $region64: #{decoder_layer.3} parent=59 // pred_fallthru
          _
      $region60: #{decoder_layer.3} parent=5 // pred_fallthru
        _
    $region6: #{decoder_layer.3} parent=1 // loop_footer
      %s20 = sadd.s32 1, %s16
    $region7: #{decoder_layer.3} parent=1 // loop_footer_branch
      %15 = sbr.rel target = $region3
    $region8: #{decoder_layer.3} parent=1 // loop_exit
      _
    %951 = vsyncpa [#allocation3], 1
    %s952 = scalar_lea.sflag [#allocation3], 1
    %953 = vsyncpa %s952, 1

// kernel: decoder_layer.4
$region0: #{decoder_layer.4}
  #allocation0 [shape = 'u32[]', space=smem, size = 0x4, offset = 0x4, fixed_abs, tag = 'smem constant byte address 0x4 - core index']
  #allocation1 [shape = 'u32[144,128]{1,0:T(1,128)}', space=vmem, size = 0x12000, scoped, tag = 'internal scratch']
  %s0 = inlined_call_operand.vmem [shape: f32[2,8,32], index: 0, kind: input, shape index: {}]
  %s1 = inlined_call_operand.vmem [shape: f32[2,8,32], index: 1, kind: input, shape index: {}]
  %s2 = inlined_call_operand.vmem [shape: bf16[32,32], index: 2, kind: input, shape index: {}]
  %s3 = inlined_call_operand.vmem [shape: f32[1,32], index: 3, kind: input, shape index: {}]
  %s4 = inlined_call_operand.vmem [shape: bf16[32,64], index: 4, kind: input, shape index: {}]
  %s5 = inlined_call_operand.vmem [shape: f32[1,64], index: 5, kind: input, shape index: {}]
  %s6 = inlined_call_operand.vmem [shape: bf16[32,32], index: 6, kind: input, shape index: {}]
  %s7 = inlined_call_operand.vmem [shape: f32[1,32], index: 7, kind: input, shape index: {}]
  %s8 = inlined_call_operand.vmem [shape: f32[1,32], index: 8, kind: input, shape index: {}]
  %s9 = inlined_call_operand.vmem [shape: f32[1,32], index: 9, kind: input, shape index: {}]
  %s10 = inlined_call_operand.vmem [shape: f32[2,8,32], index: 10, kind: output, shape index: {}]
  %s11 = sld [smem:[#allocation0]]
  $region73: #{decoder_layer.4} parent=0
    _
  %s13 = ssub.s32 1, %s11
  %s14 = scalar_select 0, %s13, %s11
  loop: start=0, step=1, limit=4
  $region2: #{decoder_layer.4} parent=0 // loop_pre_header
    _
  $region3: #{decoder_layer.4} parent=0 // loop_header
    %s16 = sphi 0, %s20
    %p17 = scmp.ge.s32.totalorder %s16, 4
    %s26 = sphi 0, %s28
    %s29 = sphi 0, %s26
    %s30 = sphi 0, %s29
    %s46 = sphi 0, %s30
    %s52 = sphi 0, %s54
    %s55 = sphi 0, %s52
    %s56 = sphi 0, %s55
    %s72 = sphi 0, %s56
    %s76 = sphi 0, %s76
    %s78 = sphi 0, %s76
    %s79 = sphi 0, %s78
    %s93 = sphi 0, %s79
    %s97 = sphi 0, %s97
    %s99 = sphi 0, %s97
    %s100 = sphi 0, %s99
    %s114 = sphi 0, %s100
    %s118 = sphi 0, %s118
    %s120 = sphi 0, %s118
    %s121 = sphi 0, %s120
    %s135 = sphi 0, %s121
    %s139 = sphi 0, %s139
    %s141 = sphi 0, %s139
    %s142 = sphi 0, %s141
    %s156 = sphi 0, %s142
    %s160 = sphi 0, %s160
    %s162 = sphi 0, %s160
    %s163 = sphi 0, %s162
    %s177 = sphi 0, %s163
    %s181 = sphi 0, %s181
    %s183 = sphi 0, %s181
    %s184 = sphi 0, %s183
    %s198 = sphi 0, %s184
    %s202 = sphi 0, %s202
    %s204 = sphi 0, %s202
    %s205 = sphi 0, %s204
    %s219 = sphi 0, %s205
    %s223 = sphi 0, %s223
    %s225 = sphi 0, %s223
    %s226 = sphi 0, %s225
    %s240 = sphi 0, %s226
    %s246 = sphi 0, %s248
    %s249 = sphi 0, %s246
    %s250 = sphi 0, %s249
    %s266 = sphi 0, %s250
  $region4: #{decoder_layer.4} parent=0 // loop_header_branch
    %19 = sbr.rel (%p17) target = $region8
  $region5: #{decoder_layer.4} parent=0 // loop_body
    %s21 = ssub.s32 %s16, 1
    %s22 = ssub.s32 %s16, 2
    %s23 = sadd.s32 %s16, 1
    %s24 = ssub.s32 %s16, %s23
    %p25 = scmp.eq.s32.totalorder %s24, 0
    %s27 = sadd.s32 %s26, 1
    %s28 = scalar_select %p25, %s26, %s27
    %p31 = pneg %p25
    %p32 = scmp.eq.s32.totalorder %s16, 1
    %p33 = por %p31, %p32
    %p34 = scmp.ne.s32.totalorder %s26, %s29
    %p35 = scmp.eq.s32.totalorder %s16, 0
    %p36 = por %p34, %p35
    %p37 = scmp.ne.s32.totalorder %s26, %s29
    %p38 = scmp.eq.s32.totalorder %s21, 1
    %p39 = por %p37, %p38
    %p40 = scmp.ne.s32.totalorder %s29, %s30
    %p41 = scmp.eq.s32.totalorder %s21, 0
    %p42 = por %p40, %p41
    %p43 = scmp.ne.s32.totalorder %s29, %s30
    %p44 = scmp.eq.s32.totalorder %s22, 1
    %p45 = por %p43, %p44
    %p47 = scmp.ne.s32.totalorder %s30, %s46
    %p48 = scmp.eq.s32.totalorder %s22, 0
    %p49 = por %p47, %p48
    %s50 = ssub.s32 %s16, %s23
    %p51 = scmp.eq.s32.totalorder %s50, 0
    %s53 = sadd.s32 %s52, 1
    %s54 = scalar_select %p51, %s52, %s53
    %p57 = pneg %p51
    %p58 = scmp.eq.s32.totalorder %s16, 1
    %p59 = por %p57, %p58
    %p60 = scmp.ne.s32.totalorder %s52, %s55
    %p61 = scmp.eq.s32.totalorder %s16, 0
    %p62 = por %p60, %p61
    %p63 = scmp.ne.s32.totalorder %s52, %s55
    %p64 = scmp.eq.s32.totalorder %s21, 1
    %p65 = por %p63, %p64
    %p66 = scmp.ne.s32.totalorder %s55, %s56
    %p67 = scmp.eq.s32.totalorder %s21, 0
    %p68 = por %p66, %p67
    %p69 = scmp.ne.s32.totalorder %s55, %s56
    %p70 = scmp.eq.s32.totalorder %s22, 1
    %p71 = por %p69, %p70
    %p73 = scmp.ne.s32.totalorder %s56, %s72
    %p74 = scmp.eq.s32.totalorder %s22, 0
    %p75 = por %p73, %p74
    %s77 = sadd.s32 %s76, 1
    %p80 = scmp.eq.s32.totalorder %s16, 1
    %p81 = scmp.ne.s32.totalorder %s76, %s78
    %p82 = scmp.eq.s32.totalorder %s16, 0
    %p83 = por %p81, %p82
    %p84 = scmp.ne.s32.totalorder %s76, %s78
    %p85 = scmp.eq.s32.totalorder %s21, 1
    %p86 = por %p84, %p85
    %p87 = scmp.ne.s32.totalorder %s78, %s79
    %p88 = scmp.eq.s32.totalorder %s21, 0
    %p89 = por %p87, %p88
    %p90 = scmp.ne.s32.totalorder %s78, %s79
    %p91 = scmp.eq.s32.totalorder %s22, 1
    %p92 = por %p90, %p91
    %p94 = scmp.ne.s32.totalorder %s79, %s93
    %p95 = scmp.eq.s32.totalorder %s22, 0
    %p96 = por %p94, %p95
    %s98 = sadd.s32 %s97, 1
    %p101 = scmp.eq.s32.totalorder %s16, 1
    %p102 = scmp.ne.s32.totalorder %s97, %s99
    %p103 = scmp.eq.s32.totalorder %s16, 0
    %p104 = por %p102, %p103
    %p105 = scmp.ne.s32.totalorder %s97, %s99
    %p106 = scmp.eq.s32.totalorder %s21, 1
    %p107 = por %p105, %p106
    %p108 = scmp.ne.s32.totalorder %s99, %s100
    %p109 = scmp.eq.s32.totalorder %s21, 0
    %p110 = por %p108, %p109
    %p111 = scmp.ne.s32.totalorder %s99, %s100
    %p112 = scmp.eq.s32.totalorder %s22, 1
    %p113 = por %p111, %p112
    %p115 = scmp.ne.s32.totalorder %s100, %s114
    %p116 = scmp.eq.s32.totalorder %s22, 0
    %p117 = por %p115, %p116
    %s119 = sadd.s32 %s118, 1
    %p122 = scmp.eq.s32.totalorder %s16, 1
    %p123 = scmp.ne.s32.totalorder %s118, %s120
    %p124 = scmp.eq.s32.totalorder %s16, 0
    %p125 = por %p123, %p124
    %p126 = scmp.ne.s32.totalorder %s118, %s120
    %p127 = scmp.eq.s32.totalorder %s21, 1
    %p128 = por %p126, %p127
    %p129 = scmp.ne.s32.totalorder %s120, %s121
    %p130 = scmp.eq.s32.totalorder %s21, 0
    %p131 = por %p129, %p130
    %p132 = scmp.ne.s32.totalorder %s120, %s121
    %p133 = scmp.eq.s32.totalorder %s22, 1
    %p134 = por %p132, %p133
    %p136 = scmp.ne.s32.totalorder %s121, %s135
    %p137 = scmp.eq.s32.totalorder %s22, 0
    %p138 = por %p136, %p137
    %s140 = sadd.s32 %s139, 1
    %p143 = scmp.eq.s32.totalorder %s16, 1
    %p144 = scmp.ne.s32.totalorder %s139, %s141
    %p145 = scmp.eq.s32.totalorder %s16, 0
    %p146 = por %p144, %p145
    %p147 = scmp.ne.s32.totalorder %s139, %s141
    %p148 = scmp.eq.s32.totalorder %s21, 1
    %p149 = por %p147, %p148
    %p150 = scmp.ne.s32.totalorder %s141, %s142
    %p151 = scmp.eq.s32.totalorder %s21, 0
    %p152 = por %p150, %p151
    %p153 = scmp.ne.s32.totalorder %s141, %s142
    %p154 = scmp.eq.s32.totalorder %s22, 1
    %p155 = por %p153, %p154
    %p157 = scmp.ne.s32.totalorder %s142, %s156
    %p158 = scmp.eq.s32.totalorder %s22, 0
    %p159 = por %p157, %p158
    %s161 = sadd.s32 %s160, 1
    %p164 = scmp.eq.s32.totalorder %s16, 1
    %p165 = scmp.ne.s32.totalorder %s160, %s162
    %p166 = scmp.eq.s32.totalorder %s16, 0
    %p167 = por %p165, %p166
    %p168 = scmp.ne.s32.totalorder %s160, %s162
    %p169 = scmp.eq.s32.totalorder %s21, 1
    %p170 = por %p168, %p169
    %p171 = scmp.ne.s32.totalorder %s162, %s163
    %p172 = scmp.eq.s32.totalorder %s21, 0
    %p173 = por %p171, %p172
    %p174 = scmp.ne.s32.totalorder %s162, %s163
    %p175 = scmp.eq.s32.totalorder %s22, 1
    %p176 = por %p174, %p175
    %p178 = scmp.ne.s32.totalorder %s163, %s177
    %p179 = scmp.eq.s32.totalorder %s22, 0
    %p180 = por %p178, %p179
    %s182 = sadd.s32 %s181, 1
    %p185 = scmp.eq.s32.totalorder %s16, 1
    %p186 = scmp.ne.s32.totalorder %s181, %s183
    %p187 = scmp.eq.s32.totalorder %s16, 0
    %p188 = por %p186, %p187
    %p189 = scmp.ne.s32.totalorder %s181, %s183
    %p190 = scmp.eq.s32.totalorder %s21, 1
    %p191 = por %p189, %p190
    %p192 = scmp.ne.s32.totalorder %s183, %s184
    %p193 = scmp.eq.s32.totalorder %s21, 0
    %p194 = por %p192, %p193
    %p195 = scmp.ne.s32.totalorder %s183, %s184
    %p196 = scmp.eq.s32.totalorder %s22, 1
    %p197 = por %p195, %p196
    %p199 = scmp.ne.s32.totalorder %s184, %s198
    %p200 = scmp.eq.s32.totalorder %s22, 0
    %p201 = por %p199, %p200
    %s203 = sadd.s32 %s202, 1
    %p206 = scmp.eq.s32.totalorder %s16, 1
    %p207 = scmp.ne.s32.totalorder %s202, %s204
    %p208 = scmp.eq.s32.totalorder %s16, 0
    %p209 = por %p207, %p208
    %p210 = scmp.ne.s32.totalorder %s202, %s204
    %p211 = scmp.eq.s32.totalorder %s21, 1
    %p212 = por %p210, %p211
    %p213 = scmp.ne.s32.totalorder %s204, %s205
    %p214 = scmp.eq.s32.totalorder %s21, 0
    %p215 = por %p213, %p214
    %p216 = scmp.ne.s32.totalorder %s204, %s205
    %p217 = scmp.eq.s32.totalorder %s22, 1
    %p218 = por %p216, %p217
    %p220 = scmp.ne.s32.totalorder %s205, %s219
    %p221 = scmp.eq.s32.totalorder %s22, 0
    %p222 = por %p220, %p221
    %s224 = sadd.s32 %s223, 1
    %p227 = scmp.eq.s32.totalorder %s16, 1
    %p228 = scmp.ne.s32.totalorder %s223, %s225
    %p229 = scmp.eq.s32.totalorder %s16, 0
    %p230 = por %p228, %p229
    %p231 = scmp.ne.s32.totalorder %s223, %s225
    %p232 = scmp.eq.s32.totalorder %s21, 1
    %p233 = por %p231, %p232
    %p234 = scmp.ne.s32.totalorder %s225, %s226
    %p235 = scmp.eq.s32.totalorder %s21, 0
    %p236 = por %p234, %p235
    %p237 = scmp.ne.s32.totalorder %s225, %s226
    %p238 = scmp.eq.s32.totalorder %s22, 1
    %p239 = por %p237, %p238
    %p241 = scmp.ne.s32.totalorder %s226, %s240
    %p242 = scmp.eq.s32.totalorder %s22, 0
    %p243 = por %p241, %p242
    %s244 = ssub.s32 %s16, %s23
    %p245 = scmp.eq.s32.totalorder %s244, 0
    %s247 = sadd.s32 %s246, 1
    %s248 = scalar_select %p245, %s246, %s247
    %p251 = pneg %p245
    %p252 = scmp.eq.s32.totalorder %s16, 1
    %p253 = por %p251, %p252
    %p254 = scmp.ne.s32.totalorder %s246, %s249
    %p255 = scmp.eq.s32.totalorder %s16, 0
    %p256 = por %p254, %p255
    %p257 = scmp.ne.s32.totalorder %s246, %s249
    %p258 = scmp.eq.s32.totalorder %s21, 1
    %p259 = por %p257, %p258
    %p260 = scmp.ne.s32.totalorder %s249, %s250
    %p261 = scmp.eq.s32.totalorder %s21, 0
    %p262 = por %p260, %p261
    %p263 = scmp.ne.s32.totalorder %s249, %s250
    %p264 = scmp.eq.s32.totalorder %s22, 1
    %p265 = por %p263, %p264
    %p267 = scmp.ne.s32.totalorder %s250, %s266
    %p268 = scmp.eq.s32.totalorder %s22, 0
    %p269 = por %p267, %p268
    %p270 = scmp.le.s32.totalorder 1, %s16
    %p271 = scmp.lt.s32.totalorder %s16, 3
    %p272 = pnand %p270, %p271
    %p273 = pneg %p272
    // Predicated region
    $region9: #{decoder_layer.4} parent=5 // pred_check
      _
    $region10: #{decoder_layer.4} parent=5 // pred_check_branch
      %275 = sbr.rel (%p272) target = $region12
    $region11: #{decoder_layer.4} parent=5 // pred_region
      %s276 = ssub.s32 %s16, 1
      // Predicated region
      $region13: #{decoder_layer.4} parent=11 // pred_check
        %p277 = pneg %p89
      $region14: #{decoder_layer.4} parent=11 // pred_check_branch
        %279 = sbr.rel (%p277) target = $region16
      $region15: #{decoder_layer.4} parent=11 // pred_region
        _
      $region16: #{decoder_layer.4} parent=11 // pred_fallthru
        _
      // Predicated region
      $region17: #{decoder_layer.4} parent=11 // pred_check
        %p280 = pneg %p110
      $region18: #{decoder_layer.4} parent=11 // pred_check_branch
        %282 = sbr.rel (%p280) target = $region20
      $region19: #{decoder_layer.4} parent=11 // pred_region
        _
      $region20: #{decoder_layer.4} parent=11 // pred_fallthru
        _
      // Predicated region
      $region21: #{decoder_layer.4} parent=11 // pred_check
        %p283 = pneg %p131
      $region22: #{decoder_layer.4} parent=11 // pred_check_branch
        %285 = sbr.rel (%p283) target = $region24
      $region23: #{decoder_layer.4} parent=11 // pred_region
        _
      $region24: #{decoder_layer.4} parent=11 // pred_fallthru
        _
      // Predicated region
      $region25: #{decoder_layer.4} parent=11 // pred_check
        %p286 = pneg %p152
      $region26: #{decoder_layer.4} parent=11 // pred_check_branch
        %288 = sbr.rel (%p286) target = $region28
      $region27: #{decoder_layer.4} parent=11 // pred_region
        _
      $region28: #{decoder_layer.4} parent=11 // pred_fallthru
        _
      // Predicated region
      $region29: #{decoder_layer.4} parent=11 // pred_check
        %p289 = pneg %p173
      $region30: #{decoder_layer.4} parent=11 // pred_check_branch
        %291 = sbr.rel (%p289) target = $region32
      $region31: #{decoder_layer.4} parent=11 // pred_region
        _
      $region32: #{decoder_layer.4} parent=11 // pred_fallthru
        _
      // Predicated region
      $region33: #{decoder_layer.4} parent=11 // pred_check
        %p292 = pneg %p194
      $region34: #{decoder_layer.4} parent=11 // pred_check_branch
        %294 = sbr.rel (%p292) target = $region36
      $region35: #{decoder_layer.4} parent=11 // pred_region
        _
      $region36: #{decoder_layer.4} parent=11 // pred_fallthru
        _
      // Predicated region
      $region37: #{decoder_layer.4} parent=11 // pred_check
        %p295 = pneg %p215
      $region38: #{decoder_layer.4} parent=11 // pred_check_branch
        %297 = sbr.rel (%p295) target = $region40
      $region39: #{decoder_layer.4} parent=11 // pred_region
        _
      $region40: #{decoder_layer.4} parent=11 // pred_fallthru
        _
      // Predicated region
      $region41: #{decoder_layer.4} parent=11 // pred_check
        %p298 = pneg %p236
      $region42: #{decoder_layer.4} parent=11 // pred_check_branch
        %300 = sbr.rel (%p298) target = $region44
      $region43: #{decoder_layer.4} parent=11 // pred_region
        _
      $region44: #{decoder_layer.4} parent=11 // pred_fallthru
        _
    $region12: #{decoder_layer.4} parent=5 // pred_fallthru
      _
    %p301 = scmp.lt.s32.totalorder %s16, 2
    // Predicated region
    $region45: #{decoder_layer.4} parent=5 // pred_check
      %p302 = pneg %p301
    $region46: #{decoder_layer.4} parent=5 // pred_check_branch
      %304 = sbr.rel (%p302) target = $region48
    $region47: #{decoder_layer.4} parent=5 // pred_region
      // Predicated region
      $region49: #{decoder_layer.4} parent=47 // pred_check
        %p305 = pneg %p36
      $region50: #{decoder_layer.4} parent=47 // pred_check_branch
        %307 = sbr.rel (%p305) target = $region52
      $region51: #{decoder_layer.4} parent=47 // pred_region
        %p308 = scmp.lt.s32.totalorder %s16, 1
        %s309 = scalar_select %p308, %s16, 1
        %s310 = smul.addr %s309, 8
        %s311 = scalar_lea.vmem %s0, %s310
      $region52: #{decoder_layer.4} parent=47 // pred_fallthru
        _
      // Predicated region
      $region53: #{decoder_layer.4} parent=47 // pred_check
        %p312 = pneg %p62
      $region54: #{decoder_layer.4} parent=47 // pred_check_branch
        %314 = sbr.rel (%p312) target = $region56
      $region55: #{decoder_layer.4} parent=47 // pred_region
        %p315 = scmp.lt.s32.totalorder %s16, 1
        %s316 = scalar_select %p315, %s16, 1
        %s317 = smul.addr %s316, 8
        %s318 = scalar_lea.vmem %s1, %s317
      $region56: #{decoder_layer.4} parent=47 // pred_fallthru
        _
    $region48: #{decoder_layer.4} parent=5 // pred_fallthru
      _
    %p319 = scmp.le.s32.totalorder 1, %s16
    %p320 = scmp.lt.s32.totalorder %s16, 3
    %p321 = pnand %p319, %p320
    %p322 = pneg %p321
    // Predicated region
    $region57: #{decoder_layer.4} parent=5 // pred_check
      _
    $region58: #{decoder_layer.4} parent=5 // pred_check_branch
      %324 = sbr.rel (%p321) target = $region60
    $region59: #{decoder_layer.4} parent=5 // pred_region
      %s325 = ssub.s32 %s16, 1
      %p326 = scmp.lt.s32.totalorder %s21, 1
      %s327 = scalar_select %p326, %s21, 1
      %s328 = smul.addr %s327, 8
      %s329 = scalar_lea.vmem %s0, %s328
      %p330 = pneg %p42
      %p331 = pneg %p39
      %p332 = scmp.lt.s32.totalorder %s21, 1
      %s333 = scalar_select %p332, %s21, 1
      %s334 = smul.addr %s333, 8
      %s335 = scalar_lea.vmem %s1, %s334
      %p336 = pneg %p68
      %p337 = pneg %p65
      %p338 = pneg %p89
      %p339 = pneg %p86
      %p340 = pneg %p110
      %p341 = pneg %p107
      %p342 = pneg %p131
      %p343 = pneg %p128
      %p344 = pneg %p152
      %p345 = pneg %p149
      %p346 = pneg %p173
      %p347 = pneg %p170
      %p348 = pneg %p194
      %p349 = pneg %p191
      %p350 = pneg %p215
      %p351 = pneg %p212
      %p352 = pneg %p236
      %p353 = pneg %p233
      %p354 = pneg %p262
      %p355 = pneg %p259
      %p356 = scmp.lt.s32.totalorder %s21, 1
      %s357 = scalar_select %p356, %s21, 1
      %s358 = smul.addr %s357, 8
      %s359 = scalar_lea.vmem %s10, %s358
      %p360 = scmp.lt.s32.totalorder %s21, 1
      %s361 = scalar_select %p360, %s21, 1
      %s362 = smul.addr %s361, 8
      %s363 = scalar_lea.vmem %s0, %s362
      %p364 = scmp.lt.s32.totalorder %s21, 1
      %s365 = scalar_select %p364, %s21, 1
      %s366 = smul.addr %s365, 8
      %s367 = scalar_lea.vmem %s1, %s366
      %p368 = scmp.lt.s32.totalorder %s21, 1
      %s369 = scalar_select %p368, %s21, 1
      %s370 = smul.addr %s369, 8
      %s371 = scalar_lea.vmem %s10, %s370
      %v373 = vld [vmem:[%s363] sm:$0xff]
      %v374 = vld [vmem:[%s367] sm:$0xff]
      %v375 = vld [vmem:[%s2] sm:$0xf]
      %v376 = vld [vmem:[%s2 + $0x4] sm:$0xf]
      %v377 = vld [vmem:[%s2 + $0x8] sm:$0xf]
      %v378 = vld [vmem:[%s2 + $0xc] sm:$0xf]
      %v379 = vpack.c.bf16 %v373, %v373
      %v380 = vld [vmem:[%s3] sm:$0x1]
      %v382 = vlaneseq
      %v383 = vshrl.u32 %v382, 7
      %v384 = vsub.s32 0, %v383
      %v385 = vrot.slane %v380, %v384
      %v391 = vunpack.c.l.b16 %v375
      %v392 = vunpack.c.l.b16 %v376
      %v393 = vunpack.c.l.b16 %v377
      %v394 = vunpack.c.l.b16 %v378
      %v395 = vpack.c.b16 %v392, %v391
      %v396 = vpack.c.b16 %v394, %v393
      %vm399 = vcmask 261120
      %v401 = vsel %vm399, %v379, 0
      %403 = vmatprep.subr.bf16.mxu0 0
      %404 = vmatpush1.bf16.msra.mxu0 %v395
      %405 = vmatprep.subr.bf16.mxu0 0
      %406 = vmatpush1.bf16.msra.mxu0 %v396
      %407 = vmatprep.subr.bf16.mxu0 0
      %408 = vmatpush1.bf16.msra.mxu0 0
      %409 = vmatprep.subr.bf16.mxu0 0
      %410 = vmatpush1.bf16.msra.mxu0 0
      %411 = vmatprep.subr.bf16.mxu0 0
      %412 = vmatpush1.bf16.msra.mxu0 0
      %413 = vmatprep.subr.bf16.mxu0 0
      %414 = vmatpush1.bf16.msra.mxu0 0
      %415 = vmatprep.subr.bf16.mxu0 0
      %416 = vmatpush1.bf16.msra.mxu0 0
      %417 = vmatprep.subr.bf16.mxu0 0
      %418 = vmatpush1.bf16.msra.mxu0 0
      %419 = vmatprep.subr.bf16.mxu0 0
      %420 = vmatpush1.bf16.msra.mxu0 0
      %421 = vmatprep.subr.bf16.mxu0 0
      %422 = vmatpush1.bf16.msra.mxu0 0
      %423 = vmatprep.subr.bf16.mxu0 0
      %424 = vmatpush1.bf16.msra.mxu0 0
      %425 = vmatprep.subr.bf16.mxu0 0
      %426 = vmatpush1.bf16.msra.mxu0 0
      %427 = vmatprep.subr.bf16.mxu0 0
      %428 = vmatpush1.bf16.msra.mxu0 0
      %429 = vmatprep.subr.bf16.mxu0 0
      %430 = vmatpush1.bf16.msra.mxu0 0
      %431 = vmatprep.subr.bf16.mxu0 0
      %432 = vmatpush1.bf16.msra.mxu0 0
      %433 = vmatprep.subr.bf16.mxu0 0
      %434 = vmatpush1.bf16.msra.mxu0 0
      %435 = vmatprep.mubr.bf16.mxu0 0
      %436 = vmatmul.mubr.bf16.gmra.mrb[0].mxu0 %v401
      %v437 = vpop.f32.mrb[0].mxu0
      %v438 = vadd.f32 %v385, %v437
      %v439 = vpop.f32.mrb[0].mxu0
      %v440 = vpop.f32.mrb[0].mxu0
      %v441 = vpop.f32.mrb[0].mxu0
      %442 = vdwg.mxu0
      %v443 = vld [vmem:[%s4] sm:$0xf]
      %v444 = vld [vmem:[%s4 + $0x4] sm:$0xf]
      %v445 = vld [vmem:[%s4 + $0x8] sm:$0xf]
      %v446 = vld [vmem:[%s4 + $0xc] sm:$0xf]
      %v447 = vpack.c.bf16 %v374, %v374
      %v448 = vld [vmem:[%s5] sm:$0x1]
      %v450 = vlaneseq
      %v451 = vshrl.u32 %v450, 7
      %v452 = vsub.s32 0, %v451
      %v453 = vrot.slane %v448, %v452
      %v459 = vunpack.c.l.b16 %v443
      %v460 = vunpack.c.l.b16 %v444
      %v461 = vunpack.c.l.b16 %v445
      %v462 = vunpack.c.l.b16 %v446
      %v463 = vpack.c.b16 %v460, %v459
      %v464 = vpack.c.b16 %v462, %v461
      %v468 = vsel %vm399, %v447, 0
      %470 = vmatprep.subr.bf16.mxu0 0
      %471 = vmatpush1.bf16.msra.mxu0 %v463
      %472 = vmatprep.subr.bf16.mxu0 0
      %473 = vmatpush1.bf16.msra.mxu0 %v464
      %474 = vmatprep.subr.bf16.mxu0 0
      %475 = vmatpush1.bf16.msra.mxu0 0
      %476 = vmatprep.subr.bf16.mxu0 0
      %477 = vmatpush1.bf16.msra.mxu0 0
      %478 = vmatprep.subr.bf16.mxu0 0
      %479 = vmatpush1.bf16.msra.mxu0 0
      %480 = vmatprep.subr.bf16.mxu0 0
      %481 = vmatpush1.bf16.msra.mxu0 0
      %482 = vmatprep.subr.bf16.mxu0 0
      %483 = vmatpush1.bf16.msra.mxu0 0
      %484 = vmatprep.subr.bf16.mxu0 0
      %485 = vmatpush1.bf16.msra.mxu0 0
      %486 = vmatprep.subr.bf16.mxu0 0
      %487 = vmatpush1.bf16.msra.mxu0 0
      %488 = vmatprep.subr.bf16.mxu0 0
      %489 = vmatpush1.bf16.msra.mxu0 0
      %490 = vmatprep.subr.bf16.mxu0 0
      %491 = vmatpush1.bf16.msra.mxu0 0
      %492 = vmatprep.subr.bf16.mxu0 0
      %493 = vmatpush1.bf16.msra.mxu0 0
      %494 = vmatprep.subr.bf16.mxu0 0
      %495 = vmatpush1.bf16.msra.mxu0 0
      %496 = vmatprep.subr.bf16.mxu0 0
      %497 = vmatpush1.bf16.msra.mxu0 0
      %498 = vmatprep.subr.bf16.mxu0 0
      %499 = vmatpush1.bf16.msra.mxu0 0
      %500 = vmatprep.subr.bf16.mxu0 0
      %501 = vmatpush1.bf16.msra.mxu0 0
      %502 = vmatprep.mubr.bf16.mxu0 0
      %503 = vmatmul.mubr.bf16.gmra.mrb[0].mxu0 %v468
      %v504 = vpop.f32.mrb[0].mxu0
      %v505 = vadd.f32 %v453, %v504
      %v506 = vpop.f32.mrb[0].mxu0
      %v507 = vpop.f32.mrb[0].mxu0
      %v508 = vpop.f32.mrb[0].mxu0
      %509 = vdwg.mxu0
      %v510 = vld [vmem:[%s6] sm:$0xf]
      %v511 = vld [vmem:[%s6 + $0x4] sm:$0xf]
      %v512 = vld [vmem:[%s6 + $0x8] sm:$0xf]
      %v513 = vld [vmem:[%s6 + $0xc] sm:$0xf]
      %v514 = vld [vmem:[%s7] sm:$0x1]
      %v515 = vpack.c.bf16 %v438, %v438
      %v516 = vpack.c.bf16 %v505, %v505
      %vm517 = vcmask 64512
      %v519 = vsel %vm517, %v515, 0
      %v522 = vsel %vm517, %v516, 0
      %524 = vmatprep.subr.bf16.mxu0 0
      %525 = vmatpush1.bf16.xpose.msra.mxu0 %v522
      %526 = vmatprep.subr.bf16.mxu0 0
      %527 = vmatpush1.bf16.xpose.msra.mxu0 0
      %528 = vmatprep.subr.bf16.mxu0 0
      %529 = vmatpush1.bf16.xpose.msra.mxu0 0
      %530 = vmatprep.subr.bf16.mxu0 0
      %531 = vmatpush1.bf16.xpose.msra.mxu0 0
      %532 = vmatprep.subr.bf16.mxu0 0
      %533 = vmatpush1.bf16.xpose.msra.mxu0 0
      %534 = vmatprep.subr.bf16.mxu0 0
      %535 = vmatpush1.bf16.xpose.msra.mxu0 0
      %536 = vmatprep.subr.bf16.mxu0 0
      %537 = vmatpush1.bf16.xpose.msra.mxu0 0
      %538 = vmatprep.subr.bf16.mxu0 0
      %539 = vmatpush1.bf16.xpose.msra.mxu0 0
      %540 = vmatprep.subr.bf16.mxu0 0
      %541 = vmatpush1.bf16.xpose.msra.mxu0 0
      %542 = vmatprep.subr.bf16.mxu0 0
      %543 = vmatpush1.bf16.xpose.msra.mxu0 0
      %544 = vmatprep.subr.bf16.mxu0 0
      %545 = vmatpush1.bf16.xpose.msra.mxu0 0
      %546 = vmatprep.subr.bf16.mxu0 0
      %547 = vmatpush1.bf16.xpose.msra.mxu0 0
      %548 = vmatprep.subr.bf16.mxu0 0
      %549 = vmatpush1.bf16.xpose.msra.mxu0 0
      %550 = vmatprep.subr.bf16.mxu0 0
      %551 = vmatpush1.bf16.xpose.msra.mxu0 0
      %552 = vmatprep.subr.bf16.mxu0 0
      %553 = vmatpush1.bf16.xpose.msra.mxu0 0
      %554 = vmatprep.subr.bf16.mxu0 0
      %555 = vmatpush1.bf16.xpose.msra.mxu0 0
      %556 = vmatprep.mubr.bf16.mxu0 0
      %557 = vmatmul.mubr.bf16.gmra.mrb[0].mxu0 %v519
      %v558 = vpop.f32.mrb[0].mxu0
      %v559 = vadd.f32 0.0, %v558
      %v560 = vpop.f32.mrb[0].mxu0
      %v561 = vpop.f32.mrb[0].mxu0
      %v562 = vpop.f32.mrb[0].mxu0
      %563 = vdwg.mxu0
      %v564 = vsel %vm517, %v559, -inf
      %565 = vmax.xlane.f32.xlu0 %v564
      %v566 = vpop.xlane.xlu0 %565
      %v567 = vsub.f32 %v559, %v566
      %v568 = vmul.f32 %v567, 1.442695
      %v569 = vpow.pop %v568
      %v570 = vsel %vm517, %v569, 0.0
      %571 = vadd.xlane.f32.xlu0 %v570
      %v572 = vpop.xlane.xlu0 %571
      %v573 = vmax.f32 %v572, 1e-30
      %v574 = vrcp.pop %v573
      %v575 = vpack.c.bf16 %v569, %v569
      %577 = vrot.lane.b32.xlu0 %v516, 96
      %v578 = vpop.permute.xlu0 %577
      %v580 = vsel %vm517, %v575, 0
      %vm582 = vcmask 1043456
      %v584 = vsel %vm582, %v578, 0
      %586 = vmatprep.subr.bf16.mxu0 0
      %587 = vmatpush1.bf16.msra.mxu0 %v584
      %588 = vmatprep.subr.bf16.mxu0 0
      %589 = vmatpush1.bf16.msra.mxu0 0
      %590 = vmatprep.subr.bf16.mxu0 0
      %591 = vmatpush1.bf16.msra.mxu0 0
      %592 = vmatprep.subr.bf16.mxu0 0
      %593 = vmatpush1.bf16.msra.mxu0 0
      %594 = vmatprep.subr.bf16.mxu0 0
      %595 = vmatpush1.bf16.msra.mxu0 0
      %596 = vmatprep.subr.bf16.mxu0 0
      %597 = vmatpush1.bf16.msra.mxu0 0
      %598 = vmatprep.subr.bf16.mxu0 0
      %599 = vmatpush1.bf16.msra.mxu0 0
      %600 = vmatprep.subr.bf16.mxu0 0
      %601 = vmatpush1.bf16.msra.mxu0 0
      %602 = vmatprep.subr.bf16.mxu0 0
      %603 = vmatpush1.bf16.msra.mxu0 0
      %604 = vmatprep.subr.bf16.mxu0 0
      %605 = vmatpush1.bf16.msra.mxu0 0
      %606 = vmatprep.subr.bf16.mxu0 0
      %607 = vmatpush1.bf16.msra.mxu0 0
      %608 = vmatprep.subr.bf16.mxu0 0
      %609 = vmatpush1.bf16.msra.mxu0 0
      %610 = vmatprep.subr.bf16.mxu0 0
      %611 = vmatpush1.bf16.msra.mxu0 0
      %612 = vmatprep.subr.bf16.mxu0 0
      %613 = vmatpush1.bf16.msra.mxu0 0
      %614 = vmatprep.subr.bf16.mxu0 0
      %615 = vmatpush1.bf16.msra.mxu0 0
      %616 = vmatprep.subr.bf16.mxu0 0
      %617 = vmatpush1.bf16.msra.mxu0 0
      %618 = vmatprep.mubr.bf16.mxu0 0
      %619 = vmatmul.mubr.bf16.gmra.mrb[0].mxu0 %v580
      %v620 = vpop.f32.mrb[0].mxu0
      %v621 = vadd.f32 0.0, %v620
      %v622 = vpop.f32.mrb[0].mxu0
      %v623 = vpop.f32.mrb[0].mxu0
      %v624 = vpop.f32.mrb[0].mxu0
      %625 = vdwg.mxu0
      %v626 = vmul.f32 %v621, %v574
      %628 = vrot.lane.b32.xlu0 %v515, 120
      %v629 = vpop.permute.xlu0 %628
      %630 = vrot.lane.b32.xlu0 %v516, 120
      %v631 = vpop.permute.xlu0 %630
      %v633 = vsel %vm517, %v629, 0
      %v636 = vsel %vm517, %v631, 0
      %638 = vmatprep.subr.bf16.mxu0 0
      %639 = vmatpush1.bf16.xpose.msra.mxu0 %v636
      %640 = vmatprep.subr.bf16.mxu0 0
      %641 = vmatpush1.bf16.xpose.msra.mxu0 0
      %642 = vmatprep.subr.bf16.mxu0 0
      %643 = vmatpush1.bf16.xpose.msra.mxu0 0
      %644 = vmatprep.subr.bf16.mxu0 0
      %645 = vmatpush1.bf16.xpose.msra.mxu0 0
      %646 = vmatprep.subr.bf16.mxu0 0
      %647 = vmatpush1.bf16.xpose.msra.mxu0 0
      %648 = vmatprep.subr.bf16.mxu0 0
      %649 = vmatpush1.bf16.xpose.msra.mxu0 0
      %650 = vmatprep.subr.bf16.mxu0 0
      %651 = vmatpush1.bf16.xpose.msra.mxu0 0
      %652 = vmatprep.subr.bf16.mxu0 0
      %653 = vmatpush1.bf16.xpose.msra.mxu0 0
      %654 = vmatprep.subr.bf16.mxu0 0
      %655 = vmatpush1.bf16.xpose.msra.mxu0 0
      %656 = vmatprep.subr.bf16.mxu0 0
      %657 = vmatpush1.bf16.xpose.msra.mxu0 0
      %658 = vmatprep.subr.bf16.mxu0 0
      %659 = vmatpush1.bf16.xpose.msra.mxu0 0
      %660 = vmatprep.subr.bf16.mxu0 0
      %661 = vmatpush1.bf16.xpose.msra.mxu0 0
      %662 = vmatprep.subr.bf16.mxu0 0
      %663 = vmatpush1.bf16.xpose.msra.mxu0 0
      %664 = vmatprep.subr.bf16.mxu0 0
      %665 = vmatpush1.bf16.xpose.msra.mxu0 0
      %666 = vmatprep.subr.bf16.mxu0 0
      %667 = vmatpush1.bf16.xpose.msra.mxu0 0
      %668 = vmatprep.subr.bf16.mxu0 0
      %669 = vmatpush1.bf16.xpose.msra.mxu0 0
      %670 = vmatprep.mubr.bf16.mxu0 0
      %671 = vmatmul.mubr.bf16.gmra.mrb[0].mxu0 %v633
      %v672 = vpop.f32.mrb[0].mxu0
      %v673 = vadd.f32 0.0, %v672
      %v674 = vpop.f32.mrb[0].mxu0
      %v675 = vpop.f32.mrb[0].mxu0
      %v676 = vpop.f32.mrb[0].mxu0
      %677 = vdwg.mxu0
      %v678 = vsel %vm517, %v673, -inf
      %679 = vmax.xlane.f32.xlu0 %v678
      %v680 = vpop.xlane.xlu0 %679
      %v681 = vsub.f32 %v673, %v680
      %v682 = vmul.f32 %v681, 1.442695
      %v683 = vpow.pop %v682
      %v684 = vsel %vm517, %v683, 0.0
      %685 = vadd.xlane.f32.xlu0 %v684
      %v686 = vpop.xlane.xlu0 %685
      %v687 = vmax.f32 %v686, 1e-30
      %v688 = vrcp.pop %v687
      %v689 = vpack.c.bf16 %v683, %v683
      %690 = vrot.lane.b32.xlu0 %v516, 88
      %v691 = vpop.permute.xlu0 %690
      %v693 = vsel %vm517, %v689, 0
      %v696 = vsel %vm582, %v691, 0
      %698 = vmatprep.subr.bf16.mxu0 0
      %699 = vmatpush1.bf16.msra.mxu0 %v696
      %700 = vmatprep.subr.bf16.mxu0 0
      %701 = vmatpush1.bf16.msra.mxu0 0
      %702 = vmatprep.subr.bf16.mxu0 0
      %703 = vmatpush1.bf16.msra.mxu0 0
      %704 = vmatprep.subr.bf16.mxu0 0
      %705 = vmatpush1.bf16.msra.mxu0 0
      %706 = vmatprep.subr.bf16.mxu0 0
      %707 = vmatpush1.bf16.msra.mxu0 0
      %708 = vmatprep.subr.bf16.mxu0 0
      %709 = vmatpush1.bf16.msra.mxu0 0
      %710 = vmatprep.subr.bf16.mxu0 0
      %711 = vmatpush1.bf16.msra.mxu0 0
      %712 = vmatprep.subr.bf16.mxu0 0
      %713 = vmatpush1.bf16.msra.mxu0 0
      %714 = vmatprep.subr.bf16.mxu0 0
      %715 = vmatpush1.bf16.msra.mxu0 0
      %716 = vmatprep.subr.bf16.mxu0 0
      %717 = vmatpush1.bf16.msra.mxu0 0
      %718 = vmatprep.subr.bf16.mxu0 0
      %719 = vmatpush1.bf16.msra.mxu0 0
      %720 = vmatprep.subr.bf16.mxu0 0
      %721 = vmatpush1.bf16.msra.mxu0 0
      %722 = vmatprep.subr.bf16.mxu0 0
      %723 = vmatpush1.bf16.msra.mxu0 0
      %724 = vmatprep.subr.bf16.mxu0 0
      %725 = vmatpush1.bf16.msra.mxu0 0
      %726 = vmatprep.subr.bf16.mxu0 0
      %727 = vmatpush1.bf16.msra.mxu0 0
      %728 = vmatprep.subr.bf16.mxu0 0
      %729 = vmatpush1.bf16.msra.mxu0 0
      %730 = vmatprep.mubr.bf16.mxu0 0
      %731 = vmatmul.mubr.bf16.gmra.mrb[0].mxu0 %v693
      %v732 = vpop.f32.mrb[0].mxu0
      %v733 = vadd.f32 0.0, %v732
      %v734 = vpop.f32.mrb[0].mxu0
      %v735 = vpop.f32.mrb[0].mxu0
      %v736 = vpop.f32.mrb[0].mxu0
      %737 = vdwg.mxu0
      %v738 = vmul.f32 %v733, %v688
      %739 = vrot.lane.b32.xlu0 %v515, 112
      %v740 = vpop.permute.xlu0 %739
      %741 = vrot.lane.b32.xlu0 %v516, 112
      %v742 = vpop.permute.xlu0 %741
      %v744 = vsel %vm517, %v740, 0
      %v747 = vsel %vm517, %v742, 0
      %749 = vmatprep.subr.bf16.mxu0 0
      %750 = vmatpush1.bf16.xpose.msra.mxu0 %v747
      %751 = vmatprep.subr.bf16.mxu0 0
      %752 = vmatpush1.bf16.xpose.msra.mxu0 0
      %753 = vmatprep.subr.bf16.mxu0 0
      %754 = vmatpush1.bf16.xpose.msra.mxu0 0
      %755 = vmatprep.subr.bf16.mxu0 0
      %756 = vmatpush1.bf16.xpose.msra.mxu0 0
      %757 = vmatprep.subr.bf16.mxu0 0
      %758 = vmatpush1.bf16.xpose.msra.mxu0 0
      %759 = vmatprep.subr.bf16.mxu0 0
      %760 = vmatpush1.bf16.xpose.msra.mxu0 0
      %761 = vmatprep.subr.bf16.mxu0 0
      %762 = vmatpush1.bf16.xpose.msra.mxu0 0
      %763 = vmatprep.subr.bf16.mxu0 0
      %764 = vmatpush1.bf16.xpose.msra.mxu0 0
      %765 = vmatprep.subr.bf16.mxu0 0
      %766 = vmatpush1.bf16.xpose.msra.mxu0 0
      %767 = vmatprep.subr.bf16.mxu0 0
      %768 = vmatpush1.bf16.xpose.msra.mxu0 0
      %769 = vmatprep.subr.bf16.mxu0 0
      %770 = vmatpush1.bf16.xpose.msra.mxu0 0
      %771 = vmatprep.subr.bf16.mxu0 0
      %772 = vmatpush1.bf16.xpose.msra.mxu0 0
      %773 = vmatprep.subr.bf16.mxu0 0
      %774 = vmatpush1.bf16.xpose.msra.mxu0 0
      %775 = vmatprep.subr.bf16.mxu0 0
      %776 = vmatpush1.bf16.xpose.msra.mxu0 0
      %777 = vmatprep.subr.bf16.mxu0 0
      %778 = vmatpush1.bf16.xpose.msra.mxu0 0
      %779 = vmatprep.subr.bf16.mxu0 0
      %780 = vmatpush1.bf16.xpose.msra.mxu0 0
      %781 = vmatprep.mubr.bf16.mxu0 0
      %782 = vmatmul.mubr.bf16.gmra.mrb[0].mxu0 %v744
      %v783 = vpop.f32.mrb[0].mxu0
      %v784 = vadd.f32 0.0, %v783
      %v785 = vpop.f32.mrb[0].mxu0
      %v786 = vpop.f32.mrb[0].mxu0
      %v787 = vpop.f32.mrb[0].mxu0
      %788 = vdwg.mxu0
      %v789 = vsel %vm517, %v784, -inf
      %790 = vmax.xlane.f32.xlu0 %v789
      %v791 = vpop.xlane.xlu0 %790
      %v792 = vsub.f32 %v784, %v791
      %v793 = vmul.f32 %v792, 1.442695
      %v794 = vpow.pop %v793
      %v795 = vsel %vm517, %v794, 0.0
      %796 = vadd.xlane.f32.xlu0 %v795
      %v797 = vpop.xlane.xlu0 %796
      %v798 = vmax.f32 %v797, 1e-30
      %v799 = vrcp.pop %v798
      %v800 = vpack.c.bf16 %v794, %v794
      %801 = vrot.lane.b32.xlu0 %v516, 80
      %v802 = vpop.permute.xlu0 %801
      %v804 = vsel %vm517, %v800, 0
      %v807 = vsel %vm582, %v802, 0
      %809 = vmatprep.subr.bf16.mxu0 0
      %810 = vmatpush1.bf16.msra.mxu0 %v807
      %811 = vmatprep.subr.bf16.mxu0 0
      %812 = vmatpush1.bf16.msra.mxu0 0
      %813 = vmatprep.subr.bf16.mxu0 0
      %814 = vmatpush1.bf16.msra.mxu0 0
      %815 = vmatprep.subr.bf16.mxu0 0
      %816 = vmatpush1.bf16.msra.mxu0 0
      %817 = vmatprep.subr.bf16.mxu0 0
      %818 = vmatpush1.bf16.msra.mxu0 0
      %819 = vmatprep.subr.bf16.mxu0 0
      %820 = vmatpush1.bf16.msra.mxu0 0
      %821 = vmatprep.subr.bf16.mxu0 0
      %822 = vmatpush1.bf16.msra.mxu0 0
      %823 = vmatprep.subr.bf16.mxu0 0
      %824 = vmatpush1.bf16.msra.mxu0 0
      %825 = vmatprep.subr.bf16.mxu0 0
      %826 = vmatpush1.bf16.msra.mxu0 0
      %827 = vmatprep.subr.bf16.mxu0 0
      %828 = vmatpush1.bf16.msra.mxu0 0
      %829 = vmatprep.subr.bf16.mxu0 0
      %830 = vmatpush1.bf16.msra.mxu0 0
      %831 = vmatprep.subr.bf16.mxu0 0
      %832 = vmatpush1.bf16.msra.mxu0 0
      %833 = vmatprep.subr.bf16.mxu0 0
      %834 = vmatpush1.bf16.msra.mxu0 0
      %835 = vmatprep.subr.bf16.mxu0 0
      %836 = vmatpush1.bf16.msra.mxu0 0
      %837 = vmatprep.subr.bf16.mxu0 0
      %838 = vmatpush1.bf16.msra.mxu0 0
      %839 = vmatprep.subr.bf16.mxu0 0
      %840 = vmatpush1.bf16.msra.mxu0 0
      %841 = vmatprep.mubr.bf16.mxu0 0
      %842 = vmatmul.mubr.bf16.gmra.mrb[0].mxu0 %v804
      %v843 = vpop.f32.mrb[0].mxu0
      %v844 = vadd.f32 0.0, %v843
      %v845 = vpop.f32.mrb[0].mxu0
      %v846 = vpop.f32.mrb[0].mxu0
      %v847 = vpop.f32.mrb[0].mxu0
      %848 = vdwg.mxu0
      %v849 = vmul.f32 %v844, %v799
      %850 = vrot.lane.b32.xlu0 %v515, 104
      %v851 = vpop.permute.xlu0 %850
      %852 = vrot.lane.b32.xlu0 %v516, 104
      %v853 = vpop.permute.xlu0 %852
      %v855 = vsel %vm517, %v851, 0
      %v858 = vsel %vm517, %v853, 0
      %860 = vmatprep.subr.bf16.mxu0 0
      %861 = vmatpush1.bf16.xpose.msra.mxu0 %v858
      %862 = vmatprep.subr.bf16.mxu0 0
      %863 = vmatpush1.bf16.xpose.msra.mxu0 0
      %864 = vmatprep.subr.bf16.mxu0 0
      %865 = vmatpush1.bf16.xpose.msra.mxu0 0
      %866 = vmatprep.subr.bf16.mxu0 0
      %867 = vmatpush1.bf16.xpose.msra.mxu0 0
      %868 = vmatprep.subr.bf16.mxu0 0
      %869 = vmatpush1.bf16.xpose.msra.mxu0 0
      %870 = vmatprep.subr.bf16.mxu0 0
      %871 = vmatpush1.bf16.xpose.msra.mxu0 0
      %872 = vmatprep.subr.bf16.mxu0 0
      %873 = vmatpush1.bf16.xpose.msra.mxu0 0
      %874 = vmatprep.subr.bf16.mxu0 0
      %875 = vmatpush1.bf16.xpose.msra.mxu0 0
      %876 = vmatprep.subr.bf16.mxu0 0
      %877 = vmatpush1.bf16.xpose.msra.mxu0 0
      %878 = vmatprep.subr.bf16.mxu0 0
      %879 = vmatpush1.bf16.xpose.msra.mxu0 0
      %880 = vmatprep.subr.bf16.mxu0 0
      %881 = vmatpush1.bf16.xpose.msra.mxu0 0
      %882 = vmatprep.subr.bf16.mxu0 0
      %883 = vmatpush1.bf16.xpose.msra.mxu0 0
      %884 = vmatprep.subr.bf16.mxu0 0
      %885 = vmatpush1.bf16.xpose.msra.mxu0 0
      %886 = vmatprep.subr.bf16.mxu0 0
      %887 = vmatpush1.bf16.xpose.msra.mxu0 0
      %888 = vmatprep.subr.bf16.mxu0 0
      %889 = vmatpush1.bf16.xpose.msra.mxu0 0
      %890 = vmatprep.subr.bf16.mxu0 0
      %891 = vmatpush1.bf16.xpose.msra.mxu0 0
      %892 = vmatprep.mubr.bf16.mxu0 0
      %893 = vmatmul.mubr.bf16.gmra.mrb[0].mxu0 %v855
      %v894 = vpop.f32.mrb[0].mxu0
      %v895 = vadd.f32 0.0, %v894
      %v896 = vpop.f32.mrb[0].mxu0
      %v897 = vpop.f32.mrb[0].mxu0
      %v898 = vpop.f32.mrb[0].mxu0
      %899 = vdwg.mxu0
      %v900 = vsel %vm517, %v895, -inf
      %901 = vmax.xlane.f32.xlu0 %v900
      %v902 = vpop.xlane.xlu0 %901
      %v903 = vsub.f32 %v895, %v902
      %v904 = vmul.f32 %v903, 1.442695
      %v905 = vpow.pop %v904
      %v906 = vsel %vm517, %v905, 0.0
      %907 = vadd.xlane.f32.xlu0 %v906
      %v908 = vpop.xlane.xlu0 %907
      %v909 = vmax.f32 %v908, 1e-30
      %v910 = vrcp.pop %v909
      %v911 = vpack.c.bf16 %v905, %v905
      %912 = vrot.lane.b32.xlu0 %v516, 72
      %v913 = vpop.permute.xlu0 %912
      %v915 = vsel %vm517, %v911, 0
      %v918 = vsel %vm582, %v913, 0
      %920 = vmatprep.subr.bf16.mxu0 0
      %921 = vmatpush1.bf16.msra.mxu0 %v918
      %922 = vmatprep.subr.bf16.mxu0 0
      %923 = vmatpush1.bf16.msra.mxu0 0
      %924 = vmatprep.subr.bf16.mxu0 0
      %925 = vmatpush1.bf16.msra.mxu0 0
      %926 = vmatprep.subr.bf16.mxu0 0
      %927 = vmatpush1.bf16.msra.mxu0 0
      %928 = vmatprep.subr.bf16.mxu0 0
      %929 = vmatpush1.bf16.msra.mxu0 0
      %930 = vmatprep.subr.bf16.mxu0 0
      %931 = vmatpush1.bf16.msra.mxu0 0
      %932 = vmatprep.subr.bf16.mxu0 0
      %933 = vmatpush1.bf16.msra.mxu0 0
      %934 = vmatprep.subr.bf16.mxu0 0
      %935 = vmatpush1.bf16.msra.mxu0 0
      %936 = vmatprep.subr.bf16.mxu0 0
      %937 = vmatpush1.bf16.msra.mxu0 0
      %938 = vmatprep.subr.bf16.mxu0 0
      %939 = vmatpush1.bf16.msra.mxu0 0
      %940 = vmatprep.subr.bf16.mxu0 0
      %941 = vmatpush1.bf16.msra.mxu0 0
      %942 = vmatprep.subr.bf16.mxu0 0
      %943 = vmatpush1.bf16.msra.mxu0 0
      %944 = vmatprep.subr.bf16.mxu0 0
      %945 = vmatpush1.bf16.msra.mxu0 0
      %946 = vmatprep.subr.bf16.mxu0 0
      %947 = vmatpush1.bf16.msra.mxu0 0
      %948 = vmatprep.subr.bf16.mxu0 0
      %949 = vmatpush1.bf16.msra.mxu0 0
      %950 = vmatprep.subr.bf16.mxu0 0
      %951 = vmatpush1.bf16.msra.mxu0 0
      %952 = vmatprep.mubr.bf16.mxu0 0
      %953 = vmatmul.mubr.bf16.gmra.mrb[0].mxu0 %v915
      %v954 = vpop.f32.mrb[0].mxu0
      %v955 = vadd.f32 0.0, %v954
      %v956 = vpop.f32.mrb[0].mxu0
      %v957 = vpop.f32.mrb[0].mxu0
      %v958 = vpop.f32.mrb[0].mxu0
      %959 = vdwg.mxu0
      %v960 = vmul.f32 %v955, %v910
      %962 = vrot.lane.b32.xlu0 %v738, 8
      %v963 = vpop.permute.xlu0 %962
      %966 = vrot.lane.b32.xlu0 %v849, 16
      %v967 = vpop.permute.xlu0 %966
      %970 = vrot.lane.b32.xlu0 %v960, 24
      %v971 = vpop.permute.xlu0 %970
      %v973 = vsel %vm517, %v626, %v963
      %vm974 = vcmask 130048
      %v975 = vsel %vm974, %v973, %v967
      %vm976 = vcmask 195584
      %v977 = vsel %vm976, %v975, %v971
      %v978 = vpack.c.bf16 %v977, %v977
      %v980 = vlaneseq
      %v981 = vshrl.u32 %v980, 7
      %v982 = vsub.s32 0, %v981
      %v983 = vrot.slane %v514, %v982
      %v989 = vunpack.c.l.b16 %v510
      %v990 = vunpack.c.l.b16 %v511
      %v991 = vunpack.c.l.b16 %v512
      %v992 = vunpack.c.l.b16 %v513
      %v993 = vpack.c.b16 %v990, %v989
      %v994 = vpack.c.b16 %v992, %v991
      %v998 = vsel %vm399, %v978, 0
      %1000 = vmatprep.subr.bf16.mxu0 0
      %1001 = vmatpush1.bf16.msra.mxu0 %v993
      %1002 = vmatprep.subr.bf16.mxu0 0
      %1003 = vmatpush1.bf16.msra.mxu0 %v994
      %1004 = vmatprep.subr.bf16.mxu0 0
      %1005 = vmatpush1.bf16.msra.mxu0 0
      %1006 = vmatprep.subr.bf16.mxu0 0
      %1007 = vmatpush1.bf16.msra.mxu0 0
      %1008 = vmatprep.subr.bf16.mxu0 0
      %1009 = vmatpush1.bf16.msra.mxu0 0
      %1010 = vmatprep.subr.bf16.mxu0 0
      %1011 = vmatpush1.bf16.msra.mxu0 0
      %1012 = vmatprep.subr.bf16.mxu0 0
      %1013 = vmatpush1.bf16.msra.mxu0 0
      %1014 = vmatprep.subr.bf16.mxu0 0
      %1015 = vmatpush1.bf16.msra.mxu0 0
      %1016 = vmatprep.subr.bf16.mxu0 0
      %1017 = vmatpush1.bf16.msra.mxu0 0
      %1018 = vmatprep.subr.bf16.mxu0 0
      %1019 = vmatpush1.bf16.msra.mxu0 0
      %1020 = vmatprep.subr.bf16.mxu0 0
      %1021 = vmatpush1.bf16.msra.mxu0 0
      %1022 = vmatprep.subr.bf16.mxu0 0
      %1023 = vmatpush1.bf16.msra.mxu0 0
      %1024 = vmatprep.subr.bf16.mxu0 0
      %1025 = vmatpush1.bf16.msra.mxu0 0
      %1026 = vmatprep.subr.bf16.mxu0 0
      %1027 = vmatpush1.bf16.msra.mxu0 0
      %1028 = vmatprep.subr.bf16.mxu0 0
      %1029 = vmatpush1.bf16.msra.mxu0 0
      %1030 = vmatprep.subr.bf16.mxu0 0
      %1031 = vmatpush1.bf16.msra.mxu0 0
      %1032 = vmatprep.mubr.bf16.mxu0 0
      %1033 = vmatmul.mubr.bf16.gmra.mrb[0].mxu0 %v998
      %v1034 = vpop.f32.mrb[0].mxu0
      %v1035 = vadd.f32 %v983, %v1034
      %v1036 = vpop.f32.mrb[0].mxu0
      %v1037 = vpop.f32.mrb[0].mxu0
      %v1038 = vpop.f32.mrb[0].mxu0
      %1039 = vdwg.mxu0
      %v1040 = vld [vmem:[%s8] sm:$0x1]
      %v1041 = vld [vmem:[%s9] sm:$0x1]
      %v1042 = vadd.f32 %v373, %v1035
      %v1043 = vsel %vm399, %v1042, 0.0
      %1044 = vadd.xlane.f32.xlu0 %v1043
      %v1045 = vpop.xlane.xlu0 %1044
      %v1046 = vrcp.pop 32.0
      %v1047 = vmul.f32 %v1045, %v1046
      %v1048 = vsub.f32 %v1042, %v1047
      %v1049 = vmul.f32 %v1048, %v1048
      %v1050 = vsel %vm399, %v1049, 0.0
      %1051 = vadd.xlane.f32.xlu0 %v1050
      %v1052 = vpop.xlane.xlu0 %1051
      %v1053 = vmul.f32 %v1052, %v1046
      %v1054 = vadd.f32 %v1053, 1e-05
      %v1055 = vrsqrt.pop %v1054
      %v1056 = vmul.f32 %v1048, %v1055
      %v1058 = vlaneseq
      %v1059 = vshrl.u32 %v1058, 7
      %v1060 = vsub.s32 0, %v1059
      %v1061 = vrot.slane %v1040, %v1060
      %v1063 = vmul.f32 %v1056, %v1061
      %v1065 = vlaneseq
      %v1066 = vshrl.u32 %v1065, 7
      %v1067 = vsub.s32 0, %v1066
      %v1068 = vrot.slane %v1041, %v1067
      %v1070 = vadd.f32 %v1063, %v1068
      %1071 = vst.msk [vmem:[%s371] sm:$0xff] %vm399, %v1070
      %p1072 = scmp.lt.s32.totalorder %s21, 1
      %s1073 = scalar_select %p1072, %s21, 1
      %s1074 = smul.addr %s1073, 8
      %s1075 = scalar_lea.vmem %s10, %s1074
      // Predicated region
      $region61: #{decoder_layer.4} parent=59 // pred_check
        %p1076 = pneg %p259
      $region62: #{decoder_layer.4} parent=59 // pred_check_branch
        %1078 = sbr.rel (%p1076) target = $region64
      $region63: #{decoder_layer.4} parent=59 // pred_region
        _
      $region64: #{decoder_layer.4} parent=59 // pred_fallthru
        _
    $region60: #{decoder_layer.4} parent=5 // pred_fallthru
      _
    %p1079 = scmp.le.s32.totalorder 2, %s16
    // Predicated region
    $region65: #{decoder_layer.4} parent=5 // pred_check
      %p1080 = pneg %p1079
    $region66: #{decoder_layer.4} parent=5 // pred_check_branch
      %1082 = sbr.rel (%p1080) target = $region68
    $region67: #{decoder_layer.4} parent=5 // pred_region
      %s1083 = ssub.s32 %s16, 2
      // Predicated region
      $region69: #{decoder_layer.4} parent=67 // pred_check
        %p1084 = pneg %p265
      $region70: #{decoder_layer.4} parent=67 // pred_check_branch
        %1086 = sbr.rel (%p1084) target = $region72
      $region71: #{decoder_layer.4} parent=67 // pred_region
        %p1087 = scmp.lt.s32.totalorder %s22, 1
        %s1088 = scalar_select %p1087, %s22, 1
        %s1089 = smul.addr %s1088, 8
        %s1090 = scalar_lea.vmem %s10, %s1089
      $region72: #{decoder_layer.4} parent=67 // pred_fallthru
        _
    $region68: #{decoder_layer.4} parent=5 // pred_fallthru
      _
  $region6: #{decoder_layer.4} parent=0 // loop_footer
    %s20 = sadd.s32 1, %s16
  $region7: #{decoder_layer.4} parent=0 // loop_footer_branch
    %15 = sbr.rel target = $region3
  $region8: #{decoder_layer.4} parent=0 // loop_exit
    _

</llo_original>
